<compile_context>
chip_gen: v5e
topology: v5e:2x2
jax: 0.10.0
libtpu: 0.0.40
codegen_flags: <defaults>
</compile_context>

<pallas_src>
import functools
import math

import jax
import jax.numpy as jnp
from jax.experimental import pallas as pl
from jax.experimental.pallas import tpu as pltpu

ENCODER_DIMS = [96, 192, 384]
ENCODER_DEPTHS = [5, 5, 5]
NUM_HEADS = 6
LOCAL_RADIUS = [0.32, 0.64, 1.28]
LN_EPS = 1e-5
BN_EPS = 1e-5
MASK_BIAS = -1e9


# ---------------------------------------------------------------------------
# Small helpers
# ---------------------------------------------------------------------------
def _gelu(x):
    # nn.GELU default (erf based)
    return 0.5 * x * (1.0 + jax.lax.erf(x * 0.7071067811865476))


def _ln(x, g, b):
    mu = jnp.mean(x, axis=-1, keepdims=True)
    xc = x - mu
    var = jnp.mean(xc * xc, axis=-1, keepdims=True)
    return xc * jax.lax.rsqrt(var + LN_EPS) * g + b


def _linear3(x3, w_ref, b_ref):
    """Linear with in_features == 3 as VPU broadcast-FMAs (a 3-deep MXU dot is <3% filled)."""
    w = w_ref[...].astype(jnp.float32)
    out = b_ref[...] + x3[:, 0:1] * w[0:1, :]
    out = out + x3[:, 1:2] * w[1:2, :]
    out = out + x3[:, 2:3] * w[2:3, :]
    return out


# --- single-buffering support probe (pl.Buffered(1) on constant-index weight specs) -------
_SINGLE_BUFFER = None


def _probe_single_buffer():
    if not hasattr(pl, "Buffered"):
        return False
    try:
        def _k(x_ref, w_ref, o_ref):
            o_ref[...] = x_ref[...] + w_ref[0]

        fn = pl.pallas_call(
            _k,
            out_shape=jax.ShapeDtypeStruct((2, 8, 128), jnp.float32),
            grid=(2,),
            in_specs=[pl.BlockSpec((1, 8, 128), lambda i: (i, 0, 0)),
                      pl.BlockSpec((4, 8, 128), lambda i: (0, 0, 0),
                                   pipeline_mode=pl.Buffered(1))],
            out_specs=pl.BlockSpec((1, 8, 128), lambda i: (i, 0, 0)),
        )
        jax.block_until_ready(fn(jnp.zeros((2, 8, 128), jnp.float32),
                                 jnp.ones((4, 8, 128), jnp.float32)))
        return True
    except Exception:
        return False


def _use_single_buffer():
    global _SINGLE_BUFFER
    if _SINGLE_BUFFER is None:
        _SINGLE_BUFFER = _probe_single_buffer()
    return _SINGLE_BUFFER


def _const_spec(shape):
    """Grid-invariant (weight) BlockSpec; single-buffered when supported."""
    n = len(shape)
    idx = lambda i, n=n: (0,) * n
    if _SINGLE_BUFFER:
        return pl.BlockSpec(shape, idx, pipeline_mode=pl.Buffered(1))
    return pl.BlockSpec(shape, idx)


def _padded_nbytes(a):
    """VMEM footprint of one buffer of `a` (last dim ->128, second-minor ->8/16 by dtype)."""
    shape = a.shape
    itemsize = jnp.dtype(a.dtype).itemsize
    if len(shape) < 2:
        return max(int(jnp.prod(jnp.array(shape))) if shape else 1, 1) * itemsize
    sub_mult = 8 * max(1, 4 // itemsize)
    last = -(-shape[-1] // 128) * 128
    sub = -(-shape[-2] // sub_mult) * sub_mult
    lead = 1
    for s in shape[:-2]:
        lead *= int(s)
    return lead * sub * last * itemsize


def _stage_vmem_limit(weights, weight_bufs):
    w = sum(_padded_nbytes(a) for a in weights)
    limit = weight_bufs * w + (8 << 20)          # + activations / IO buffers / scratch slack
    return int(min(max(limit, 32 << 20), 96 << 20))


def _pick_bt(batch):
    """Pack batch rows per grid step, but keep >= 2 grid steps (v7x dual TensorCore)."""
    best = 1
    for bt in range(1, batch + 1):
        if bt <= 8 and batch % bt == 0 and batch // bt >= 2:
            best = bt
    return best


# ---------------------------------------------------------------------------
# Token_Embed: fused (first_conv -> max -> concat -> second_conv -> max) kernel
# ---------------------------------------------------------------------------
def _token_embed_kernel(x_ref, w1_ref, b1_ref, s1_ref, t1_ref, w2_ref, b2_ref,
                        w3g_ref, w3l_ref, b3_ref, s2_ref, t2_ref, w4_ref, b4_ref,
                        o_ref, *, groups, k):
    bf16 = jnp.bfloat16
    f32 = jnp.float32
    x = x_ref[0]                                                        # (G*K, Cin) f32
    cin = x.shape[-1]
    # first_conv: Conv1d(Cin,h,1) -> BN(eval) -> ReLU -> Conv1d(h,h,1)
    if cin <= 4:
        # contraction depth 3: VPU broadcast-FMAs (keeps MXU free, no 128-pad of the 3-dim)
        w1 = w1_ref[...].astype(f32)
        f = b1_ref[...] + x[:, 0:1] * w1[0:1, :]
        for j in range(1, cin):
            f = f + x[:, j:j + 1] * w1[j:j + 1, :]
    else:
        f = jnp.dot(x.astype(bf16), w1_ref[...], preferred_element_type=f32) + b1_ref[...]
    f = jnp.maximum(f * s1_ref[...] + t1_ref[...], 0.0)
    f = jnp.dot(f.astype(bf16), w2_ref[...], preferred_element_type=f32) + b2_ref[...]
    h = f.shape[-1]
    g = jnp.max(f.reshape(groups, k, h), axis=1)                        # (G, h)
    # second_conv on concat([global, local]): matmul the pooled global features
    # BEFORE broadcasting (cuts MXU work by K).
    yg = jnp.dot(g.astype(bf16), w3g_ref[...], preferred_element_type=f32)   # (G, C)
    yl = jnp.dot(f.astype(bf16), w3l_ref[...], preferred_element_type=f32)   # (G*K, C)
    c = yl.shape[-1]
    y = yl.reshape(groups, k, c) + yg.reshape(groups, 1, c) + b3_ref[...]
    y = jnp.maximum(y * s2_ref[...] + t2_ref[...], 0.0)
    y = jnp.dot(y.reshape(groups * k, c).astype(bf16), w4_ref[...],
                preferred_element_type=f32) + b4_ref[...]
    o_ref[0] = jnp.max(y.reshape(groups, k, c), axis=1)                 # (G, out_c)


@jax.jit
def token_embed(points, ep):
    B, G, K, Cin = points.shape
    C = ep["w4"].shape[1]
    x = points.reshape(B, G * K, Cin).astype(jnp.float32)
    kernel = functools.partial(_token_embed_kernel, groups=G, k=K)
    weights = [ep["w1"], ep["b1"], ep["s1"], ep["t1"], ep["w2"], ep["b2"],
               ep["w3g"], ep["w3l"], ep["b3"], ep["s2"], ep["t2"], ep["w4"], ep["b4"]]
    return pl.pallas_call(
        kernel,
        out_shape=jax.ShapeDtypeStruct((B, G, C), jnp.float32),
        grid=(B,),
        in_specs=[pl.BlockSpec((1, G * K, Cin), lambda i: (i, 0, 0))]
                 + [_const_spec(w.shape) for w in weights],
        out_specs=pl.BlockSpec((1, G, C), lambda i: (i, 0, 0)),
        compiler_params=pltpu.CompilerParams(dimension_semantics=("parallel",)),
    )(x, *weights)


# ---------------------------------------------------------------------------
# Fused encoder stage: pos-embed + mask + `depth` transformer blocks + final LayerNorm
# ---------------------------------------------------------------------------
def _stage_kernel(x_ref, cen_ref, mcen_ref,
                  pw1_ref, pb1_ref, pw2_ref, pb2_ref,
                  ln1g_ref, ln1b_ref, wqkv_ref, wproj_ref, bproj_ref,
                  ln2g_ref, ln2b_ref, f1w_ref, f1b_ref, f2w_ref, f2b_ref,
                  ng_ref, nb_ref, ox_ref, on_ref, *, depth, heads, radius):
    bt, N, C = x_ref.shape
    dh = C // heads
    scale = float(dh) ** -0.5
    R = bt * N
    bf16 = jnp.bfloat16
    f32 = jnp.float32

    # --- positional embedding: Linear(3,C) [VPU] -> GELU -> Linear(C,C) [MXU] ---
    cen = cen_ref[...].reshape(R, 3).astype(f32)
    p = _linear3(cen, pw1_ref, pb1_ref)
    pos = jnp.dot(_gelu(p).astype(bf16), pw2_ref[...],
                  preferred_element_type=f32) + pb2_ref[...]            # (R, C)

    # --- local-attention additive bias from centers (built once, reused by all blocks) ---
    if radius > 0.0:
        mc = mcen_ref[...].astype(f32)                                   # (bt, N, 3)
        sq = jnp.sum(mc * mc, axis=-1, keepdims=True)                    # (bt, N, 1)
        cross = jax.lax.dot_general(mc, mc, (((2,), (2,)), ((0,), (0,))),
                                    preferred_element_type=f32)          # (bt, N, N)
        d2 = sq + jnp.swapaxes(sq, -1, -2) - 2.0 * cross
        bias = jnp.where(d2 >= radius * radius, MASK_BIAS, 0.0).astype(f32)
    else:
        bias = None

    x0 = x_ref[...].reshape(R, C).astype(f32)

    def block(d, x):
        xp = x + pos                                                     # pos added every block
        # --- attention (qkv_bias=False): one fused (R,C)@(C,3C) matmul ---
        h1 = _ln(xp, ln1g_ref[d], ln1b_ref[d]).astype(bf16)              # (R, C)
        qkv = jnp.dot(h1, wqkv_ref[d], preferred_element_type=f32)       # (R, 3C)
        qkv = qkv.reshape(bt, N, 3 * C)
        heads_out = []
        for hh in range(heads):                                          # column order: [Q|K|V]
            q = qkv[:, :, hh * dh:(hh + 1) * dh]
            k = qkv[:, :, C + hh * dh:C + (hh + 1) * dh]
            v = qkv[:, :, 2 * C + hh * dh:2 * C + (hh + 1) * dh]
            s = jax.lax.dot_general(q, k, (((2,), (2,)), ((0,), (0,))),
                                    preferred_element_type=f32) * scale  # (bt, N, N)
            if bias is not None:
                s = s + bias
            s = s - jnp.max(s, axis=-1, keepdims=True)
            e = jnp.exp(s)
            pr = e * pl.reciprocal(jnp.sum(e, axis=-1, keepdims=True), approx=True)
            o = jax.lax.dot_general(pr.astype(bf16), v.astype(bf16),
                                    (((2,), (1,)), ((0,), (0,))),
                                    preferred_element_type=f32)           # (bt, N, dh)
            heads_out.append(o)
        # concat heads (== torch .transpose(1,2).reshape(B,N,C)) then one full-width proj
        att = jnp.concatenate(heads_out, axis=-1).reshape(R, C)
        att = jnp.dot(att.astype(bf16), wproj_ref[d],
                      preferred_element_type=f32) + bproj_ref[d]
        x = xp + att
        # --- MLP ---
        h2 = _ln(x, ln2g_ref[d], ln2b_ref[d]).astype(bf16)
        m = jnp.dot(h2, f1w_ref[d], preferred_element_type=f32) + f1b_ref[d]
        m = jnp.dot(_gelu(m).astype(bf16), f2w_ref[d],
                    preferred_element_type=f32) + f2b_ref[d]
        return x + m

    x = jax.lax.fori_loop(0, depth, block, x0)
    ox_ref[...] = x.reshape(bt, N, C)                                    # fed to next stage
    on_ref[...] = _ln(x, ng_ref[...], nb_ref[...]).reshape(bt, N, C)     # encoder_norms[i](x)


_STAGE_WEIGHT_KEYS = ("pos_w1", "pos_b1", "pos_w2", "pos_b2",
                      "ln1_g", "ln1_b", "wqkv", "wproj", "bproj",
                      "ln2_g", "ln2_b", "fc1_w", "fc1_b", "fc2_w", "fc2_b",
                      "norm_g", "norm_b")


@functools.partial(jax.jit, static_argnames=("radius",))
def encoder_stage(x, centers, mask_centers, sp, radius):
    B, N, C = x.shape
    depth = sp["ln1_g"].shape[0]
    bt = _pick_bt(B)
    weights = [sp[k] for k in _STAGE_WEIGHT_KEYS]
    kernel = functools.partial(_stage_kernel, depth=depth, heads=NUM_HEADS,
                               radius=float(radius))
    batched = lambda last: pl.BlockSpec((bt, N, last), lambda i: (i, 0, 0))
    weight_bufs = 1 if _SINGLE_BUFFER else 2
    out_x, out_norm = pl.pallas_call(
        kernel,
        out_shape=(jax.ShapeDtypeStruct((B, N, C), jnp.float32),
                   jax.ShapeDtypeStruct((B, N, C), jnp.float32)),
        grid=(B // bt,),
        in_specs=[batched(C), batched(3), batched(3)]
                 + [_const_spec(w.shape) for w in weights],
        out_specs=(batched(C), batched(C)),
        compiler_params=pltpu.CompilerParams(
            dimension_semantics=("parallel",),
            vmem_limit_bytes=_stage_vmem_limit(weights, weight_bufs)),
    )(x.astype(jnp.float32), centers, mask_centers, *weights)
    return out_x, out_norm


# ---------------------------------------------------------------------------
# Forward (glue in plain JAX: only the data-dependent gather + transposes)
# ---------------------------------------------------------------------------
def h_encoder_seg_forward(params, neighborhoods, centers, idxs):
    _use_single_buffer()        # probe once (outside jit) so specs are fixed before tracing
    outs = []
    x_vis = None
    mask_src = None
    for i in range(len(centers)):
        sp = params[i]
        if i == 0:
            tokens = token_embed(neighborhoods[0], sp["embed"])
        else:
            b, g1, c1 = x_vis.shape
            _, g2, k2, _ = neighborhoods[i].shape
            x_flat = x_vis.reshape(b * g1, c1)
            # TODO(synk): inter-stage gather left to XLA (jnp.take); an in-kernel gather would
            # need per-row scalar-prefetch DMAs and is not worth it at these row counts.
            x_nb = jnp.take(x_flat, idxs[i], axis=0).reshape(b, g2, k2, c1)
            tokens = token_embed(x_nb, sp["embed"])
        radius = LOCAL_RADIUS[i]
        if radius > 0:
            # PyTorch quirk: cdist is recomputed only when the token count changes,
            # otherwise the previous centers' distances persist.
            if mask_src is None or mask_src.shape[1] != centers[i].shape[1]:
                mask_src = centers[i]
            mcen = mask_src
        else:
            mcen = centers[i]
            radius = 0.0
        x_vis, x_norm = encoder_stage(tokens, centers[i], mcen, sp["stage"], radius)
        outs.append(jnp.transpose(x_norm, (0, 2, 1)))                   # (B, C, G)
    return outs


# ---------------------------------------------------------------------------
# Deterministic parameter init (synthetic, mirrors module __init__ shapes)
# ---------------------------------------------------------------------------
def init_params(key):
    keys = iter(jax.random.split(key, 256))

    def tn(shape, std=0.02):
        return (jax.random.truncated_normal(next(keys), -2.0, 2.0, shape,
                                            jnp.float32) * std)

    def tnb(shape, std=0.02):          # bf16-resident matmul weights
        return tn(shape, std).astype(jnp.bfloat16)

    bn_scale = 1.0 / math.sqrt(1.0 + BN_EPS)   # eval BN with running stats (0, 1)
    params = []
    for i in range(len(ENCODER_DIMS)):
        cin = 3 if i == 0 else ENCODER_DIMS[i - 1]
        C = ENCODER_DIMS[i]
        h = C // 2
        Db = ENCODER_DEPTHS[i]
        embed = dict(
            w1=tnb((cin, h)), b1=jnp.zeros((1, h), jnp.float32),
            s1=jnp.full((1, h), bn_scale, jnp.float32), t1=jnp.zeros((1, h), jnp.float32),
            w2=tnb((h, h)), b2=jnp.zeros((1, h), jnp.float32),
            # second_conv weight W3 (2h -> C) split into global / local halves
            w3g=tnb((h, C)), w3l=tnb((h, C)), b3=jnp.zeros((1, 1, C), jnp.float32),
            s2=jnp.full((1, 1, C), bn_scale, jnp.float32),
            t2=jnp.zeros((1, 1, C), jnp.float32),
            w4=tnb((C, C)), b4=jnp.zeros((1, C), jnp.float32),
        )
        stage = dict(
            pos_w1=tnb((3, C)), pos_b1=jnp.zeros((1, C), jnp.float32),
            pos_w2=tnb((C, C)), pos_b2=jnp.zeros((1, C), jnp.float32),
            ln1_g=jnp.ones((Db, 1, C), jnp.float32), ln1_b=jnp.zeros((Db, 1, C), jnp.float32),
            # fused per-block QKV (columns [Q heads | K heads | V heads]) and full-width proj
            wqkv=tnb((Db, C, 3 * C)),
            wproj=tnb((Db, C, C)), bproj=jnp.zeros((Db, 1, C), jnp.float32),
            ln2_g=jnp.ones((Db, 1, C), jnp.float32), ln2_b=jnp.zeros((Db, 1, C), jnp.float32),
            fc1_w=tnb((Db, C, 4 * C)), fc1_b=jnp.zeros((Db, 1, 4 * C), jnp.float32),
            fc2_w=tnb((Db, 4 * C, C)), fc2_b=jnp.zeros((Db, 1, C), jnp.float32),
            norm_g=jnp.ones((1, C), jnp.float32), norm_b=jnp.zeros((1, C), jnp.float32),
        )
        params.append(dict(embed=embed, stage=stage))
    return params


if __name__ == "__main__":
    key = jax.random.PRNGKey(0)
    kp, kd = jax.random.split(key)
    params = init_params(kp)

    B = 2
    G = [32, 16, 8]      # groups per hierarchy level
    K = [16, 8, 8]       # neighborhood sizes per level
    dk = jax.random.split(kd, 8)

    neighborhoods = [
        jax.random.normal(dk[0], (B, G[0], K[0], 3), jnp.float32) * 0.05,
        jax.random.normal(dk[1], (B, G[1], K[1], 3), jnp.float32) * 0.05,
        jax.random.normal(dk[2], (B, G[2], K[2], 3), jnp.float32) * 0.05,
    ]
    centers = [
        jax.random.uniform(dk[3], (B, G[0], 3), jnp.float32, -1.0, 1.0),
        jax.random.uniform(dk[4], (B, G[1], 3), jnp.float32, -1.0, 1.0),
        jax.random.uniform(dk[5], (B, G[2], 3), jnp.float32, -1.0, 1.0),
    ]
    idxs = [
        None,
        jax.random.randint(dk[6], (B * G[1] * K[1],), 0, B * G[0]),
        jax.random.randint(dk[7], (B * G[2] * K[2],), 0, B * G[1]),
    ]

    outs = h_encoder_seg_forward(params, neighborhoods, centers, idxs)
    for o in outs:
        jax.block_until_ready(o)

    assert outs[0].shape == (B, ENCODER_DIMS[0], G[0])
    assert outs[1].shape == (B, ENCODER_DIMS[1], G[1])
    assert outs[2].shape == (B, ENCODER_DIMS[2], G[2])
    assert all(o.dtype == jnp.float32 for o in outs)
    assert all(bool(jnp.all(jnp.isfinite(o))) for o in outs)
    print("KERNEL_OK")
</pallas_src>

<mosaic_0001>
module attributes {stable_mosaic.version = 11 : i64} {
  func.func @_k(%arg0: i32, %arg1: memref<1x8x128xf32, #tpu.memory_space<vmem>>, %arg2: memref<4x8x128xf32, #tpu.memory_space<vmem>>, %arg3: memref<1x8x128xf32, #tpu.memory_space<vmem>>) attributes {dimension_semantics = [#tpu.dimension_semantics<arbitrary>], iteration_bounds = array<i64: 2>, scalar_prefetch = 0 : i64, scratch_operands = 0 : i64, tpu.core_type = #tpu.core_type<tc>, window_params = [{transform_indices = @transform_0, window_bounds = array<i64: 1, 8, 128>}, {pipeline_mode = #tpu.pipeline_mode<synchronous>, transform_indices = @transform_1, window_bounds = array<i64: 4, 8, 128>}, {transform_indices = @transform_2, window_bounds = array<i64: 1, 8, 128>}]} {
    %c0 = arith.constant 0 : index
    %c0_0 = arith.constant 0 : index
    %c0_1 = arith.constant 0 : index
    %0 = vector.load %arg1[%c0, %c0_0, %c0_1] : memref<1x8x128xf32, #tpu.memory_space<vmem>>, vector<1x8x128xf32>
    %c0_2 = arith.constant 0 : index
    %c0_3 = arith.constant 0 : index
    %c0_4 = arith.constant 0 : index
    %1 = vector.load %arg2[%c0_2, %c0_3, %c0_4] : memref<4x8x128xf32, #tpu.memory_space<vmem>>, vector<1x8x128xf32>
    %2 = vector.shape_cast %1 : vector<1x8x128xf32> to vector<8x128xf32>
    %3 = vector.shape_cast %2 : vector<8x128xf32> to vector<1x8x128xf32>
    %4 = arith.addf %0, %3 : vector<1x8x128xf32>
    %c0_5 = arith.constant 0 : index
    %c0_6 = arith.constant 0 : index
    %c0_7 = arith.constant 0 : index
    %5 = vector.load %arg3[%c0_5, %c0_6, %c0_7] : memref<1x8x128xf32, #tpu.memory_space<vmem>>, vector<1x8x128xf32>
    tpu.vector_store %arg3[%c0_5, %c0_6, %c0_7], %4 {strides = array<i32>} : memref<1x8x128xf32, #tpu.memory_space<vmem>>, vector<1x8x128xf32>,
    return
  }
  func.func @transform_0(%arg0: i32) -> (i32, i32, i32) {
    %c0_i32 = arith.constant 0 : i32
    %c0_i32_0 = arith.constant 0 : i32
    %c0_i32_1 = arith.constant 0 : i32
    return %arg0, %c0_i32, %c0_i32_0 : i32, i32, i32
  }
  func.func @transform_1(%arg0: i32) -> (i32, i32, i32) {
    %c0_i32 = arith.constant 0 : i32
    %c0_i32_0 = arith.constant 0 : i32
    %c0_i32_1 = arith.constant 0 : i32
    %c0_i32_2 = arith.constant 0 : i32
    return %c0_i32, %c0_i32_0, %c0_i32_1 : i32, i32, i32
  }
  func.func @transform_2(%arg0: i32) -> (i32, i32, i32) {
    %c0_i32 = arith.constant 0 : i32
    %c0_i32_0 = arith.constant 0 : i32
    %c0_i32_1 = arith.constant 0 : i32
    return %arg0, %c0_i32, %c0_i32_0 : i32, i32, i32
  }
}

module attributes {stable_mosaic.version = 11 : i64} {
  func.func @_token_embed_kernel(%arg0: i32, %arg1: memref<1x512x3xf32, #tpu.memory_space<vmem>>, %arg2: memref<3x48xbf16, #tpu.memory_space<vmem>>, %arg3: memref<1x48xf32, #tpu.memory_space<vmem>>, %arg4: memref<1x48xf32, #tpu.memory_space<vmem>>, %arg5: memref<1x48xf32, #tpu.memory_space<vmem>>, %arg6: memref<48x48xbf16, #tpu.memory_space<vmem>>, %arg7: memref<1x48xf32, #tpu.memory_space<vmem>>, %arg8: memref<48x96xbf16, #tpu.memory_space<vmem>>, %arg9: memref<48x96xbf16, #tpu.memory_space<vmem>>, %arg10: memref<1x1x96xf32, #tpu.memory_space<vmem>>, %arg11: memref<1x1x96xf32, #tpu.memory_space<vmem>>, %arg12: memref<1x1x96xf32, #tpu.memory_space<vmem>>, %arg13: memref<96x96xbf16, #tpu.memory_space<vmem>>, %arg14: memref<1x96xf32, #tpu.memory_space<vmem>>, %arg15: memref<1x32x96xf32, #tpu.memory_space<vmem>>) attributes {dimension_semantics = [#tpu.dimension_semantics<parallel>], iteration_bounds = array<i64: 2>, scalar_prefetch = 0 : i64, scratch_operands = 0 : i64, tpu.core_type = #tpu.core_type<tc>, window_params = [{transform_indices = @transform_0, window_bounds = array<i64: 1, 512, 3>}, {pipeline_mode = #tpu.pipeline_mode<synchronous>, transform_indices = @transform_1, window_bounds = array<i64: 3, 48>}, {pipeline_mode = #tpu.pipeline_mode<synchronous>, transform_indices = @transform_2, window_bounds = array<i64: 1, 48>}, {pipeline_mode = #tpu.pipeline_mode<synchronous>, transform_indices = @transform_3, window_bounds = array<i64: 1, 48>}, {pipeline_mode = #tpu.pipeline_mode<synchronous>, transform_indices = @transform_4, window_bounds = array<i64: 1, 48>}, {pipeline_mode = #tpu.pipeline_mode<synchronous>, transform_indices = @transform_5, window_bounds = array<i64: 48, 48>}, {pipeline_mode = #tpu.pipeline_mode<synchronous>, transform_indices = @transform_6, window_bounds = array<i64: 1, 48>}, {pipeline_mode = #tpu.pipeline_mode<synchronous>, transform_indices = @transform_7, window_bounds = array<i64: 48, 96>}, {pipeline_mode = #tpu.pipeline_mode<synchronous>, transform_indices = @transform_8, window_bounds = array<i64: 48, 96>}, {pipeline_mode = #tpu.pipeline_mode<synchronous>, transform_indices = @transform_9, window_bounds = array<i64: 1, 1, 96>}, {pipeline_mode = #tpu.pipeline_mode<synchronous>, transform_indices = @transform_10, window_bounds = array<i64: 1, 1, 96>}, {pipeline_mode = #tpu.pipeline_mode<synchronous>, transform_indices = @transform_11, window_bounds = array<i64: 1, 1, 96>}, {pipeline_mode = #tpu.pipeline_mode<synchronous>, transform_indices = @transform_12, window_bounds = array<i64: 96, 96>}, {pipeline_mode = #tpu.pipeline_mode<synchronous>, transform_indices = @transform_13, window_bounds = array<i64: 1, 96>}, {transform_indices = @transform_14, window_bounds = array<i64: 1, 32, 96>}]} {
    %c0 = arith.constant 0 : index
    %c0_0 = arith.constant 0 : index
    %c0_1 = arith.constant 0 : index
    %0 = vector.load %arg1[%c0, %c0_0, %c0_1] : memref<1x512x3xf32, #tpu.memory_space<vmem>>, vector<1x512x3xf32>
    %1 = vector.shape_cast %0 : vector<1x512x3xf32> to vector<512x3xf32>
    %c0_2 = arith.constant 0 : index
    %c0_3 = arith.constant 0 : index
    %2 = vector.load %arg2[%c0_2, %c0_3] : memref<3x48xbf16, #tpu.memory_space<vmem>>, vector<3x48xbf16>
    %3 = arith.extf %2 : vector<3x48xbf16> to vector<3x48xf32>
    %c0_4 = arith.constant 0 : index
    %c0_5 = arith.constant 0 : index
    %4 = vector.load %arg3[%c0_4, %c0_5] : memref<1x48xf32, #tpu.memory_space<vmem>>, vector<1x48xf32>
    %5 = vector.extract_strided_slice %1 {offsets = [0, 0], sizes = [512, 1], strides = [1, 1]} : vector<512x3xf32> to vector<512x1xf32>
    %6 = vector.extract_strided_slice %3 {offsets = [0, 0], sizes = [1, 48], strides = [1, 1]} : vector<3x48xf32> to vector<1x48xf32>
    %7 = vector.broadcast %5 : vector<512x1xf32> to vector<512x48xf32>
    %8 = vector.broadcast %6 : vector<1x48xf32> to vector<512x48xf32>
    %9 = arith.mulf %7, %8 : vector<512x48xf32>
    %10 = vector.broadcast %4 : vector<1x48xf32> to vector<512x48xf32>
    %11 = arith.addf %10, %9 : vector<512x48xf32>
    %12 = vector.extract_strided_slice %1 {offsets = [0, 1], sizes = [512, 1], strides = [1, 1]} : vector<512x3xf32> to vector<512x1xf32>
    %13 = vector.extract_strided_slice %3 {offsets = [1, 0], sizes = [1, 48], strides = [1, 1]} : vector<3x48xf32> to vector<1x48xf32>
    %14 = vector.broadcast %12 : vector<512x1xf32> to vector<512x48xf32>
    %15 = vector.broadcast %13 : vector<1x48xf32> to vector<512x48xf32>
    %16 = arith.mulf %14, %15 : vector<512x48xf32>
    %17 = arith.addf %11, %16 : vector<512x48xf32>
    %18 = vector.extract_strided_slice %1 {offsets = [0, 2], sizes = [512, 1], strides = [1, 1]} : vector<512x3xf32> to vector<512x1xf32>
    %19 = vector.extract_strided_slice %3 {offsets = [2, 0], sizes = [1, 48], strides = [1, 1]} : vector<3x48xf32> to vector<1x48xf32>
    %20 = vector.broadcast %18 : vector<512x1xf32> to vector<512x48xf32>
    %21 = vector.broadcast %19 : vector<1x48xf32> to vector<512x48xf32>
    %22 = arith.mulf %20, %21 : vector<512x48xf32>
    %23 = arith.addf %17, %22 : vector<512x48xf32>
    %c0_6 = arith.constant 0 : index
    %c0_7 = arith.constant 0 : index
    %24 = vector.load %arg4[%c0_6, %c0_7] : memref<1x48xf32, #tpu.memory_space<vmem>>, vector<1x48xf32>
    %25 = vector.broadcast %24 : vector<1x48xf32> to vector<512x48xf32>
    %26 = arith.mulf %23, %25 : vector<512x48xf32>
    %c0_8 = arith.constant 0 : index
    %c0_9 = arith.constant 0 : index
    %27 = vector.load %arg5[%c0_8, %c0_9] : memref<1x48xf32, #tpu.memory_space<vmem>>, vector<1x48xf32>
    %28 = vector.broadcast %27 : vector<1x48xf32> to vector<512x48xf32>
    %29 = arith.addf %26, %28 : vector<512x48xf32>
    %cst = arith.constant 0.000000e+00 : f32
    %30 = vector.broadcast %cst : f32 to vector<512x48xf32>
    %31 = arith.maximumf %29, %30 : vector<512x48xf32>
    %32 = arith.truncf %31 : vector<512x48xf32> to vector<512x48xbf16>
    %c0_10 = arith.constant 0 : index
    %c0_11 = arith.constant 0 : index
    %33 = vector.load %arg6[%c0_10, %c0_11] : memref<48x48xbf16, #tpu.memory_space<vmem>>, vector<48x48xbf16>
    %cst_12 = arith.constant dense<0.000000e+00> : vector<512x48xf32>
    %34 = tpu.matmul %32, %33, %cst_12 {dimension_numbers = #tpu.dot_dimension_numbers<[1], [0], [0], [1], [0, 0, 1, 1], [], []>} : vector<512x48xbf16>, vector<48x48xbf16>, vector<512x48xf32> -> vector<512x48xf32>
    %c0_13 = arith.constant 0 : index
    %c0_14 = arith.constant 0 : index
    %35 = vector.load %arg7[%c0_13, %c0_14] : memref<1x48xf32, #tpu.memory_space<vmem>>, vector<1x48xf32>
    %36 = vector.broadcast %35 : vector<1x48xf32> to vector<512x48xf32>
    %37 = arith.addf %34, %36 : vector<512x48xf32>
    %38 = vector.shape_cast %37 : vector<512x48xf32> to vector<32x16x48xf32>
    %cst_15 = arith.constant dense<0xFF800000> : vector<32x48xf32>
    %39 = vector.multi_reduction <maximumf>, %38, %cst_15 [1] : vector<32x16x48xf32> to vector<32x48xf32>
    %40 = arith.truncf %39 : vector<32x48xf32> to vector<32x48xbf16>
    %c0_16 = arith.constant 0 : index
    %c0_17 = arith.constant 0 : index
    %41 = vector.load %arg8[%c0_16, %c0_17] : memref<48x96xbf16, #tpu.memory_space<vmem>>, vector<48x96xbf16>
    %cst_18 = arith.constant dense<0.000000e+00> : vector<32x96xf32>
    %42 = tpu.matmul %40, %41, %cst_18 {dimension_numbers = #tpu.dot_dimension_numbers<[1], [0], [0], [1], [0, 0, 1, 1], [], []>} : vector<32x48xbf16>, vector<48x96xbf16>, vector<32x96xf32> -> vector<32x96xf32>
    %43 = arith.truncf %37 : vector<512x48xf32> to vector<512x48xbf16>
    %c0_19 = arith.constant 0 : index
    %c0_20 = arith.constant 0 : index
    %44 = vector.load %arg9[%c0_19, %c0_20] : memref<48x96xbf16, #tpu.memory_space<vmem>>, vector<48x96xbf16>
    %cst_21 = arith.constant dense<0.000000e+00> : vector<512x96xf32>
    %45 = tpu.matmul %43, %44, %cst_21 {dimension_numbers = #tpu.dot_dimension_numbers<[1], [0], [0], [1], [0, 0, 1, 1], [], []>} : vector<512x48xbf16>, vector<48x96xbf16>, vector<512x96xf32> -> vector<512x96xf32>
    %46 = vector.shape_cast %45 : vector<512x96xf32> to vector<32x16x96xf32>
    %47 = vector.shape_cast %42 : vector<32x96xf32> to vector<32x1x96xf32>
    %48 = vector.broadcast %47 : vector<32x1x96xf32> to vector<32x16x96xf32>
    %49 = arith.addf %46, %48 : vector<32x16x96xf32>
    %c0_22 = arith.constant 0 : index
    %c0_23 = arith.constant 0 : index
    %c0_24 = arith.constant 0 : index
    %50 = vector.load %arg10[%c0_22, %c0_23, %c0_24] : memref<1x1x96xf32, #tpu.memory_space<vmem>>, vector<1x1x96xf32>
    %51 = vector.broadcast %50 : vector<1x1x96xf32> to vector<32x16x96xf32>
    %52 = arith.addf %49, %51 : vector<32x16x96xf32>
    %c0_25 = arith.constant 0 : index
    %c0_26 = arith.constant 0 : index
    %c0_27 = arith.constant 0 : index
    %53 = vector.load %arg11[%c0_25, %c0_26, %c0_27] : memref<1x1x96xf32, #tpu.memory_space<vmem>>, vector<1x1x96xf32>
    %54 = vector.broadcast %53 : vector<1x1x96xf32> to vector<32x16x96xf32>
    %55 = arith.mulf %52, %54 : vector<32x16x96xf32>
    %c0_28 = arith.constant 0 : index
    %c0_29 = arith.constant 0 : index
    %c0_30 = arith.constant 0 : index
    %56 = vector.load %arg12[%c0_28, %c0_29, %c0_30] : memref<1x1x96xf32, #tpu.memory_space<vmem>>, vector<1x1x96xf32>
    %57 = vector.broadcast %56 : vector<1x1x96xf32> to vector<32x16x96xf32>
    %58 = arith.addf %55, %57 : vector<32x16x96xf32>
    %cst_31 = arith.constant 0.000000e+00 : f32
    %59 = vector.broadcast %cst_31 : f32 to vector<32x16x96xf32>
    %60 = arith.maximumf %58, %59 : vector<32x16x96xf32>
    %61 = vector.shape_cast %60 : vector<32x16x96xf32> to vector<512x96xf32>
    %62 = arith.truncf %61 : vector<512x96xf32> to vector<512x96xbf16>
    %c0_32 = arith.constant 0 : index
    %c0_33 = arith.constant 0 : index
    %63 = vector.load %arg13[%c0_32, %c0_33] : memref<96x96xbf16, #tpu.memory_space<vmem>>, vector<96x96xbf16>
    %cst_34 = arith.constant dense<0.000000e+00> : vector<512x96xf32>
    %64 = tpu.matmul %62, %63, %cst_34 {dimension_numbers = #tpu.dot_dimension_numbers<[1], [0], [0], [1], [0, 0, 1, 1], [], []>} : vector<512x96xbf16>, vector<96x96xbf16>, vector<512x96xf32> -> vector<512x96xf32>
    %c0_35 = arith.constant 0 : index
    %c0_36 = arith.constant 0 : index
    %65 = vector.load %arg14[%c0_35, %c0_36] : memref<1x96xf32, #tpu.memory_space<vmem>>, vector<1x96xf32>
    %66 = vector.broadcast %65 : vector<1x96xf32> to vector<512x96xf32>
    %67 = arith.addf %64, %66 : vector<512x96xf32>
    %68 = vector.shape_cast %67 : vector<512x96xf32> to vector<32x16x96xf32>
    %cst_37 = arith.constant dense<0xFF800000> : vector<32x96xf32>
    %69 = vector.multi_reduction <maximumf>, %68, %cst_37 [1] : vector<32x16x96xf32> to vector<32x96xf32>
    %c0_38 = arith.constant 0 : index
    %c0_39 = arith.constant 0 : index
    %c0_40 = arith.constant 0 : index
    %70 = vector.load %arg15[%c0_38, %c0_39, %c0_40] : memref<1x32x96xf32, #tpu.memory_space<vmem>>, vector<1x32x96xf32>
    %71 = vector.shape_cast %70 : vector<1x32x96xf32> to vector<32x96xf32>
    %72 = vector.shape_cast %69 : vector<32x96xf32> to vector<1x32x96xf32>
    tpu.vector_store %arg15[%c0_38, %c0_39, %c0_40], %72 {strides = array<i32>} : memref<1x32x96xf32, #tpu.memory_space<vmem>>, vector<1x32x96xf32>,
    return
  }
  func.func @transform_0(%arg0: i32) -> (i32, i32, i32) {
    %c0_i32 = arith.constant 0 : i32
    %c0_i32_0 = arith.constant 0 : i32
    %c0_i32_1 = arith.constant 0 : i32
    return %arg0, %c0_i32, %c0_i32_0 : i32, i32, i32
  }
  func.func @transform_1(%arg0: i32) -> (i32, i32) {
    %c0_i32 = arith.constant 0 : i32
    %c0_i32_0 = arith.constant 0 : i32
    %c0_i32_1 = arith.constant 0 : i32
    return %c0_i32, %c0_i32_0 : i32, i32
  }
  func.func @transform_2(%arg0: i32) -> (i32, i32) {
    %c0_i32 = arith.constant 0 : i32
    %c0_i32_0 = arith.constant 0 : i32
    %c0_i32_1 = arith.constant 0 : i32
    return %c0_i32, %c0_i32_0 : i32, i32
  }
  func.func @transform_3(%arg0: i32) -> (i32, i32) {
    %c0_i32 = arith.constant 0 : i32
    %c0_i32_0 = arith.constant 0 : i32
    %c0_i32_1 = arith.constant 0 : i32
    return %c0_i32, %c0_i32_0 : i32, i32
  }
  func.func @transform_4(%arg0: i32) -> (i32, i32) {
    %c0_i32 = arith.constant 0 : i32
    %c0_i32_0 = arith.constant 0 : i32
    %c0_i32_1 = arith.constant 0 : i32
    return %c0_i32, %c0_i32_0 : i32, i32
  }
  func.func @transform_5(%arg0: i32) -> (i32, i32) {
    %c0_i32 = arith.constant 0 : i32
    %c0_i32_0 = arith.constant 0 : i32
    %c0_i32_1 = arith.constant 0 : i32
    return %c0_i32, %c0_i32_0 : i32, i32
  }
  func.func @transform_6(%arg0: i32) -> (i32, i32) {
    %c0_i32 = arith.constant 0 : i32
    %c0_i32_0 = arith.constant 0 : i32
    %c0_i32_1 = arith.constant 0 : i32
    return %c0_i32, %c0_i32_0 : i32, i32
  }
  func.func @transform_7(%arg0: i32) -> (i32, i32) {
    %c0_i32 = arith.constant 0 : i32
    %c0_i32_0 = arith.constant 0 : i32
    %c0_i32_1 = arith.constant 0 : i32
    return %c0_i32, %c0_i32_0 : i32, i32
  }
  func.func @transform_8(%arg0: i32) -> (i32, i32) {
    %c0_i32 = arith.constant 0 : i32
    %c0_i32_0 = arith.constant 0 : i32
    %c0_i32_1 = arith.constant 0 : i32
    return %c0_i32, %c0_i32_0 : i32, i32
  }
  func.func @transform_9(%arg0: i32) -> (i32, i32, i32) {
    %c0_i32 = arith.constant 0 : i32
    %c0_i32_0 = arith.constant 0 : i32
    %c0_i32_1 = arith.constant 0 : i32
    %c0_i32_2 = arith.constant 0 : i32
    return %c0_i32, %c0_i32_0, %c0_i32_1 : i32, i32, i32
  }
  func.func @transform_10(%arg0: i32) -> (i32, i32, i32) {
    %c0_i32 = arith.constant 0 : i32
    %c0_i32_0 = arith.constant 0 : i32
    %c0_i32_1 = arith.constant 0 : i32
    %c0_i32_2 = arith.constant 0 : i32
    return %c0_i32, %c0_i32_0, %c0_i32_1 : i32, i32, i32
  }
  func.func @transform_11(%arg0: i32) -> (i32, i32, i32) {
    %c0_i32 = arith.constant 0 : i32
    %c0_i32_0 = arith.constant 0 : i32
    %c0_i32_1 = arith.constant 0 : i32
    %c0_i32_2 = arith.constant 0 : i32
    return %c0_i32, %c0_i32_0, %c0_i32_1 : i32, i32, i32
  }
  func.func @transform_12(%arg0: i32) -> (i32, i32) {
    %c0_i32 = arith.constant 0 : i32
    %c0_i32_0 = arith.constant 0 : i32
    %c0_i32_1 = arith.constant 0 : i32
    return %c0_i32, %c0_i32_0 : i32, i32
  }
  func.func @transform_13(%arg0: i32) -> (i32, i32) {
    %c0_i32 = arith.constant 0 : i32
    %c0_i32_0 = arith.constant 0 : i32
    %c0_i32_1 = arith.constant 0 : i32
    return %c0_i32, %c0_i32_0 : i32, i32
  }
  func.func @transform_14(%arg0: i32) -> (i32, i32, i32) {
    %c0_i32 = arith.constant 0 : i32
    %c0_i32_0 = arith.constant 0 : i32
    %c0_i32_1 = arith.constant 0 : i32
    return %arg0, %c0_i32, %c0_i32_0 : i32, i32, i32
  }
}

</mosaic_0001>

<llo_original>
// kernel: tpu_custom_call.1
$region0: #{tpu_custom_call.1}
  #allocation0 [shape = 'u32[]', space=smem, size = 0x4, offset = 0x4, fixed_abs, tag = 'smem constant byte address 0x4 - core index']
  #allocation1 [shape = 'u32[72,128]{1,0:T(1,128)}', space=vmem, size = 0x9000, scoped, tag = 'internal scratch']
  %s0 = inlined_call_operand.hbm [shape: f32[2,8,128], index: 0, kind: input, shape index: {}]
  %s1 = inlined_call_operand.hbm [shape: f32[4,8,128], index: 1, kind: input, shape index: {}]
  %s2 = inlined_call_operand.hbm [shape: f32[2,8,128], index: 2, kind: output, shape index: {}]
  %s3 = sld [smem:[#allocation0]]
  $region49: #{tpu_custom_call.1} parent=0
    _
  %s5 = ssub.s32 1, %s3
  %s6 = scalar_select 0, %s5, %s3
  $region1: #{tpu_custom_call.1} parent=0
    #allocation2 [shape = 'u8[8192]{0}', space=vmem, size = 0x2000, scoped, tag = 'input window, operand 0']
    #allocation3 [shape = 's32[2]{0}', space=sflag, size = 0x8, scoped, tag = 'scoped memory for tpu_custom_call.1']
    #allocation4 [shape = 's32[2]{0}', space=sflag, size = 0x8, scoped, tag = 'scoped memory for tpu_custom_call.1']
    #allocation5 [shape = 'u8[16384]{0}', space=vmem, size = 0x4000, scoped, tag = 'input window, operand 1, single buffered']
    #allocation6 [shape = 's32[1]{0}', space=sflag, size = 0x4, scoped, tag = 'scoped memory for tpu_custom_call.1']
    #allocation7 [shape = 'u8[8192]{0}', space=vmem, size = 0x2000, scoped, tag = 'output window, operand 0']
    %7 = vsyncpa [#allocation3], 0
    %s8 = scalar_lea.sflag [#allocation3], 1
    %9 = vsyncpa %s8, 0
    %10 = vsyncpa [#allocation6], 0
    %11 = vsyncpa [#allocation4], 0
    %s12 = scalar_lea.sflag [#allocation4], 1
    %13 = vsyncpa %s12, 0
    loop: start=0, step=1, limit=4
    $region2: #{tpu_custom_call.1} parent=1 // loop_pre_header
      _
    $region3: #{tpu_custom_call.1} parent=1 // loop_header
      %s15 = sphi 0, %s19
      %p16 = scmp.ge.s32.totalorder %s15, 4
      %s25 = sphi 0, %s27
      %s28 = sphi 0, %s25
      %s29 = sphi 0, %s28
      %s45 = sphi 0, %s29
      %s49 = sphi 0, %s49
      %s51 = sphi 0, %s49
      %s52 = sphi 0, %s51
      %s66 = sphi 0, %s52
      %s72 = sphi 0, %s74
      %s75 = sphi 0, %s72
      %s76 = sphi 0, %s75
      %s92 = sphi 0, %s76
    $region4: #{tpu_custom_call.1} parent=1 // loop_header_branch
      %18 = sbr.rel (%p16) target = $region8
    $region5: #{tpu_custom_call.1} parent=1 // loop_body
      %s20 = ssub.s32 %s15, 1
      %s21 = ssub.s32 %s15, 2
      %s22 = sadd.s32 %s15, 1
      %s23 = ssub.s32 %s15, %s22
      %p24 = scmp.eq.s32.totalorder %s23, 0
      %s26 = sadd.s32 %s25, 1
      %s27 = scalar_select %p24, %s25, %s26
      %p30 = pneg %p24
      %p31 = scmp.eq.s32.totalorder %s15, 1
      %p32 = por %p30, %p31
      %p33 = scmp.ne.s32.totalorder %s25, %s28
      %p34 = scmp.eq.s32.totalorder %s15, 0
      %p35 = por %p33, %p34
      %p36 = scmp.ne.s32.totalorder %s25, %s28
      %p37 = scmp.eq.s32.totalorder %s20, 1
      %p38 = por %p36, %p37
      %p39 = scmp.ne.s32.totalorder %s28, %s29
      %p40 = scmp.eq.s32.totalorder %s20, 0
      %p41 = por %p39, %p40
      %p42 = scmp.ne.s32.totalorder %s28, %s29
      %p43 = scmp.eq.s32.totalorder %s21, 1
      %p44 = por %p42, %p43
      %p46 = scmp.ne.s32.totalorder %s29, %s45
      %p47 = scmp.eq.s32.totalorder %s21, 0
      %p48 = por %p46, %p47
      %s50 = sadd.s32 %s49, 1
      %p53 = scmp.eq.s32.totalorder %s15, 1
      %p54 = scmp.ne.s32.totalorder %s49, %s51
      %p55 = scmp.eq.s32.totalorder %s15, 0
      %p56 = por %p54, %p55
      %p57 = scmp.ne.s32.totalorder %s49, %s51
      %p58 = scmp.eq.s32.totalorder %s20, 1
      %p59 = por %p57, %p58
      %p60 = scmp.ne.s32.totalorder %s51, %s52
      %p61 = scmp.eq.s32.totalorder %s20, 0
      %p62 = por %p60, %p61
      %p63 = scmp.ne.s32.totalorder %s51, %s52
      %p64 = scmp.eq.s32.totalorder %s21, 1
      %p65 = por %p63, %p64
      %p67 = scmp.ne.s32.totalorder %s52, %s66
      %p68 = scmp.eq.s32.totalorder %s21, 0
      %p69 = por %p67, %p68
      %s70 = ssub.s32 %s15, %s22
      %p71 = scmp.eq.s32.totalorder %s70, 0
      %s73 = sadd.s32 %s72, 1
      %s74 = scalar_select %p71, %s72, %s73
      %p77 = pneg %p71
      %p78 = scmp.eq.s32.totalorder %s15, 1
      %p79 = por %p77, %p78
      %p80 = scmp.ne.s32.totalorder %s72, %s75
      %p81 = scmp.eq.s32.totalorder %s15, 0
      %p82 = por %p80, %p81
      %p83 = scmp.ne.s32.totalorder %s72, %s75
      %p84 = scmp.eq.s32.totalorder %s20, 1
      %p85 = por %p83, %p84
      %p86 = scmp.ne.s32.totalorder %s75, %s76
      %p87 = scmp.eq.s32.totalorder %s20, 0
      %p88 = por %p86, %p87
      %p89 = scmp.ne.s32.totalorder %s75, %s76
      %p90 = scmp.eq.s32.totalorder %s21, 1
      %p91 = por %p89, %p90
      %p93 = scmp.ne.s32.totalorder %s76, %s92
      %p94 = scmp.eq.s32.totalorder %s21, 0
      %p95 = por %p93, %p94
      %p96 = scmp.le.s32.totalorder 1, %s15
      %p97 = scmp.lt.s32.totalorder %s15, 3
      %p98 = pnand %p96, %p97
      %p99 = pneg %p98
      // Predicated region
      $region9: #{tpu_custom_call.1} parent=5 // pred_check
        _
      $region10: #{tpu_custom_call.1} parent=5 // pred_check_branch
        %101 = sbr.rel (%p98) target = $region12
      $region11: #{tpu_custom_call.1} parent=5 // pred_region
        %s102 = ssub.s32 %s15, 1
        // Predicated region
        $region13: #{tpu_custom_call.1} parent=11 // pred_check
          %p103 = pneg %p62
        $region14: #{tpu_custom_call.1} parent=11 // pred_check_branch
          %105 = sbr.rel (%p103) target = $region16
        $region15: #{tpu_custom_call.1} parent=11 // pred_region
          %107 = vsyncadd [#allocation6], 0
          %s108 = sshll.u32 %s1, 4
          %s109 = int_to_ptr.hbm [resolvable:$true] %s108
          %s110 = sshll.u32 [#allocation5], 4
          %s111 = int_to_ptr.vmem [resolvable:$true] %s110
          %116 = dma.hbm_to_vmem [thread:$0]  %s109, 512, %s111, [#allocation6], 128, 128, 8
        $region16: #{tpu_custom_call.1} parent=11 // pred_fallthru
          _
      $region12: #{tpu_custom_call.1} parent=5 // pred_fallthru
        _
      %p117 = scmp.lt.s32.totalorder %s15, 2
      // Predicated region
      $region17: #{tpu_custom_call.1} parent=5 // pred_check
        %p118 = pneg %p117
      $region18: #{tpu_custom_call.1} parent=5 // pred_check_branch
        %120 = sbr.rel (%p118) target = $region20
      $region19: #{tpu_custom_call.1} parent=5 // pred_region
        // Predicated region
        $region21: #{tpu_custom_call.1} parent=19 // pred_check
          %p121 = pneg %p35
        $region22: #{tpu_custom_call.1} parent=19 // pred_check_branch
          %123 = sbr.rel (%p121) target = $region24
        $region23: #{tpu_custom_call.1} parent=19 // pred_region
          %s124 = sand.u32 %s25, 1
          %s125 = scalar_lea.sflag [#allocation3], %s124
          %s126 = sand.u32 %s25, 1
          %s127 = smul.addr %s126, 8
          %s128 = scalar_lea.vmem [#allocation2], %s127
          %130 = vsyncadd %s125, 0
          %s131 = smul.addr %s15, 8
          %s132 = scalar_lea.hbm %s0, %s131
          %s134 = sshll.u32 %s132, 4
          %s135 = int_to_ptr.hbm [resolvable:$true] %s134
          %s136 = sshll.u32 %s128, 4
          %s137 = int_to_ptr.vmem [resolvable:$true] %s136
          %139 = dma.hbm_to_vmem [thread:$0]  %s135, 128, %s137, %s125
        $region24: #{tpu_custom_call.1} parent=19 // pred_fallthru
          _
      $region20: #{tpu_custom_call.1} parent=5 // pred_fallthru
        _
      %p140 = scmp.le.s32.totalorder 1, %s15
      %p141 = scmp.lt.s32.totalorder %s15, 3
      %p142 = pnand %p140, %p141
      %p143 = pneg %p142
      // Predicated region
      $region25: #{tpu_custom_call.1} parent=5 // pred_check
        _
      $region26: #{tpu_custom_call.1} parent=5 // pred_check_branch
        %145 = sbr.rel (%p142) target = $region28
      $region27: #{tpu_custom_call.1} parent=5 // pred_region
        %s146 = ssub.s32 %s15, 1
        %s147 = sand.u32 %s28, 1
        %s148 = scalar_lea.sflag [#allocation3], %s147
        %s149 = sand.u32 %s28, 1
        %s150 = smul.addr %s149, 8
        %s151 = scalar_lea.vmem [#allocation2], %s150
        // Predicated region
        $region29: #{tpu_custom_call.1} parent=27 // pred_check
          %p152 = pneg %p41
        $region30: #{tpu_custom_call.1} parent=27 // pred_check_branch
          %154 = sbr.rel (%p152) target = $region32
        $region31: #{tpu_custom_call.1} parent=27 // pred_region
          %156 = dma.done %s148, 128
        $region32: #{tpu_custom_call.1} parent=27 // pred_fallthru
          _
        // Predicated region
        $region33: #{tpu_custom_call.1} parent=27 // pred_check
          %p157 = pneg %p62
        $region34: #{tpu_custom_call.1} parent=27 // pred_check_branch
          %159 = sbr.rel (%p157) target = $region36
        $region35: #{tpu_custom_call.1} parent=27 // pred_region
          %161 = dma.done [#allocation6], 512
        $region36: #{tpu_custom_call.1} parent=27 // pred_fallthru
          _
        %s162 = sand.u32 %s28, 1
        %s163 = scalar_lea.sflag [#allocation3], %s162
        %s164 = sand.u32 %s28, 1
        %s165 = smul.addr %s164, 8
        %s166 = scalar_lea.vmem [#allocation2], %s165
        %p167 = pneg %p41
        %p168 = pneg %p38
        %p169 = pneg %p62
        %p170 = pneg %p59
        %p171 = pneg %p88
        %p172 = pneg %p85
        %s173 = sand.u32 %s75, 1
        %s174 = scalar_lea.sflag [#allocation4], %s173
        %s175 = sand.u32 %s75, 1
        %s176 = smul.addr %s175, 8
        %s177 = scalar_lea.vmem [#allocation7], %s176
        %v178 = vld [vmem:[%s151] sm:$0xff]
        %v179 = vld [vmem:[#allocation5] sm:$0xff]
        %v180 = vadd.f32 %v178, %v179
        %181 = vst [vmem:[%s177] sm:$0xff] %v180
        %s182 = sand.u32 %s75, 1
        %s183 = scalar_lea.sflag [#allocation4], %s182
        %s184 = sand.u32 %s75, 1
        %s185 = smul.addr %s184, 8
        %s186 = scalar_lea.vmem [#allocation7], %s185
        // Predicated region
        $region37: #{tpu_custom_call.1} parent=27 // pred_check
          %p187 = pneg %p85
        $region38: #{tpu_custom_call.1} parent=27 // pred_check_branch
          %189 = sbr.rel (%p187) target = $region40
        $region39: #{tpu_custom_call.1} parent=27 // pred_region
          %191 = vsyncadd %s183, 0
          %s192 = smul.addr %s20, 8
          %s193 = scalar_lea.hbm %s2, %s192
          %s195 = sshll.u32 %s186, 4
          %s196 = int_to_ptr.vmem [resolvable:$true] %s195
          %s197 = sshll.u32 %s193, 4
          %s198 = int_to_ptr.hbm [resolvable:$true] %s197
          %200 = dma.vmem_to_hbm [thread:$0]  %s196, 128, %s198, %s183
        $region40: #{tpu_custom_call.1} parent=27 // pred_fallthru
          _
      $region28: #{tpu_custom_call.1} parent=5 // pred_fallthru
        _
      %p201 = scmp.le.s32.totalorder 2, %s15
      // Predicated region
      $region41: #{tpu_custom_call.1} parent=5 // pred_check
        %p202 = pneg %p201
      $region42: #{tpu_custom_call.1} parent=5 // pred_check_branch
        %204 = sbr.rel (%p202) target = $region44
      $region43: #{tpu_custom_call.1} parent=5 // pred_region
        %s205 = ssub.s32 %s15, 2
        // Predicated region
        $region45: #{tpu_custom_call.1} parent=43 // pred_check
          %p206 = pneg %p91
        $region46: #{tpu_custom_call.1} parent=43 // pred_check_branch
          %208 = sbr.rel (%p206) target = $region48
        $region47: #{tpu_custom_call.1} parent=43 // pred_region
          %s209 = sand.u32 %s76, 1
          %s210 = scalar_lea.sflag [#allocation4], %s209
          %s211 = sand.u32 %s76, 1
          %s212 = smul.addr %s211, 8
          %s213 = scalar_lea.vmem [#allocation7], %s212
          %215 = dma.done %s210, 128
        $region48: #{tpu_custom_call.1} parent=43 // pred_fallthru
          _
      $region44: #{tpu_custom_call.1} parent=5 // pred_fallthru
        _
    $region6: #{tpu_custom_call.1} parent=1 // loop_footer
      %s19 = sadd.s32 1, %s15
    $region7: #{tpu_custom_call.1} parent=1 // loop_footer_branch
      %14 = sbr.rel target = $region3
    $region8: #{tpu_custom_call.1} parent=1 // loop_exit
      _
    %216 = vsyncpa [#allocation3], 1
    %s217 = scalar_lea.sflag [#allocation3], 1
    %218 = vsyncpa %s217, 1
    %219 = vsyncpa [#allocation6], 1
    %220 = vsyncpa [#allocation4], 1
    %s221 = scalar_lea.sflag [#allocation4], 1
    %222 = vsyncpa %s221, 1

// kernel: token_embed.1
$region0: #{token_embed.1}
  #allocation0 [shape = 'u32[]', space=smem, size = 0x4, offset = 0x4, fixed_abs, tag = 'smem constant byte address 0x4 - core index']
  #allocation1 [shape = 'u32[72,128]{1,0:T(1,128)}', space=vmem, size = 0x9000, scoped, tag = 'internal scratch']
  %s0 = inlined_call_operand.vmem [shape: f32[2,512,3], index: 0, kind: input, shape index: {}]
  %s1 = inlined_call_operand.vmem [shape: bf16[3,48], index: 1, kind: input, shape index: {}]
  %s2 = inlined_call_operand.vmem [shape: f32[1,48], index: 2, kind: input, shape index: {}]
  %s3 = inlined_call_operand.vmem [shape: f32[1,48], index: 3, kind: input, shape index: {}]
  %s4 = inlined_call_operand.vmem [shape: f32[1,48], index: 4, kind: input, shape index: {}]
  %s5 = inlined_call_operand.vmem [shape: bf16[48,48], index: 5, kind: input, shape index: {}]
  %s6 = inlined_call_operand.vmem [shape: f32[1,48], index: 6, kind: input, shape index: {}]
  %s7 = inlined_call_operand.vmem [shape: bf16[48,96], index: 7, kind: input, shape index: {}]
  %s8 = inlined_call_operand.vmem [shape: bf16[48,96], index: 8, kind: input, shape index: {}]
  %s9 = inlined_call_operand.vmem [shape: f32[1,1,96], index: 9, kind: input, shape index: {}]
  %s10 = inlined_call_operand.vmem [shape: f32[1,1,96], index: 10, kind: input, shape index: {}]
  %s11 = inlined_call_operand.vmem [shape: f32[1,1,96], index: 11, kind: input, shape index: {}]
  %s12 = inlined_call_operand.vmem [shape: bf16[96,96], index: 12, kind: input, shape index: {}]
  %s13 = inlined_call_operand.vmem [shape: f32[1,96], index: 13, kind: input, shape index: {}]
  %s14 = inlined_call_operand.hbm [shape: f32[2,32,96], index: 14, kind: output, shape index: {}]
  %s15 = sld [smem:[#allocation0]]
  $region89: #{token_embed.1} parent=0
    _
  %s17 = ssub.s32 1, %s15
  %s18 = scalar_select 0, %s17, %s15
  $region1: #{token_embed.1} parent=0
    #allocation2 [shape = 'u8[32768]{0}', space=vmem, size = 0x8000, scoped, tag = 'output window, operand 0']
    #allocation3 [shape = 's32[2]{0}', space=sflag, size = 0x8, scoped, tag = 'scoped memory for token_embed.1']
    %19 = vsyncpa [#allocation3], 0
    %s20 = scalar_lea.sflag [#allocation3], 1
    %21 = vsyncpa %s20, 0
    loop: start=0, step=1, limit=4
    $region2: #{token_embed.1} parent=1 // loop_pre_header
      _
    $region3: #{token_embed.1} parent=1 // loop_header
      %s23 = sphi 0, %s27
      %p24 = scmp.ge.s32.totalorder %s23, 4
      %s33 = sphi 0, %s35
      %s36 = sphi 0, %s33
      %s37 = sphi 0, %s36
      %s53 = sphi 0, %s37
      %s57 = sphi 0, %s57
      %s59 = sphi 0, %s57
      %s60 = sphi 0, %s59
      %s74 = sphi 0, %s60
      %s78 = sphi 0, %s78
      %s80 = sphi 0, %s78
      %s81 = sphi 0, %s80
      %s95 = sphi 0, %s81
      %s99 = sphi 0, %s99
      %s101 = sphi 0, %s99
      %s102 = sphi 0, %s101
      %s116 = sphi 0, %s102
      %s120 = sphi 0, %s120
      %s122 = sphi 0, %s120
      %s123 = sphi 0, %s122
      %s137 = sphi 0, %s123
      %s141 = sphi 0, %s141
      %s143 = sphi 0, %s141
      %s144 = sphi 0, %s143
      %s158 = sphi 0, %s144
      %s162 = sphi 0, %s162
      %s164 = sphi 0, %s162
      %s165 = sphi 0, %s164
      %s179 = sphi 0, %s165
      %s183 = sphi 0, %s183
      %s185 = sphi 0, %s183
      %s186 = sphi 0, %s185
      %s200 = sphi 0, %s186
      %s204 = sphi 0, %s204
      %s206 = sphi 0, %s204
      %s207 = sphi 0, %s206
      %s221 = sphi 0, %s207
      %s225 = sphi 0, %s225
      %s227 = sphi 0, %s225
      %s228 = sphi 0, %s227
      %s242 = sphi 0, %s228
      %s246 = sphi 0, %s246
      %s248 = sphi 0, %s246
      %s249 = sphi 0, %s248
      %s263 = sphi 0, %s249
      %s267 = sphi 0, %s267
      %s269 = sphi 0, %s267
      %s270 = sphi 0, %s269
      %s284 = sphi 0, %s270
      %s288 = sphi 0, %s288
      %s290 = sphi 0, %s288
      %s291 = sphi 0, %s290
      %s305 = sphi 0, %s291
      %s309 = sphi 0, %s309
      %s311 = sphi 0, %s309
      %s312 = sphi 0, %s311
      %s326 = sphi 0, %s312
      %s332 = sphi 0, %s334
      %s335 = sphi 0, %s332
      %s336 = sphi 0, %s335
      %s352 = sphi 0, %s336
    $region4: #{token_embed.1} parent=1 // loop_header_branch
      %26 = sbr.rel (%p24) target = $region8
    $region5: #{token_embed.1} parent=1 // loop_body
      %s28 = ssub.s32 %s23, 1
      %s29 = ssub.s32 %s23, 2
      %s30 = sadd.s32 %s23, 1
      %s31 = ssub.s32 %s23, %s30
      %p32 = scmp.eq.s32.totalorder %s31, 0
      %s34 = sadd.s32 %s33, 1
      %s35 = scalar_select %p32, %s33, %s34
      %p38 = pneg %p32
      %p39 = scmp.eq.s32.totalorder %s23, 1
      %p40 = por %p38, %p39
      %p41 = scmp.ne.s32.totalorder %s33, %s36
      %p42 = scmp.eq.s32.totalorder %s23, 0
      %p43 = por %p41, %p42
      %p44 = scmp.ne.s32.totalorder %s33, %s36
      %p45 = scmp.eq.s32.totalorder %s28, 1
      %p46 = por %p44, %p45
      %p47 = scmp.ne.s32.totalorder %s36, %s37
      %p48 = scmp.eq.s32.totalorder %s28, 0
      %p49 = por %p47, %p48
      %p50 = scmp.ne.s32.totalorder %s36, %s37
      %p51 = scmp.eq.s32.totalorder %s29, 1
      %p52 = por %p50, %p51
      %p54 = scmp.ne.s32.totalorder %s37, %s53
      %p55 = scmp.eq.s32.totalorder %s29, 0
      %p56 = por %p54, %p55
      %s58 = sadd.s32 %s57, 1
      %p61 = scmp.eq.s32.totalorder %s23, 1
      %p62 = scmp.ne.s32.totalorder %s57, %s59
      %p63 = scmp.eq.s32.totalorder %s23, 0
      %p64 = por %p62, %p63
      %p65 = scmp.ne.s32.totalorder %s57, %s59
      %p66 = scmp.eq.s32.totalorder %s28, 1
      %p67 = por %p65, %p66
      %p68 = scmp.ne.s32.totalorder %s59, %s60
      %p69 = scmp.eq.s32.totalorder %s28, 0
      %p70 = por %p68, %p69
      %p71 = scmp.ne.s32.totalorder %s59, %s60
      %p72 = scmp.eq.s32.totalorder %s29, 1
      %p73 = por %p71, %p72
      %p75 = scmp.ne.s32.totalorder %s60, %s74
      %p76 = scmp.eq.s32.totalorder %s29, 0
      %p77 = por %p75, %p76
      %s79 = sadd.s32 %s78, 1
      %p82 = scmp.eq.s32.totalorder %s23, 1
      %p83 = scmp.ne.s32.totalorder %s78, %s80
      %p84 = scmp.eq.s32.totalorder %s23, 0
      %p85 = por %p83, %p84
      %p86 = scmp.ne.s32.totalorder %s78, %s80
      %p87 = scmp.eq.s32.totalorder %s28, 1
      %p88 = por %p86, %p87
      %p89 = scmp.ne.s32.totalorder %s80, %s81
      %p90 = scmp.eq.s32.totalorder %s28, 0
      %p91 = por %p89, %p90
      %p92 = scmp.ne.s32.totalorder %s80, %s81
      %p93 = scmp.eq.s32.totalorder %s29, 1
      %p94 = por %p92, %p93
      %p96 = scmp.ne.s32.totalorder %s81, %s95
      %p97 = scmp.eq.s32.totalorder %s29, 0
      %p98 = por %p96, %p97
      %s100 = sadd.s32 %s99, 1
      %p103 = scmp.eq.s32.totalorder %s23, 1
      %p104 = scmp.ne.s32.totalorder %s99, %s101
      %p105 = scmp.eq.s32.totalorder %s23, 0
      %p106 = por %p104, %p105
      %p107 = scmp.ne.s32.totalorder %s99, %s101
      %p108 = scmp.eq.s32.totalorder %s28, 1
      %p109 = por %p107, %p108
      %p110 = scmp.ne.s32.totalorder %s101, %s102
      %p111 = scmp.eq.s32.totalorder %s28, 0
      %p112 = por %p110, %p111
      %p113 = scmp.ne.s32.totalorder %s101, %s102
      %p114 = scmp.eq.s32.totalorder %s29, 1
      %p115 = por %p113, %p114
      %p117 = scmp.ne.s32.totalorder %s102, %s116
      %p118 = scmp.eq.s32.totalorder %s29, 0
      %p119 = por %p117, %p118
      %s121 = sadd.s32 %s120, 1
      %p124 = scmp.eq.s32.totalorder %s23, 1
      %p125 = scmp.ne.s32.totalorder %s120, %s122
      %p126 = scmp.eq.s32.totalorder %s23, 0
      %p127 = por %p125, %p126
      %p128 = scmp.ne.s32.totalorder %s120, %s122
      %p129 = scmp.eq.s32.totalorder %s28, 1
      %p130 = por %p128, %p129
      %p131 = scmp.ne.s32.totalorder %s122, %s123
      %p132 = scmp.eq.s32.totalorder %s28, 0
      %p133 = por %p131, %p132
      %p134 = scmp.ne.s32.totalorder %s122, %s123
      %p135 = scmp.eq.s32.totalorder %s29, 1
      %p136 = por %p134, %p135
      %p138 = scmp.ne.s32.totalorder %s123, %s137
      %p139 = scmp.eq.s32.totalorder %s29, 0
      %p140 = por %p138, %p139
      %s142 = sadd.s32 %s141, 1
      %p145 = scmp.eq.s32.totalorder %s23, 1
      %p146 = scmp.ne.s32.totalorder %s141, %s143
      %p147 = scmp.eq.s32.totalorder %s23, 0
      %p148 = por %p146, %p147
      %p149 = scmp.ne.s32.totalorder %s141, %s143
      %p150 = scmp.eq.s32.totalorder %s28, 1
      %p151 = por %p149, %p150
      %p152 = scmp.ne.s32.totalorder %s143, %s144
      %p153 = scmp.eq.s32.totalorder %s28, 0
      %p154 = por %p152, %p153
      %p155 = scmp.ne.s32.totalorder %s143, %s144
      %p156 = scmp.eq.s32.totalorder %s29, 1
      %p157 = por %p155, %p156
      %p159 = scmp.ne.s32.totalorder %s144, %s158
      %p160 = scmp.eq.s32.totalorder %s29, 0
      %p161 = por %p159, %p160
      %s163 = sadd.s32 %s162, 1
      %p166 = scmp.eq.s32.totalorder %s23, 1
      %p167 = scmp.ne.s32.totalorder %s162, %s164
      %p168 = scmp.eq.s32.totalorder %s23, 0
      %p169 = por %p167, %p168
      %p170 = scmp.ne.s32.totalorder %s162, %s164
      %p171 = scmp.eq.s32.totalorder %s28, 1
      %p172 = por %p170, %p171
      %p173 = scmp.ne.s32.totalorder %s164, %s165
      %p174 = scmp.eq.s32.totalorder %s28, 0
      %p175 = por %p173, %p174
      %p176 = scmp.ne.s32.totalorder %s164, %s165
      %p177 = scmp.eq.s32.totalorder %s29, 1
      %p178 = por %p176, %p177
      %p180 = scmp.ne.s32.totalorder %s165, %s179
      %p181 = scmp.eq.s32.totalorder %s29, 0
      %p182 = por %p180, %p181
      %s184 = sadd.s32 %s183, 1
      %p187 = scmp.eq.s32.totalorder %s23, 1
      %p188 = scmp.ne.s32.totalorder %s183, %s185
      %p189 = scmp.eq.s32.totalorder %s23, 0
      %p190 = por %p188, %p189
      %p191 = scmp.ne.s32.totalorder %s183, %s185
      %p192 = scmp.eq.s32.totalorder %s28, 1
      %p193 = por %p191, %p192
      %p194 = scmp.ne.s32.totalorder %s185, %s186
      %p195 = scmp.eq.s32.totalorder %s28, 0
      %p196 = por %p194, %p195
      %p197 = scmp.ne.s32.totalorder %s185, %s186
      %p198 = scmp.eq.s32.totalorder %s29, 1
      %p199 = por %p197, %p198
      %p201 = scmp.ne.s32.totalorder %s186, %s200
      %p202 = scmp.eq.s32.totalorder %s29, 0
      %p203 = por %p201, %p202
      %s205 = sadd.s32 %s204, 1
      %p208 = scmp.eq.s32.totalorder %s23, 1
      %p209 = scmp.ne.s32.totalorder %s204, %s206
      %p210 = scmp.eq.s32.totalorder %s23, 0
      %p211 = por %p209, %p210
      %p212 = scmp.ne.s32.totalorder %s204, %s206
      %p213 = scmp.eq.s32.totalorder %s28, 1
      %p214 = por %p212, %p213
      %p215 = scmp.ne.s32.totalorder %s206, %s207
      %p216 = scmp.eq.s32.totalorder %s28, 0
      %p217 = por %p215, %p216
      %p218 = scmp.ne.s32.totalorder %s206, %s207
      %p219 = scmp.eq.s32.totalorder %s29, 1
      %p220 = por %p218, %p219
      %p222 = scmp.ne.s32.totalorder %s207, %s221
      %p223 = scmp.eq.s32.totalorder %s29, 0
      %p224 = por %p222, %p223
      %s226 = sadd.s32 %s225, 1
      %p229 = scmp.eq.s32.totalorder %s23, 1
      %p230 = scmp.ne.s32.totalorder %s225, %s227
      %p231 = scmp.eq.s32.totalorder %s23, 0
      %p232 = por %p230, %p231
      %p233 = scmp.ne.s32.totalorder %s225, %s227
      %p234 = scmp.eq.s32.totalorder %s28, 1
      %p235 = por %p233, %p234
      %p236 = scmp.ne.s32.totalorder %s227, %s228
      %p237 = scmp.eq.s32.totalorder %s28, 0
      %p238 = por %p236, %p237
      %p239 = scmp.ne.s32.totalorder %s227, %s228
      %p240 = scmp.eq.s32.totalorder %s29, 1
      %p241 = por %p239, %p240
      %p243 = scmp.ne.s32.totalorder %s228, %s242
      %p244 = scmp.eq.s32.totalorder %s29, 0
      %p245 = por %p243, %p244
      %s247 = sadd.s32 %s246, 1
      %p250 = scmp.eq.s32.totalorder %s23, 1
      %p251 = scmp.ne.s32.totalorder %s246, %s248
      %p252 = scmp.eq.s32.totalorder %s23, 0
      %p253 = por %p251, %p252
      %p254 = scmp.ne.s32.totalorder %s246, %s248
      %p255 = scmp.eq.s32.totalorder %s28, 1
      %p256 = por %p254, %p255
      %p257 = scmp.ne.s32.totalorder %s248, %s249
      %p258 = scmp.eq.s32.totalorder %s28, 0
      %p259 = por %p257, %p258
      %p260 = scmp.ne.s32.totalorder %s248, %s249
      %p261 = scmp.eq.s32.totalorder %s29, 1
      %p262 = por %p260, %p261
      %p264 = scmp.ne.s32.totalorder %s249, %s263
      %p265 = scmp.eq.s32.totalorder %s29, 0
      %p266 = por %p264, %p265
      %s268 = sadd.s32 %s267, 1
      %p271 = scmp.eq.s32.totalorder %s23, 1
      %p272 = scmp.ne.s32.totalorder %s267, %s269
      %p273 = scmp.eq.s32.totalorder %s23, 0
      %p274 = por %p272, %p273
      %p275 = scmp.ne.s32.totalorder %s267, %s269
      %p276 = scmp.eq.s32.totalorder %s28, 1
      %p277 = por %p275, %p276
      %p278 = scmp.ne.s32.totalorder %s269, %s270
      %p279 = scmp.eq.s32.totalorder %s28, 0
      %p280 = por %p278, %p279
      %p281 = scmp.ne.s32.totalorder %s269, %s270
      %p282 = scmp.eq.s32.totalorder %s29, 1
      %p283 = por %p281, %p282
      %p285 = scmp.ne.s32.totalorder %s270, %s284
      %p286 = scmp.eq.s32.totalorder %s29, 0
      %p287 = por %p285, %p286
      %s289 = sadd.s32 %s288, 1
      %p292 = scmp.eq.s32.totalorder %s23, 1
      %p293 = scmp.ne.s32.totalorder %s288, %s290
      %p294 = scmp.eq.s32.totalorder %s23, 0
      %p295 = por %p293, %p294
      %p296 = scmp.ne.s32.totalorder %s288, %s290
      %p297 = scmp.eq.s32.totalorder %s28, 1
      %p298 = por %p296, %p297
      %p299 = scmp.ne.s32.totalorder %s290, %s291
      %p300 = scmp.eq.s32.totalorder %s28, 0
      %p301 = por %p299, %p300
      %p302 = scmp.ne.s32.totalorder %s290, %s291
      %p303 = scmp.eq.s32.totalorder %s29, 1
      %p304 = por %p302, %p303
      %p306 = scmp.ne.s32.totalorder %s291, %s305
      %p307 = scmp.eq.s32.totalorder %s29, 0
      %p308 = por %p306, %p307
      %s310 = sadd.s32 %s309, 1
      %p313 = scmp.eq.s32.totalorder %s23, 1
      %p314 = scmp.ne.s32.totalorder %s309, %s311
      %p315 = scmp.eq.s32.totalorder %s23, 0
      %p316 = por %p314, %p315
      %p317 = scmp.ne.s32.totalorder %s309, %s311
      %p318 = scmp.eq.s32.totalorder %s28, 1
      %p319 = por %p317, %p318
      %p320 = scmp.ne.s32.totalorder %s311, %s312
      %p321 = scmp.eq.s32.totalorder %s28, 0
      %p322 = por %p320, %p321
      %p323 = scmp.ne.s32.totalorder %s311, %s312
      %p324 = scmp.eq.s32.totalorder %s29, 1
      %p325 = por %p323, %p324
      %p327 = scmp.ne.s32.totalorder %s312, %s326
      %p328 = scmp.eq.s32.totalorder %s29, 0
      %p329 = por %p327, %p328
      %s330 = ssub.s32 %s23, %s30
      %p331 = scmp.eq.s32.totalorder %s330, 0
      %s333 = sadd.s32 %s332, 1
      %s334 = scalar_select %p331, %s332, %s333
      %p337 = pneg %p331
      %p338 = scmp.eq.s32.totalorder %s23, 1
      %p339 = por %p337, %p338
      %p340 = scmp.ne.s32.totalorder %s332, %s335
      %p341 = scmp.eq.s32.totalorder %s23, 0
      %p342 = por %p340, %p341
      %p343 = scmp.ne.s32.totalorder %s332, %s335
      %p344 = scmp.eq.s32.totalorder %s28, 1
      %p345 = por %p343, %p344
      %p346 = scmp.ne.s32.totalorder %s335, %s336
      %p347 = scmp.eq.s32.totalorder %s28, 0
      %p348 = por %p346, %p347
      %p349 = scmp.ne.s32.totalorder %s335, %s336
      %p350 = scmp.eq.s32.totalorder %s29, 1
      %p351 = por %p349, %p350
      %p353 = scmp.ne.s32.totalorder %s336, %s352
      %p354 = scmp.eq.s32.totalorder %s29, 0
      %p355 = por %p353, %p354
      %p356 = scmp.le.s32.totalorder 1, %s23
      %p357 = scmp.lt.s32.totalorder %s23, 3
      %p358 = pnand %p356, %p357
      %p359 = pneg %p358
      // Predicated region
      $region9: #{token_embed.1} parent=5 // pred_check
        _
      $region10: #{token_embed.1} parent=5 // pred_check_branch
        %361 = sbr.rel (%p358) target = $region12
      $region11: #{token_embed.1} parent=5 // pred_region
        %s362 = ssub.s32 %s23, 1
        // Predicated region
        $region13: #{token_embed.1} parent=11 // pred_check
          %p363 = pneg %p70
        $region14: #{token_embed.1} parent=11 // pred_check_branch
          %365 = sbr.rel (%p363) target = $region16
        $region15: #{token_embed.1} parent=11 // pred_region
          _
        $region16: #{token_embed.1} parent=11 // pred_fallthru
          _
        // Predicated region
        $region17: #{token_embed.1} parent=11 // pred_check
          %p366 = pneg %p91
        $region18: #{token_embed.1} parent=11 // pred_check_branch
          %368 = sbr.rel (%p366) target = $region20
        $region19: #{token_embed.1} parent=11 // pred_region
          _
        $region20: #{token_embed.1} parent=11 // pred_fallthru
          _
        // Predicated region
        $region21: #{token_embed.1} parent=11 // pred_check
          %p369 = pneg %p112
        $region22: #{token_embed.1} parent=11 // pred_check_branch
          %371 = sbr.rel (%p369) target = $region24
        $region23: #{token_embed.1} parent=11 // pred_region
          _
        $region24: #{token_embed.1} parent=11 // pred_fallthru
          _
        // Predicated region
        $region25: #{token_embed.1} parent=11 // pred_check
          %p372 = pneg %p133
        $region26: #{token_embed.1} parent=11 // pred_check_branch
          %374 = sbr.rel (%p372) target = $region28
        $region27: #{token_embed.1} parent=11 // pred_region
          _
        $region28: #{token_embed.1} parent=11 // pred_fallthru
          _
        // Predicated region
        $region29: #{token_embed.1} parent=11 // pred_check
          %p375 = pneg %p154
        $region30: #{token_embed.1} parent=11 // pred_check_branch
          %377 = sbr.rel (%p375) target = $region32
        $region31: #{token_embed.1} parent=11 // pred_region
          _
        $region32: #{token_embed.1} parent=11 // pred_fallthru
          _
        // Predicated region
        $region33: #{token_embed.1} parent=11 // pred_check
          %p378 = pneg %p175
        $region34: #{token_embed.1} parent=11 // pred_check_branch
          %380 = sbr.rel (%p378) target = $region36
        $region35: #{token_embed.1} parent=11 // pred_region
          _
        $region36: #{token_embed.1} parent=11 // pred_fallthru
          _
        // Predicated region
        $region37: #{token_embed.1} parent=11 // pred_check
          %p381 = pneg %p196
        $region38: #{token_embed.1} parent=11 // pred_check_branch
          %383 = sbr.rel (%p381) target = $region40
        $region39: #{token_embed.1} parent=11 // pred_region
          _
        $region40: #{token_embed.1} parent=11 // pred_fallthru
          _
        // Predicated region
        $region41: #{token_embed.1} parent=11 // pred_check
          %p384 = pneg %p217
        $region42: #{token_embed.1} parent=11 // pred_check_branch
          %386 = sbr.rel (%p384) target = $region44
        $region43: #{token_embed.1} parent=11 // pred_region
          _
        $region44: #{token_embed.1} parent=11 // pred_fallthru
          _
        // Predicated region
        $region45: #{token_embed.1} parent=11 // pred_check
          %p387 = pneg %p238
        $region46: #{token_embed.1} parent=11 // pred_check_branch
          %389 = sbr.rel (%p387) target = $region48
        $region47: #{token_embed.1} parent=11 // pred_region
          _
        $region48: #{token_embed.1} parent=11 // pred_fallthru
          _
        // Predicated region
        $region49: #{token_embed.1} parent=11 // pred_check
          %p390 = pneg %p259
        $region50: #{token_embed.1} parent=11 // pred_check_branch
          %392 = sbr.rel (%p390) target = $region52
        $region51: #{token_embed.1} parent=11 // pred_region
          _
        $region52: #{token_embed.1} parent=11 // pred_fallthru
          _
        // Predicated region
        $region53: #{token_embed.1} parent=11 // pred_check
          %p393 = pneg %p280
        $region54: #{token_embed.1} parent=11 // pred_check_branch
          %395 = sbr.rel (%p393) target = $region56
        $region55: #{token_embed.1} parent=11 // pred_region
          _
        $region56: #{token_embed.1} parent=11 // pred_fallthru
          _
        // Predicated region
        $region57: #{token_embed.1} parent=11 // pred_check
          %p396 = pneg %p301
        $region58: #{token_embed.1} parent=11 // pred_check_branch
          %398 = sbr.rel (%p396) target = $region60
        $region59: #{token_embed.1} parent=11 // pred_region
          _
        $region60: #{token_embed.1} parent=11 // pred_fallthru
          _
        // Predicated region
        $region61: #{token_embed.1} parent=11 // pred_check
          %p399 = pneg %p322
        $region62: #{token_embed.1} parent=11 // pred_check_branch
          %401 = sbr.rel (%p399) target = $region64
        $region63: #{token_embed.1} parent=11 // pred_region
          _
        $region64: #{token_embed.1} parent=11 // pred_fallthru
          _
      $region12: #{token_embed.1} parent=5 // pred_fallthru
        _
      %p402 = scmp.lt.s32.totalorder %s23, 2
      // Predicated region
      $region65: #{token_embed.1} parent=5 // pred_check
        %p403 = pneg %p402
      $region66: #{token_embed.1} parent=5 // pred_check_branch
        %405 = sbr.rel (%p403) target = $region68
      $region67: #{token_embed.1} parent=5 // pred_region
        // Predicated region
        $region69: #{token_embed.1} parent=67 // pred_check
          %p406 = pneg %p43
        $region70: #{token_embed.1} parent=67 // pred_check_branch
          %408 = sbr.rel (%p406) target = $region72
        $region71: #{token_embed.1} parent=67 // pred_region
          %p409 = scmp.lt.s32.totalorder %s23, 1
          %s410 = scalar_select %p409, %s23, 1
          %s411 = smul.addr %s410, 64
          %s412 = smul.addr %s411, 8
          %s413 = scalar_lea.vmem %s0, %s412
        $region72: #{token_embed.1} parent=67 // pred_fallthru
          _
      $region68: #{token_embed.1} parent=5 // pred_fallthru
        _
      %p414 = scmp.le.s32.totalorder 1, %s23
      %p415 = scmp.lt.s32.totalorder %s23, 3
      %p416 = pnand %p414, %p415
      %p417 = pneg %p416
      // Predicated region
      $region73: #{token_embed.1} parent=5 // pred_check
        _
      $region74: #{token_embed.1} parent=5 // pred_check_branch
        %419 = sbr.rel (%p416) target = $region76
      $region75: #{token_embed.1} parent=5 // pred_region
        %s420 = ssub.s32 %s23, 1
        %p421 = scmp.lt.s32.totalorder %s28, 1
        %s422 = scalar_select %p421, %s28, 1
        %s423 = smul.addr %s422, 64
        %s424 = smul.addr %s423, 8
        %s425 = scalar_lea.vmem %s0, %s424
        %p426 = pneg %p49
        %p427 = pneg %p46
        %p428 = pneg %p70
        %p429 = pneg %p67
        %p430 = pneg %p91
        %p431 = pneg %p88
        %p432 = pneg %p112
        %p433 = pneg %p109
        %p434 = pneg %p133
        %p435 = pneg %p130
        %p436 = pneg %p154
        %p437 = pneg %p151
        %p438 = pneg %p175
        %p439 = pneg %p172
        %p440 = pneg %p196
        %p441 = pneg %p193
        %p442 = pneg %p217
        %p443 = pneg %p214
        %p444 = pneg %p238
        %p445 = pneg %p235
        %p446 = pneg %p259
        %p447 = pneg %p256
        %p448 = pneg %p280
        %p449 = pneg %p277
        %p450 = pneg %p301
        %p451 = pneg %p298
        %p452 = pneg %p322
        %p453 = pneg %p319
        %p454 = pneg %p348
        %p455 = pneg %p345
        %s456 = sand.u32 %s335, 1
        %s457 = scalar_lea.sflag [#allocation3], %s456
        %s458 = sand.u32 %s335, 1
        %s459 = smul.addr %s458, 32
        %s460 = scalar_lea.vmem [#allocation2], %s459
        %p461 = scmp.lt.s32.totalorder %s28, 1
        %s462 = scalar_select %p461, %s28, 1
        %s463 = smul.addr %s462, 64
        %s464 = smul.addr %s463, 8
        %s465 = scalar_lea.vmem %s0, %s464
        %v467 = vld [vmem:[%s465] sm:$0xff]
        %v468 = vld [vmem:[%s465 + $0x8] sm:$0xff]
        %v469 = vld [vmem:[%s465 + $0x10] sm:$0xff]
        %v470 = vld [vmem:[%s465 + $0x18] sm:$0xff]
        %v471 = vld [vmem:[%s465 + $0x20] sm:$0xff]
        %v472 = vld [vmem:[%s465 + $0x28] sm:$0xff]
        %v473 = vld [vmem:[%s465 + $0x30] sm:$0xff]
        %v474 = vld [vmem:[%s465 + $0x38] sm:$0xff]
        %v475 = vld [vmem:[%s465 + $0x40] sm:$0xff]
        %v476 = vld [vmem:[%s465 + $0x48] sm:$0xff]
        %v477 = vld [vmem:[%s465 + $0x50] sm:$0xff]
        %v478 = vld [vmem:[%s465 + $0x58] sm:$0xff]
        %v479 = vld [vmem:[%s465 + $0x60] sm:$0xff]
        %v480 = vld [vmem:[%s465 + $0x68] sm:$0xff]
        %v481 = vld [vmem:[%s465 + $0x70] sm:$0xff]
        %v482 = vld [vmem:[%s465 + $0x78] sm:$0xff]
        %v483 = vld [vmem:[%s465 + $0x80] sm:$0xff]
        %v484 = vld [vmem:[%s465 + $0x88] sm:$0xff]
        %v485 = vld [vmem:[%s465 + $0x90] sm:$0xff]
        %v486 = vld [vmem:[%s465 + $0x98] sm:$0xff]
        %v487 = vld [vmem:[%s465 + $0xa0] sm:$0xff]
        %v488 = vld [vmem:[%s465 + $0xa8] sm:$0xff]
        %v489 = vld [vmem:[%s465 + $0xb0] sm:$0xff]
        %v490 = vld [vmem:[%s465 + $0xb8] sm:$0xff]
        %v491 = vld [vmem:[%s465 + $0xc0] sm:$0xff]
        %v492 = vld [vmem:[%s465 + $0xc8] sm:$0xff]
        %v493 = vld [vmem:[%s465 + $0xd0] sm:$0xff]
        %v494 = vld [vmem:[%s465 + $0xd8] sm:$0xff]
        %v495 = vld [vmem:[%s465 + $0xe0] sm:$0xff]
        %v496 = vld [vmem:[%s465 + $0xe8] sm:$0xff]
        %v497 = vld [vmem:[%s465 + $0xf0] sm:$0xff]
        %v498 = vld [vmem:[%s465 + $0xf8] sm:$0xff]
        %v499 = vld [vmem:[%s465 + $0x100] sm:$0xff]
        %v500 = vld [vmem:[%s465 + $0x108] sm:$0xff]
        %v501 = vld [vmem:[%s465 + $0x110] sm:$0xff]
        %v502 = vld [vmem:[%s465 + $0x118] sm:$0xff]
        %v503 = vld [vmem:[%s465 + $0x120] sm:$0xff]
        %v504 = vld [vmem:[%s465 + $0x128] sm:$0xff]
        %v505 = vld [vmem:[%s465 + $0x130] sm:$0xff]
        %v506 = vld [vmem:[%s465 + $0x138] sm:$0xff]
        %v507 = vld [vmem:[%s465 + $0x140] sm:$0xff]
        %v508 = vld [vmem:[%s465 + $0x148] sm:$0xff]
        %v509 = vld [vmem:[%s465 + $0x150] sm:$0xff]
        %v510 = vld [vmem:[%s465 + $0x158] sm:$0xff]
        %v511 = vld [vmem:[%s465 + $0x160] sm:$0xff]
        %v512 = vld [vmem:[%s465 + $0x168] sm:$0xff]
        %v513 = vld [vmem:[%s465 + $0x170] sm:$0xff]
        %v514 = vld [vmem:[%s465 + $0x178] sm:$0xff]
        %v515 = vld [vmem:[%s465 + $0x180] sm:$0xff]
        %v516 = vld [vmem:[%s465 + $0x188] sm:$0xff]
        %v517 = vld [vmem:[%s465 + $0x190] sm:$0xff]
        %v518 = vld [vmem:[%s465 + $0x198] sm:$0xff]
        %v519 = vld [vmem:[%s465 + $0x1a0] sm:$0xff]
        %v520 = vld [vmem:[%s465 + $0x1a8] sm:$0xff]
        %v521 = vld [vmem:[%s465 + $0x1b0] sm:$0xff]
        %v522 = vld [vmem:[%s465 + $0x1b8] sm:$0xff]
        %v523 = vld [vmem:[%s465 + $0x1c0] sm:$0xff]
        %v524 = vld [vmem:[%s465 + $0x1c8] sm:$0xff]
        %v525 = vld [vmem:[%s465 + $0x1d0] sm:$0xff]
        %v526 = vld [vmem:[%s465 + $0x1d8] sm:$0xff]
        %v527 = vld [vmem:[%s465 + $0x1e0] sm:$0xff]
        %v528 = vld [vmem:[%s465 + $0x1e8] sm:$0xff]
        %v529 = vld [vmem:[%s465 + $0x1f0] sm:$0xff]
        %v530 = vld [vmem:[%s465 + $0x1f8] sm:$0xff]
        %v531 = vld [vmem:[%s1] sm:$0x3]
        %v532 = vunpack.c.l.bf16 %v531
        %v533 = vld [vmem:[%s2] sm:$0x1]
        %535 = vset.pattern.permute.xlu0 0
        %536 = vperm.xlu0 %535, %v467
        %v537 = vpop.permute.xlu0 %536
        %540 = vset.pattern.permute.xlu0 0
        %541 = vperm.xlu0 %540, %v468
        %v542 = vpop.permute.xlu0 %541
        %545 = vset.pattern.permute.xlu0 0
        %546 = vperm.xlu0 %545, %v469
        %v547 = vpop.permute.xlu0 %546
        %550 = vset.pattern.permute.xlu0 0
        %551 = vperm.xlu0 %550, %v470
        %v552 = vpop.permute.xlu0 %551
        %555 = vset.pattern.permute.xlu0 0
        %556 = vperm.xlu0 %555, %v471
        %v557 = vpop.permute.xlu0 %556
        %560 = vset.pattern.permute.xlu0 0
        %561 = vperm.xlu0 %560, %v472
        %v562 = vpop.permute.xlu0 %561
        %565 = vset.pattern.permute.xlu0 0
        %566 = vperm.xlu0 %565, %v473
        %v567 = vpop.permute.xlu0 %566
        %570 = vset.pattern.permute.xlu0 0
        %571 = vperm.xlu0 %570, %v474
        %v572 = vpop.permute.xlu0 %571
        %575 = vset.pattern.permute.xlu0 0
        %576 = vperm.xlu0 %575, %v475
        %v577 = vpop.permute.xlu0 %576
        %580 = vset.pattern.permute.xlu0 0
        %581 = vperm.xlu0 %580, %v476
        %v582 = vpop.permute.xlu0 %581
        %585 = vset.pattern.permute.xlu0 0
        %586 = vperm.xlu0 %585, %v477
        %v587 = vpop.permute.xlu0 %586
        %590 = vset.pattern.permute.xlu0 0
        %591 = vperm.xlu0 %590, %v478
        %v592 = vpop.permute.xlu0 %591
        %595 = vset.pattern.permute.xlu0 0
        %596 = vperm.xlu0 %595, %v479
        %v597 = vpop.permute.xlu0 %596
        %600 = vset.pattern.permute.xlu0 0
        %601 = vperm.xlu0 %600, %v480
        %v602 = vpop.permute.xlu0 %601
        %605 = vset.pattern.permute.xlu0 0
        %606 = vperm.xlu0 %605, %v481
        %v607 = vpop.permute.xlu0 %606
        %610 = vset.pattern.permute.xlu0 0
        %611 = vperm.xlu0 %610, %v482
        %v612 = vpop.permute.xlu0 %611
        %615 = vset.pattern.permute.xlu0 0
        %616 = vperm.xlu0 %615, %v483
        %v617 = vpop.permute.xlu0 %616
        %620 = vset.pattern.permute.xlu0 0
        %621 = vperm.xlu0 %620, %v484
        %v622 = vpop.permute.xlu0 %621
        %625 = vset.pattern.permute.xlu0 0
        %626 = vperm.xlu0 %625, %v485
        %v627 = vpop.permute.xlu0 %626
        %630 = vset.pattern.permute.xlu0 0
        %631 = vperm.xlu0 %630, %v486
        %v632 = vpop.permute.xlu0 %631
        %635 = vset.pattern.permute.xlu0 0
        %636 = vperm.xlu0 %635, %v487
        %v637 = vpop.permute.xlu0 %636
        %640 = vset.pattern.permute.xlu0 0
        %641 = vperm.xlu0 %640, %v488
        %v642 = vpop.permute.xlu0 %641
        %645 = vset.pattern.permute.xlu0 0
        %646 = vperm.xlu0 %645, %v489
        %v647 = vpop.permute.xlu0 %646
        %650 = vset.pattern.permute.xlu0 0
        %651 = vperm.xlu0 %650, %v490
        %v652 = vpop.permute.xlu0 %651
        %655 = vset.pattern.permute.xlu0 0
        %656 = vperm.xlu0 %655, %v491
        %v657 = vpop.permute.xlu0 %656
        %660 = vset.pattern.permute.xlu0 0
        %661 = vperm.xlu0 %660, %v492
        %v662 = vpop.permute.xlu0 %661
        %665 = vset.pattern.permute.xlu0 0
        %666 = vperm.xlu0 %665, %v493
        %v667 = vpop.permute.xlu0 %666
        %670 = vset.pattern.permute.xlu0 0
        %671 = vperm.xlu0 %670, %v494
        %v672 = vpop.permute.xlu0 %671
        %675 = vset.pattern.permute.xlu0 0
        %676 = vperm.xlu0 %675, %v495
        %v677 = vpop.permute.xlu0 %676
        %680 = vset.pattern.permute.xlu0 0
        %681 = vperm.xlu0 %680, %v496
        %v682 = vpop.permute.xlu0 %681
        %685 = vset.pattern.permute.xlu0 0
        %686 = vperm.xlu0 %685, %v497
        %v687 = vpop.permute.xlu0 %686
        %690 = vset.pattern.permute.xlu0 0
        %691 = vperm.xlu0 %690, %v498
        %v692 = vpop.permute.xlu0 %691
        %695 = vset.pattern.permute.xlu0 0
        %696 = vperm.xlu0 %695, %v499
        %v697 = vpop.permute.xlu0 %696
        %700 = vset.pattern.permute.xlu0 0
        %701 = vperm.xlu0 %700, %v500
        %v702 = vpop.permute.xlu0 %701
        %705 = vset.pattern.permute.xlu0 0
        %706 = vperm.xlu0 %705, %v501
        %v707 = vpop.permute.xlu0 %706
        %710 = vset.pattern.permute.xlu0 0
        %711 = vperm.xlu0 %710, %v502
        %v712 = vpop.permute.xlu0 %711
        %715 = vset.pattern.permute.xlu0 0
        %716 = vperm.xlu0 %715, %v503
        %v717 = vpop.permute.xlu0 %716
        %720 = vset.pattern.permute.xlu0 0
        %721 = vperm.xlu0 %720, %v504
        %v722 = vpop.permute.xlu0 %721
        %725 = vset.pattern.permute.xlu0 0
        %726 = vperm.xlu0 %725, %v505
        %v727 = vpop.permute.xlu0 %726
        %730 = vset.pattern.permute.xlu0 0
        %731 = vperm.xlu0 %730, %v506
        %v732 = vpop.permute.xlu0 %731
        %735 = vset.pattern.permute.xlu0 0
        %736 = vperm.xlu0 %735, %v507
        %v737 = vpop.permute.xlu0 %736
        %740 = vset.pattern.permute.xlu0 0
        %741 = vperm.xlu0 %740, %v508
        %v742 = vpop.permute.xlu0 %741
        %745 = vset.pattern.permute.xlu0 0
        %746 = vperm.xlu0 %745, %v509
        %v747 = vpop.permute.xlu0 %746
        %750 = vset.pattern.permute.xlu0 0
        %751 = vperm.xlu0 %750, %v510
        %v752 = vpop.permute.xlu0 %751
        %755 = vset.pattern.permute.xlu0 0
        %756 = vperm.xlu0 %755, %v511
        %v757 = vpop.permute.xlu0 %756
        %760 = vset.pattern.permute.xlu0 0
        %761 = vperm.xlu0 %760, %v512
        %v762 = vpop.permute.xlu0 %761
        %765 = vset.pattern.permute.xlu0 0
        %766 = vperm.xlu0 %765, %v513
        %v767 = vpop.permute.xlu0 %766
        %770 = vset.pattern.permute.xlu0 0
        %771 = vperm.xlu0 %770, %v514
        %v772 = vpop.permute.xlu0 %771
        %775 = vset.pattern.permute.xlu0 0
        %776 = vperm.xlu0 %775, %v515
        %v777 = vpop.permute.xlu0 %776
        %780 = vset.pattern.permute.xlu0 0
        %781 = vperm.xlu0 %780, %v516
        %v782 = vpop.permute.xlu0 %781
        %785 = vset.pattern.permute.xlu0 0
        %786 = vperm.xlu0 %785, %v517
        %v787 = vpop.permute.xlu0 %786
        %790 = vset.pattern.permute.xlu0 0
        %791 = vperm.xlu0 %790, %v518
        %v792 = vpop.permute.xlu0 %791
        %795 = vset.pattern.permute.xlu0 0
        %796 = vperm.xlu0 %795, %v519
        %v797 = vpop.permute.xlu0 %796
        %800 = vset.pattern.permute.xlu0 0
        %801 = vperm.xlu0 %800, %v520
        %v802 = vpop.permute.xlu0 %801
        %805 = vset.pattern.permute.xlu0 0
        %806 = vperm.xlu0 %805, %v521
        %v807 = vpop.permute.xlu0 %806
        %810 = vset.pattern.permute.xlu0 0
        %811 = vperm.xlu0 %810, %v522
        %v812 = vpop.permute.xlu0 %811
        %815 = vset.pattern.permute.xlu0 0
        %816 = vperm.xlu0 %815, %v523
        %v817 = vpop.permute.xlu0 %816
        %820 = vset.pattern.permute.xlu0 0
        %821 = vperm.xlu0 %820, %v524
        %v822 = vpop.permute.xlu0 %821
        %825 = vset.pattern.permute.xlu0 0
        %826 = vperm.xlu0 %825, %v525
        %v827 = vpop.permute.xlu0 %826
        %830 = vset.pattern.permute.xlu0 0
        %831 = vperm.xlu0 %830, %v526
        %v832 = vpop.permute.xlu0 %831
        %835 = vset.pattern.permute.xlu0 0
        %836 = vperm.xlu0 %835, %v527
        %v837 = vpop.permute.xlu0 %836
        %840 = vset.pattern.permute.xlu0 0
        %841 = vperm.xlu0 %840, %v528
        %v842 = vpop.permute.xlu0 %841
        %845 = vset.pattern.permute.xlu0 0
        %846 = vperm.xlu0 %845, %v529
        %v847 = vpop.permute.xlu0 %846
        %850 = vset.pattern.permute.xlu0 0
        %851 = vperm.xlu0 %850, %v530
        %v852 = vpop.permute.xlu0 %851
        %v854 = vperm.slane %v532, 0
        %v855 = vmul.f32 %v537, %v854
        %v856 = vmul.f32 %v542, %v854
        %v857 = vmul.f32 %v547, %v854
        %v858 = vmul.f32 %v552, %v854
        %v859 = vmul.f32 %v557, %v854
        %v860 = vmul.f32 %v562, %v854
        %v861 = vmul.f32 %v567, %v854
        %v862 = vmul.f32 %v572, %v854
        %v863 = vmul.f32 %v577, %v854
        %v864 = vmul.f32 %v582, %v854
        %v865 = vmul.f32 %v587, %v854
        %v866 = vmul.f32 %v592, %v854
        %v867 = vmul.f32 %v597, %v854
        %v868 = vmul.f32 %v602, %v854
        %v869 = vmul.f32 %v607, %v854
        %v870 = vmul.f32 %v612, %v854
        %v871 = vmul.f32 %v617, %v854
        %v872 = vmul.f32 %v622, %v854
        %v873 = vmul.f32 %v627, %v854
        %v874 = vmul.f32 %v632, %v854
        %v875 = vmul.f32 %v637, %v854
        %v876 = vmul.f32 %v642, %v854
        %v877 = vmul.f32 %v647, %v854
        %v878 = vmul.f32 %v652, %v854
        %v879 = vmul.f32 %v657, %v854
        %v880 = vmul.f32 %v662, %v854
        %v881 = vmul.f32 %v667, %v854
        %v882 = vmul.f32 %v672, %v854
        %v883 = vmul.f32 %v677, %v854
        %v884 = vmul.f32 %v682, %v854
        %v885 = vmul.f32 %v687, %v854
        %v886 = vmul.f32 %v692, %v854
        %v887 = vmul.f32 %v697, %v854
        %v888 = vmul.f32 %v702, %v854
        %v889 = vmul.f32 %v707, %v854
        %v890 = vmul.f32 %v712, %v854
        %v891 = vmul.f32 %v717, %v854
        %v892 = vmul.f32 %v722, %v854
        %v893 = vmul.f32 %v727, %v854
        %v894 = vmul.f32 %v732, %v854
        %v895 = vmul.f32 %v737, %v854
        %v896 = vmul.f32 %v742, %v854
        %v897 = vmul.f32 %v747, %v854
        %v898 = vmul.f32 %v752, %v854
        %v899 = vmul.f32 %v757, %v854
        %v900 = vmul.f32 %v762, %v854
        %v901 = vmul.f32 %v767, %v854
        %v902 = vmul.f32 %v772, %v854
        %v903 = vmul.f32 %v777, %v854
        %v904 = vmul.f32 %v782, %v854
        %v905 = vmul.f32 %v787, %v854
        %v906 = vmul.f32 %v792, %v854
        %v907 = vmul.f32 %v797, %v854
        %v908 = vmul.f32 %v802, %v854
        %v909 = vmul.f32 %v807, %v854
        %v910 = vmul.f32 %v812, %v854
        %v911 = vmul.f32 %v817, %v854
        %v912 = vmul.f32 %v822, %v854
        %v913 = vmul.f32 %v827, %v854
        %v914 = vmul.f32 %v832, %v854
        %v915 = vmul.f32 %v837, %v854
        %v916 = vmul.f32 %v842, %v854
        %v917 = vmul.f32 %v847, %v854
        %v918 = vmul.f32 %v852, %v854
        %v920 = vperm.slane %v533, 0
        %v922 = vadd.f32 %v920, %v855
        %v923 = vadd.f32 %v920, %v856
        %v924 = vadd.f32 %v920, %v857
        %v925 = vadd.f32 %v920, %v858
        %v926 = vadd.f32 %v920, %v859
        %v927 = vadd.f32 %v920, %v860
        %v928 = vadd.f32 %v920, %v861
        %v929 = vadd.f32 %v920, %v862
        %v930 = vadd.f32 %v920, %v863
        %v931 = vadd.f32 %v920, %v864
        %v932 = vadd.f32 %v920, %v865
        %v933 = vadd.f32 %v920, %v866
        %v934 = vadd.f32 %v920, %v867
        %v935 = vadd.f32 %v920, %v868
        %v936 = vadd.f32 %v920, %v869
        %v937 = vadd.f32 %v920, %v870
        %v938 = vadd.f32 %v920, %v871
        %v939 = vadd.f32 %v920, %v872
        %v940 = vadd.f32 %v920, %v873
        %v941 = vadd.f32 %v920, %v874
        %v942 = vadd.f32 %v920, %v875
        %v943 = vadd.f32 %v920, %v876
        %v944 = vadd.f32 %v920, %v877
        %v945 = vadd.f32 %v920, %v878
        %v946 = vadd.f32 %v920, %v879
        %v947 = vadd.f32 %v920, %v880
        %v948 = vadd.f32 %v920, %v881
        %v949 = vadd.f32 %v920, %v882
        %v950 = vadd.f32 %v920, %v883
        %v951 = vadd.f32 %v920, %v884
        %v952 = vadd.f32 %v920, %v885
        %v953 = vadd.f32 %v920, %v886
        %v954 = vadd.f32 %v920, %v887
        %v955 = vadd.f32 %v920, %v888
        %v956 = vadd.f32 %v920, %v889
        %v957 = vadd.f32 %v920, %v890
        %v958 = vadd.f32 %v920, %v891
        %v959 = vadd.f32 %v920, %v892
        %v960 = vadd.f32 %v920, %v893
        %v961 = vadd.f32 %v920, %v894
        %v962 = vadd.f32 %v920, %v895
        %v963 = vadd.f32 %v920, %v896
        %v964 = vadd.f32 %v920, %v897
        %v965 = vadd.f32 %v920, %v898
        %v966 = vadd.f32 %v920, %v899
        %v967 = vadd.f32 %v920, %v900
        %v968 = vadd.f32 %v920, %v901
        %v969 = vadd.f32 %v920, %v902
        %v970 = vadd.f32 %v920, %v903
        %v971 = vadd.f32 %v920, %v904
        %v972 = vadd.f32 %v920, %v905
        %v973 = vadd.f32 %v920, %v906
        %v974 = vadd.f32 %v920, %v907
        %v975 = vadd.f32 %v920, %v908
        %v976 = vadd.f32 %v920, %v909
        %v977 = vadd.f32 %v920, %v910
        %v978 = vadd.f32 %v920, %v911
        %v979 = vadd.f32 %v920, %v912
        %v980 = vadd.f32 %v920, %v913
        %v981 = vadd.f32 %v920, %v914
        %v982 = vadd.f32 %v920, %v915
        %v983 = vadd.f32 %v920, %v916
        %v984 = vadd.f32 %v920, %v917
        %v985 = vadd.f32 %v920, %v918
        %986 = vset.pattern.permute.xlu0 1
        %987 = vperm.xlu0 %986, %v467
        %v988 = vpop.permute.xlu0 %987
        %990 = vset.pattern.permute.xlu0 1
        %991 = vperm.xlu0 %990, %v468
        %v992 = vpop.permute.xlu0 %991
        %994 = vset.pattern.permute.xlu0 1
        %995 = vperm.xlu0 %994, %v469
        %v996 = vpop.permute.xlu0 %995
        %998 = vset.pattern.permute.xlu0 1
        %999 = vperm.xlu0 %998, %v470
        %v1000 = vpop.permute.xlu0 %999
        %1002 = vset.pattern.permute.xlu0 1
        %1003 = vperm.xlu0 %1002, %v471
        %v1004 = vpop.permute.xlu0 %1003
        %1006 = vset.pattern.permute.xlu0 1
        %1007 = vperm.xlu0 %1006, %v472
        %v1008 = vpop.permute.xlu0 %1007
        %1010 = vset.pattern.permute.xlu0 1
        %1011 = vperm.xlu0 %1010, %v473
        %v1012 = vpop.permute.xlu0 %1011
        %1014 = vset.pattern.permute.xlu0 1
        %1015 = vperm.xlu0 %1014, %v474
        %v1016 = vpop.permute.xlu0 %1015
        %1018 = vset.pattern.permute.xlu0 1
        %1019 = vperm.xlu0 %1018, %v475
        %v1020 = vpop.permute.xlu0 %1019
        %1022 = vset.pattern.permute.xlu0 1
        %1023 = vperm.xlu0 %1022, %v476
        %v1024 = vpop.permute.xlu0 %1023
        %1026 = vset.pattern.permute.xlu0 1
        %1027 = vperm.xlu0 %1026, %v477
        %v1028 = vpop.permute.xlu0 %1027
        %1030 = vset.pattern.permute.xlu0 1
        %1031 = vperm.xlu0 %1030, %v478
        %v1032 = vpop.permute.xlu0 %1031
        %1034 = vset.pattern.permute.xlu0 1
        %1035 = vperm.xlu0 %1034, %v479
        %v1036 = vpop.permute.xlu0 %1035
        %1038 = vset.pattern.permute.xlu0 1
        %1039 = vperm.xlu0 %1038, %v480
        %v1040 = vpop.permute.xlu0 %1039
        %1042 = vset.pattern.permute.xlu0 1
        %1043 = vperm.xlu0 %1042, %v481
        %v1044 = vpop.permute.xlu0 %1043
        %1046 = vset.pattern.permute.xlu0 1
        %1047 = vperm.xlu0 %1046, %v482
        %v1048 = vpop.permute.xlu0 %1047
        %1050 = vset.pattern.permute.xlu0 1
        %1051 = vperm.xlu0 %1050, %v483
        %v1052 = vpop.permute.xlu0 %1051
        %1054 = vset.pattern.permute.xlu0 1
        %1055 = vperm.xlu0 %1054, %v484
        %v1056 = vpop.permute.xlu0 %1055
        %1058 = vset.pattern.permute.xlu0 1
        %1059 = vperm.xlu0 %1058, %v485
        %v1060 = vpop.permute.xlu0 %1059
        %1062 = vset.pattern.permute.xlu0 1
        %1063 = vperm.xlu0 %1062, %v486
        %v1064 = vpop.permute.xlu0 %1063
        %1066 = vset.pattern.permute.xlu0 1
        %1067 = vperm.xlu0 %1066, %v487
        %v1068 = vpop.permute.xlu0 %1067
        %1070 = vset.pattern.permute.xlu0 1
        %1071 = vperm.xlu0 %1070, %v488
        %v1072 = vpop.permute.xlu0 %1071
        %1074 = vset.pattern.permute.xlu0 1
        %1075 = vperm.xlu0 %1074, %v489
        %v1076 = vpop.permute.xlu0 %1075
        %1078 = vset.pattern.permute.xlu0 1
        %1079 = vperm.xlu0 %1078, %v490
        %v1080 = vpop.permute.xlu0 %1079
        %1082 = vset.pattern.permute.xlu0 1
        %1083 = vperm.xlu0 %1082, %v491
        %v1084 = vpop.permute.xlu0 %1083
        %1086 = vset.pattern.permute.xlu0 1
        %1087 = vperm.xlu0 %1086, %v492
        %v1088 = vpop.permute.xlu0 %1087
        %1090 = vset.pattern.permute.xlu0 1
        %1091 = vperm.xlu0 %1090, %v493
        %v1092 = vpop.permute.xlu0 %1091
        %1094 = vset.pattern.permute.xlu0 1
        %1095 = vperm.xlu0 %1094, %v494
        %v1096 = vpop.permute.xlu0 %1095
        %1098 = vset.pattern.permute.xlu0 1
        %1099 = vperm.xlu0 %1098, %v495
        %v1100 = vpop.permute.xlu0 %1099
        %1102 = vset.pattern.permute.xlu0 1
        %1103 = vperm.xlu0 %1102, %v496
        %v1104 = vpop.permute.xlu0 %1103
        %1106 = vset.pattern.permute.xlu0 1
        %1107 = vperm.xlu0 %1106, %v497
        %v1108 = vpop.permute.xlu0 %1107
        %1110 = vset.pattern.permute.xlu0 1
        %1111 = vperm.xlu0 %1110, %v498
        %v1112 = vpop.permute.xlu0 %1111
        %1114 = vset.pattern.permute.xlu0 1
        %1115 = vperm.xlu0 %1114, %v499
        %v1116 = vpop.permute.xlu0 %1115
        %1118 = vset.pattern.permute.xlu0 1
        %1119 = vperm.xlu0 %1118, %v500
        %v1120 = vpop.permute.xlu0 %1119
        %1122 = vset.pattern.permute.xlu0 1
        %1123 = vperm.xlu0 %1122, %v501
        %v1124 = vpop.permute.xlu0 %1123
        %1126 = vset.pattern.permute.xlu0 1
        %1127 = vperm.xlu0 %1126, %v502
        %v1128 = vpop.permute.xlu0 %1127
        %1130 = vset.pattern.permute.xlu0 1
        %1131 = vperm.xlu0 %1130, %v503
        %v1132 = vpop.permute.xlu0 %1131
        %1134 = vset.pattern.permute.xlu0 1
        %1135 = vperm.xlu0 %1134, %v504
        %v1136 = vpop.permute.xlu0 %1135
        %1138 = vset.pattern.permute.xlu0 1
        %1139 = vperm.xlu0 %1138, %v505
        %v1140 = vpop.permute.xlu0 %1139
        %1142 = vset.pattern.permute.xlu0 1
        %1143 = vperm.xlu0 %1142, %v506
        %v1144 = vpop.permute.xlu0 %1143
        %1146 = vset.pattern.permute.xlu0 1
        %1147 = vperm.xlu0 %1146, %v507
        %v1148 = vpop.permute.xlu0 %1147
        %1150 = vset.pattern.permute.xlu0 1
        %1151 = vperm.xlu0 %1150, %v508
        %v1152 = vpop.permute.xlu0 %1151
        %1154 = vset.pattern.permute.xlu0 1
        %1155 = vperm.xlu0 %1154, %v509
        %v1156 = vpop.permute.xlu0 %1155
        %1158 = vset.pattern.permute.xlu0 1
        %1159 = vperm.xlu0 %1158, %v510
        %v1160 = vpop.permute.xlu0 %1159
        %1162 = vset.pattern.permute.xlu0 1
        %1163 = vperm.xlu0 %1162, %v511
        %v1164 = vpop.permute.xlu0 %1163
        %1166 = vset.pattern.permute.xlu0 1
        %1167 = vperm.xlu0 %1166, %v512
        %v1168 = vpop.permute.xlu0 %1167
        %1170 = vset.pattern.permute.xlu0 1
        %1171 = vperm.xlu0 %1170, %v513
        %v1172 = vpop.permute.xlu0 %1171
        %1174 = vset.pattern.permute.xlu0 1
        %1175 = vperm.xlu0 %1174, %v514
        %v1176 = vpop.permute.xlu0 %1175
        %1178 = vset.pattern.permute.xlu0 1
        %1179 = vperm.xlu0 %1178, %v515
        %v1180 = vpop.permute.xlu0 %1179
        %1182 = vset.pattern.permute.xlu0 1
        %1183 = vperm.xlu0 %1182, %v516
        %v1184 = vpop.permute.xlu0 %1183
        %1186 = vset.pattern.permute.xlu0 1
        %1187 = vperm.xlu0 %1186, %v517
        %v1188 = vpop.permute.xlu0 %1187
        %1190 = vset.pattern.permute.xlu0 1
        %1191 = vperm.xlu0 %1190, %v518
        %v1192 = vpop.permute.xlu0 %1191
        %1194 = vset.pattern.permute.xlu0 1
        %1195 = vperm.xlu0 %1194, %v519
        %v1196 = vpop.permute.xlu0 %1195
        %1198 = vset.pattern.permute.xlu0 1
        %1199 = vperm.xlu0 %1198, %v520
        %v1200 = vpop.permute.xlu0 %1199
        %1202 = vset.pattern.permute.xlu0 1
        %1203 = vperm.xlu0 %1202, %v521
        %v1204 = vpop.permute.xlu0 %1203
        %1206 = vset.pattern.permute.xlu0 1
        %1207 = vperm.xlu0 %1206, %v522
        %v1208 = vpop.permute.xlu0 %1207
        %1210 = vset.pattern.permute.xlu0 1
        %1211 = vperm.xlu0 %1210, %v523
        %v1212 = vpop.permute.xlu0 %1211
        %1214 = vset.pattern.permute.xlu0 1
        %1215 = vperm.xlu0 %1214, %v524
        %v1216 = vpop.permute.xlu0 %1215
        %1218 = vset.pattern.permute.xlu0 1
        %1219 = vperm.xlu0 %1218, %v525
        %v1220 = vpop.permute.xlu0 %1219
        %1222 = vset.pattern.permute.xlu0 1
        %1223 = vperm.xlu0 %1222, %v526
        %v1224 = vpop.permute.xlu0 %1223
        %1226 = vset.pattern.permute.xlu0 1
        %1227 = vperm.xlu0 %1226, %v527
        %v1228 = vpop.permute.xlu0 %1227
        %1230 = vset.pattern.permute.xlu0 1
        %1231 = vperm.xlu0 %1230, %v528
        %v1232 = vpop.permute.xlu0 %1231
        %1234 = vset.pattern.permute.xlu0 1
        %1235 = vperm.xlu0 %1234, %v529
        %v1236 = vpop.permute.xlu0 %1235
        %1238 = vset.pattern.permute.xlu0 1
        %1239 = vperm.xlu0 %1238, %v530
        %v1240 = vpop.permute.xlu0 %1239
        %v1242 = vperm.slane %v532, 1
        %v1243 = vmul.f32 %v988, %v1242
        %v1244 = vmul.f32 %v992, %v1242
        %v1245 = vmul.f32 %v996, %v1242
        %v1246 = vmul.f32 %v1000, %v1242
        %v1247 = vmul.f32 %v1004, %v1242
        %v1248 = vmul.f32 %v1008, %v1242
        %v1249 = vmul.f32 %v1012, %v1242
        %v1250 = vmul.f32 %v1016, %v1242
        %v1251 = vmul.f32 %v1020, %v1242
        %v1252 = vmul.f32 %v1024, %v1242
        %v1253 = vmul.f32 %v1028, %v1242
        %v1254 = vmul.f32 %v1032, %v1242
        %v1255 = vmul.f32 %v1036, %v1242
        %v1256 = vmul.f32 %v1040, %v1242
        %v1257 = vmul.f32 %v1044, %v1242
        %v1258 = vmul.f32 %v1048, %v1242
        %v1259 = vmul.f32 %v1052, %v1242
        %v1260 = vmul.f32 %v1056, %v1242
        %v1261 = vmul.f32 %v1060, %v1242
        %v1262 = vmul.f32 %v1064, %v1242
        %v1263 = vmul.f32 %v1068, %v1242
        %v1264 = vmul.f32 %v1072, %v1242
        %v1265 = vmul.f32 %v1076, %v1242
        %v1266 = vmul.f32 %v1080, %v1242
        %v1267 = vmul.f32 %v1084, %v1242
        %v1268 = vmul.f32 %v1088, %v1242
        %v1269 = vmul.f32 %v1092, %v1242
        %v1270 = vmul.f32 %v1096, %v1242
        %v1271 = vmul.f32 %v1100, %v1242
        %v1272 = vmul.f32 %v1104, %v1242
        %v1273 = vmul.f32 %v1108, %v1242
        %v1274 = vmul.f32 %v1112, %v1242
        %v1275 = vmul.f32 %v1116, %v1242
        %v1276 = vmul.f32 %v1120, %v1242
        %v1277 = vmul.f32 %v1124, %v1242
        %v1278 = vmul.f32 %v1128, %v1242
        %v1279 = vmul.f32 %v1132, %v1242
        %v1280 = vmul.f32 %v1136, %v1242
        %v1281 = vmul.f32 %v1140, %v1242
        %v1282 = vmul.f32 %v1144, %v1242
        %v1283 = vmul.f32 %v1148, %v1242
        %v1284 = vmul.f32 %v1152, %v1242
        %v1285 = vmul.f32 %v1156, %v1242
        %v1286 = vmul.f32 %v1160, %v1242
        %v1287 = vmul.f32 %v1164, %v1242
        %v1288 = vmul.f32 %v1168, %v1242
        %v1289 = vmul.f32 %v1172, %v1242
        %v1290 = vmul.f32 %v1176, %v1242
        %v1291 = vmul.f32 %v1180, %v1242
        %v1292 = vmul.f32 %v1184, %v1242
        %v1293 = vmul.f32 %v1188, %v1242
        %v1294 = vmul.f32 %v1192, %v1242
        %v1295 = vmul.f32 %v1196, %v1242
        %v1296 = vmul.f32 %v1200, %v1242
        %v1297 = vmul.f32 %v1204, %v1242
        %v1298 = vmul.f32 %v1208, %v1242
        %v1299 = vmul.f32 %v1212, %v1242
        %v1300 = vmul.f32 %v1216, %v1242
        %v1301 = vmul.f32 %v1220, %v1242
        %v1302 = vmul.f32 %v1224, %v1242
        %v1303 = vmul.f32 %v1228, %v1242
        %v1304 = vmul.f32 %v1232, %v1242
        %v1305 = vmul.f32 %v1236, %v1242
        %v1306 = vmul.f32 %v1240, %v1242
        %v1307 = vadd.f32 %v922, %v1243
        %v1308 = vadd.f32 %v923, %v1244
        %v1309 = vadd.f32 %v924, %v1245
        %v1310 = vadd.f32 %v925, %v1246
        %v1311 = vadd.f32 %v926, %v1247
        %v1312 = vadd.f32 %v927, %v1248
        %v1313 = vadd.f32 %v928, %v1249
        %v1314 = vadd.f32 %v929, %v1250
        %v1315 = vadd.f32 %v930, %v1251
        %v1316 = vadd.f32 %v931, %v1252
        %v1317 = vadd.f32 %v932, %v1253
        %v1318 = vadd.f32 %v933, %v1254
        %v1319 = vadd.f32 %v934, %v1255
        %v1320 = vadd.f32 %v935, %v1256
        %v1321 = vadd.f32 %v936, %v1257
        %v1322 = vadd.f32 %v937, %v1258
        %v1323 = vadd.f32 %v938, %v1259
        %v1324 = vadd.f32 %v939, %v1260
        %v1325 = vadd.f32 %v940, %v1261
        %v1326 = vadd.f32 %v941, %v1262
        %v1327 = vadd.f32 %v942, %v1263
        %v1328 = vadd.f32 %v943, %v1264
        %v1329 = vadd.f32 %v944, %v1265
        %v1330 = vadd.f32 %v945, %v1266
        %v1331 = vadd.f32 %v946, %v1267
        %v1332 = vadd.f32 %v947, %v1268
        %v1333 = vadd.f32 %v948, %v1269
        %v1334 = vadd.f32 %v949, %v1270
        %v1335 = vadd.f32 %v950, %v1271
        %v1336 = vadd.f32 %v951, %v1272
        %v1337 = vadd.f32 %v952, %v1273
        %v1338 = vadd.f32 %v953, %v1274
        %v1339 = vadd.f32 %v954, %v1275
        %v1340 = vadd.f32 %v955, %v1276
        %v1341 = vadd.f32 %v956, %v1277
        %v1342 = vadd.f32 %v957, %v1278
        %v1343 = vadd.f32 %v958, %v1279
        %v1344 = vadd.f32 %v959, %v1280
        %v1345 = vadd.f32 %v960, %v1281
        %v1346 = vadd.f32 %v961, %v1282
        %v1347 = vadd.f32 %v962, %v1283
        %v1348 = vadd.f32 %v963, %v1284
        %v1349 = vadd.f32 %v964, %v1285
        %v1350 = vadd.f32 %v965, %v1286
        %v1351 = vadd.f32 %v966, %v1287
        %v1352 = vadd.f32 %v967, %v1288
        %v1353 = vadd.f32 %v968, %v1289
        %v1354 = vadd.f32 %v969, %v1290
        %v1355 = vadd.f32 %v970, %v1291
        %v1356 = vadd.f32 %v971, %v1292
        %v1357 = vadd.f32 %v972, %v1293
        %v1358 = vadd.f32 %v973, %v1294
        %v1359 = vadd.f32 %v974, %v1295
        %v1360 = vadd.f32 %v975, %v1296
        %v1361 = vadd.f32 %v976, %v1297
        %v1362 = vadd.f32 %v977, %v1298
        %v1363 = vadd.f32 %v978, %v1299
        %v1364 = vadd.f32 %v979, %v1300
        %v1365 = vadd.f32 %v980, %v1301
        %v1366 = vadd.f32 %v981, %v1302
        %v1367 = vadd.f32 %v982, %v1303
        %v1368 = vadd.f32 %v983, %v1304
        %v1369 = vadd.f32 %v984, %v1305
        %v1370 = vadd.f32 %v985, %v1306
        %1371 = vset.pattern.permute.xlu0 2
        %1372 = vperm.xlu0 %1371, %v467
        %v1373 = vpop.permute.xlu0 %1372
        %1375 = vset.pattern.permute.xlu0 2
        %1376 = vperm.xlu0 %1375, %v468
        %v1377 = vpop.permute.xlu0 %1376
        %1379 = vset.pattern.permute.xlu0 2
        %1380 = vperm.xlu0 %1379, %v469
        %v1381 = vpop.permute.xlu0 %1380
        %1383 = vset.pattern.permute.xlu0 2
        %1384 = vperm.xlu0 %1383, %v470
        %v1385 = vpop.permute.xlu0 %1384
        %1387 = vset.pattern.permute.xlu0 2
        %1388 = vperm.xlu0 %1387, %v471
        %v1389 = vpop.permute.xlu0 %1388
        %1391 = vset.pattern.permute.xlu0 2
        %1392 = vperm.xlu0 %1391, %v472
        %v1393 = vpop.permute.xlu0 %1392
        %1395 = vset.pattern.permute.xlu0 2
        %1396 = vperm.xlu0 %1395, %v473
        %v1397 = vpop.permute.xlu0 %1396
        %1399 = vset.pattern.permute.xlu0 2
        %1400 = vperm.xlu0 %1399, %v474
        %v1401 = vpop.permute.xlu0 %1400
        %1403 = vset.pattern.permute.xlu0 2
        %1404 = vperm.xlu0 %1403, %v475
        %v1405 = vpop.permute.xlu0 %1404
        %1407 = vset.pattern.permute.xlu0 2
        %1408 = vperm.xlu0 %1407, %v476
        %v1409 = vpop.permute.xlu0 %1408
        %1411 = vset.pattern.permute.xlu0 2
        %1412 = vperm.xlu0 %1411, %v477
        %v1413 = vpop.permute.xlu0 %1412
        %1415 = vset.pattern.permute.xlu0 2
        %1416 = vperm.xlu0 %1415, %v478
        %v1417 = vpop.permute.xlu0 %1416
        %1419 = vset.pattern.permute.xlu0 2
        %1420 = vperm.xlu0 %1419, %v479
        %v1421 = vpop.permute.xlu0 %1420
        %1423 = vset.pattern.permute.xlu0 2
        %1424 = vperm.xlu0 %1423, %v480
        %v1425 = vpop.permute.xlu0 %1424
        %1427 = vset.pattern.permute.xlu0 2
        %1428 = vperm.xlu0 %1427, %v481
        %v1429 = vpop.permute.xlu0 %1428
        %1431 = vset.pattern.permute.xlu0 2
        %1432 = vperm.xlu0 %1431, %v482
        %v1433 = vpop.permute.xlu0 %1432
        %1435 = vset.pattern.permute.xlu0 2
        %1436 = vperm.xlu0 %1435, %v483
        %v1437 = vpop.permute.xlu0 %1436
        %1439 = vset.pattern.permute.xlu0 2
        %1440 = vperm.xlu0 %1439, %v484
        %v1441 = vpop.permute.xlu0 %1440
        %1443 = vset.pattern.permute.xlu0 2
        %1444 = vperm.xlu0 %1443, %v485
        %v1445 = vpop.permute.xlu0 %1444
        %1447 = vset.pattern.permute.xlu0 2
        %1448 = vperm.xlu0 %1447, %v486
        %v1449 = vpop.permute.xlu0 %1448
        %1451 = vset.pattern.permute.xlu0 2
        %1452 = vperm.xlu0 %1451, %v487
        %v1453 = vpop.permute.xlu0 %1452
        %1455 = vset.pattern.permute.xlu0 2
        %1456 = vperm.xlu0 %1455, %v488
        %v1457 = vpop.permute.xlu0 %1456
        %1459 = vset.pattern.permute.xlu0 2
        %1460 = vperm.xlu0 %1459, %v489
        %v1461 = vpop.permute.xlu0 %1460
        %1463 = vset.pattern.permute.xlu0 2
        %1464 = vperm.xlu0 %1463, %v490
        %v1465 = vpop.permute.xlu0 %1464
        %1467 = vset.pattern.permute.xlu0 2
        %1468 = vperm.xlu0 %1467, %v491
        %v1469 = vpop.permute.xlu0 %1468
        %1471 = vset.pattern.permute.xlu0 2
        %1472 = vperm.xlu0 %1471, %v492
        %v1473 = vpop.permute.xlu0 %1472
        %1475 = vset.pattern.permute.xlu0 2
        %1476 = vperm.xlu0 %1475, %v493
        %v1477 = vpop.permute.xlu0 %1476
        %1479 = vset.pattern.permute.xlu0 2
        %1480 = vperm.xlu0 %1479, %v494
        %v1481 = vpop.permute.xlu0 %1480
        %1483 = vset.pattern.permute.xlu0 2
        %1484 = vperm.xlu0 %1483, %v495
        %v1485 = vpop.permute.xlu0 %1484
        %1487 = vset.pattern.permute.xlu0 2
        %1488 = vperm.xlu0 %1487, %v496
        %v1489 = vpop.permute.xlu0 %1488
        %1491 = vset.pattern.permute.xlu0 2
        %1492 = vperm.xlu0 %1491, %v497
        %v1493 = vpop.permute.xlu0 %1492
        %1495 = vset.pattern.permute.xlu0 2
        %1496 = vperm.xlu0 %1495, %v498
        %v1497 = vpop.permute.xlu0 %1496
        %1499 = vset.pattern.permute.xlu0 2
        %1500 = vperm.xlu0 %1499, %v499
        %v1501 = vpop.permute.xlu0 %1500
        %1503 = vset.pattern.permute.xlu0 2
        %1504 = vperm.xlu0 %1503, %v500
        %v1505 = vpop.permute.xlu0 %1504
        %1507 = vset.pattern.permute.xlu0 2
        %1508 = vperm.xlu0 %1507, %v501
        %v1509 = vpop.permute.xlu0 %1508
        %1511 = vset.pattern.permute.xlu0 2
        %1512 = vperm.xlu0 %1511, %v502
        %v1513 = vpop.permute.xlu0 %1512
        %1515 = vset.pattern.permute.xlu0 2
        %1516 = vperm.xlu0 %1515, %v503
        %v1517 = vpop.permute.xlu0 %1516
        %1519 = vset.pattern.permute.xlu0 2
        %1520 = vperm.xlu0 %1519, %v504
        %v1521 = vpop.permute.xlu0 %1520
        %1523 = vset.pattern.permute.xlu0 2
        %1524 = vperm.xlu0 %1523, %v505
        %v1525 = vpop.permute.xlu0 %1524
        %1527 = vset.pattern.permute.xlu0 2
        %1528 = vperm.xlu0 %1527, %v506
        %v1529 = vpop.permute.xlu0 %1528
        %1531 = vset.pattern.permute.xlu0 2
        %1532 = vperm.xlu0 %1531, %v507
        %v1533 = vpop.permute.xlu0 %1532
        %1535 = vset.pattern.permute.xlu0 2
        %1536 = vperm.xlu0 %1535, %v508
        %v1537 = vpop.permute.xlu0 %1536
        %1539 = vset.pattern.permute.xlu0 2
        %1540 = vperm.xlu0 %1539, %v509
        %v1541 = vpop.permute.xlu0 %1540
        %1543 = vset.pattern.permute.xlu0 2
        %1544 = vperm.xlu0 %1543, %v510
        %v1545 = vpop.permute.xlu0 %1544
        %1547 = vset.pattern.permute.xlu0 2
        %1548 = vperm.xlu0 %1547, %v511
        %v1549 = vpop.permute.xlu0 %1548
        %1551 = vset.pattern.permute.xlu0 2
        %1552 = vperm.xlu0 %1551, %v512
        %v1553 = vpop.permute.xlu0 %1552
        %1555 = vset.pattern.permute.xlu0 2
        %1556 = vperm.xlu0 %1555, %v513
        %v1557 = vpop.permute.xlu0 %1556
        %1559 = vset.pattern.permute.xlu0 2
        %1560 = vperm.xlu0 %1559, %v514
        %v1561 = vpop.permute.xlu0 %1560
        %1563 = vset.pattern.permute.xlu0 2
        %1564 = vperm.xlu0 %1563, %v515
        %v1565 = vpop.permute.xlu0 %1564
        %1567 = vset.pattern.permute.xlu0 2
        %1568 = vperm.xlu0 %1567, %v516
        %v1569 = vpop.permute.xlu0 %1568
        %1571 = vset.pattern.permute.xlu0 2
        %1572 = vperm.xlu0 %1571, %v517
        %v1573 = vpop.permute.xlu0 %1572
        %1575 = vset.pattern.permute.xlu0 2
        %1576 = vperm.xlu0 %1575, %v518
        %v1577 = vpop.permute.xlu0 %1576
        %1579 = vset.pattern.permute.xlu0 2
        %1580 = vperm.xlu0 %1579, %v519
        %v1581 = vpop.permute.xlu0 %1580
        %1583 = vset.pattern.permute.xlu0 2
        %1584 = vperm.xlu0 %1583, %v520
        %v1585 = vpop.permute.xlu0 %1584
        %1587 = vset.pattern.permute.xlu0 2
        %1588 = vperm.xlu0 %1587, %v521
        %v1589 = vpop.permute.xlu0 %1588
        %1591 = vset.pattern.permute.xlu0 2
        %1592 = vperm.xlu0 %1591, %v522
        %v1593 = vpop.permute.xlu0 %1592
        %1595 = vset.pattern.permute.xlu0 2
        %1596 = vperm.xlu0 %1595, %v523
        %v1597 = vpop.permute.xlu0 %1596
        %1599 = vset.pattern.permute.xlu0 2
        %1600 = vperm.xlu0 %1599, %v524
        %v1601 = vpop.permute.xlu0 %1600
        %1603 = vset.pattern.permute.xlu0 2
        %1604 = vperm.xlu0 %1603, %v525
        %v1605 = vpop.permute.xlu0 %1604
        %1607 = vset.pattern.permute.xlu0 2
        %1608 = vperm.xlu0 %1607, %v526
        %v1609 = vpop.permute.xlu0 %1608
        %1611 = vset.pattern.permute.xlu0 2
        %1612 = vperm.xlu0 %1611, %v527
        %v1613 = vpop.permute.xlu0 %1612
        %1615 = vset.pattern.permute.xlu0 2
        %1616 = vperm.xlu0 %1615, %v528
        %v1617 = vpop.permute.xlu0 %1616
        %1619 = vset.pattern.permute.xlu0 2
        %1620 = vperm.xlu0 %1619, %v529
        %v1621 = vpop.permute.xlu0 %1620
        %1623 = vset.pattern.permute.xlu0 2
        %1624 = vperm.xlu0 %1623, %v530
        %v1625 = vpop.permute.xlu0 %1624
        %v1627 = vperm.slane %v532, 2
        %v1628 = vmul.f32 %v1373, %v1627
        %v1629 = vmul.f32 %v1377, %v1627
        %v1630 = vmul.f32 %v1381, %v1627
        %v1631 = vmul.f32 %v1385, %v1627
        %v1632 = vmul.f32 %v1389, %v1627
        %v1633 = vmul.f32 %v1393, %v1627
        %v1634 = vmul.f32 %v1397, %v1627
        %v1635 = vmul.f32 %v1401, %v1627
        %v1636 = vmul.f32 %v1405, %v1627
        %v1637 = vmul.f32 %v1409, %v1627
        %v1638 = vmul.f32 %v1413, %v1627
        %v1639 = vmul.f32 %v1417, %v1627
        %v1640 = vmul.f32 %v1421, %v1627
        %v1641 = vmul.f32 %v1425, %v1627
        %v1642 = vmul.f32 %v1429, %v1627
        %v1643 = vmul.f32 %v1433, %v1627
        %v1644 = vmul.f32 %v1437, %v1627
        %v1645 = vmul.f32 %v1441, %v1627
        %v1646 = vmul.f32 %v1445, %v1627
        %v1647 = vmul.f32 %v1449, %v1627
        %v1648 = vmul.f32 %v1453, %v1627
        %v1649 = vmul.f32 %v1457, %v1627
        %v1650 = vmul.f32 %v1461, %v1627
        %v1651 = vmul.f32 %v1465, %v1627
        %v1652 = vmul.f32 %v1469, %v1627
        %v1653 = vmul.f32 %v1473, %v1627
        %v1654 = vmul.f32 %v1477, %v1627
        %v1655 = vmul.f32 %v1481, %v1627
        %v1656 = vmul.f32 %v1485, %v1627
        %v1657 = vmul.f32 %v1489, %v1627
        %v1658 = vmul.f32 %v1493, %v1627
        %v1659 = vmul.f32 %v1497, %v1627
        %v1660 = vmul.f32 %v1501, %v1627
        %v1661 = vmul.f32 %v1505, %v1627
        %v1662 = vmul.f32 %v1509, %v1627
        %v1663 = vmul.f32 %v1513, %v1627
        %v1664 = vmul.f32 %v1517, %v1627
        %v1665 = vmul.f32 %v1521, %v1627
        %v1666 = vmul.f32 %v1525, %v1627
        %v1667 = vmul.f32 %v1529, %v1627
        %v1668 = vmul.f32 %v1533, %v1627
        %v1669 = vmul.f32 %v1537, %v1627
        %v1670 = vmul.f32 %v1541, %v1627
        %v1671 = vmul.f32 %v1545, %v1627
        %v1672 = vmul.f32 %v1549, %v1627
        %v1673 = vmul.f32 %v1553, %v1627
        %v1674 = vmul.f32 %v1557, %v1627
        %v1675 = vmul.f32 %v1561, %v1627
        %v1676 = vmul.f32 %v1565, %v1627
        %v1677 = vmul.f32 %v1569, %v1627
        %v1678 = vmul.f32 %v1573, %v1627
        %v1679 = vmul.f32 %v1577, %v1627
        %v1680 = vmul.f32 %v1581, %v1627
        %v1681 = vmul.f32 %v1585, %v1627
        %v1682 = vmul.f32 %v1589, %v1627
        %v1683 = vmul.f32 %v1593, %v1627
        %v1684 = vmul.f32 %v1597, %v1627
        %v1685 = vmul.f32 %v1601, %v1627
        %v1686 = vmul.f32 %v1605, %v1627
        %v1687 = vmul.f32 %v1609, %v1627
        %v1688 = vmul.f32 %v1613, %v1627
        %v1689 = vmul.f32 %v1617, %v1627
        %v1690 = vmul.f32 %v1621, %v1627
        %v1691 = vmul.f32 %v1625, %v1627
        %v1692 = vadd.f32 %v1307, %v1628
        %v1693 = vadd.f32 %v1308, %v1629
        %v1694 = vadd.f32 %v1309, %v1630
        %v1695 = vadd.f32 %v1310, %v1631
        %v1696 = vadd.f32 %v1311, %v1632
        %v1697 = vadd.f32 %v1312, %v1633
        %v1698 = vadd.f32 %v1313, %v1634
        %v1699 = vadd.f32 %v1314, %v1635
        %v1700 = vadd.f32 %v1315, %v1636
        %v1701 = vadd.f32 %v1316, %v1637
        %v1702 = vadd.f32 %v1317, %v1638
        %v1703 = vadd.f32 %v1318, %v1639
        %v1704 = vadd.f32 %v1319, %v1640
        %v1705 = vadd.f32 %v1320, %v1641
        %v1706 = vadd.f32 %v1321, %v1642
        %v1707 = vadd.f32 %v1322, %v1643
        %v1708 = vadd.f32 %v1323, %v1644
        %v1709 = vadd.f32 %v1324, %v1645
        %v1710 = vadd.f32 %v1325, %v1646
        %v1711 = vadd.f32 %v1326, %v1647
        %v1712 = vadd.f32 %v1327, %v1648
        %v1713 = vadd.f32 %v1328, %v1649
        %v1714 = vadd.f32 %v1329, %v1650
        %v1715 = vadd.f32 %v1330, %v1651
        %v1716 = vadd.f32 %v1331, %v1652
        %v1717 = vadd.f32 %v1332, %v1653
        %v1718 = vadd.f32 %v1333, %v1654
        %v1719 = vadd.f32 %v1334, %v1655
        %v1720 = vadd.f32 %v1335, %v1656
        %v1721 = vadd.f32 %v1336, %v1657
        %v1722 = vadd.f32 %v1337, %v1658
        %v1723 = vadd.f32 %v1338, %v1659
        %v1724 = vadd.f32 %v1339, %v1660
        %v1725 = vadd.f32 %v1340, %v1661
        %v1726 = vadd.f32 %v1341, %v1662
        %v1727 = vadd.f32 %v1342, %v1663
        %v1728 = vadd.f32 %v1343, %v1664
        %v1729 = vadd.f32 %v1344, %v1665
        %v1730 = vadd.f32 %v1345, %v1666
        %v1731 = vadd.f32 %v1346, %v1667
        %v1732 = vadd.f32 %v1347, %v1668
        %v1733 = vadd.f32 %v1348, %v1669
        %v1734 = vadd.f32 %v1349, %v1670
        %v1735 = vadd.f32 %v1350, %v1671
        %v1736 = vadd.f32 %v1351, %v1672
        %v1737 = vadd.f32 %v1352, %v1673
        %v1738 = vadd.f32 %v1353, %v1674
        %v1739 = vadd.f32 %v1354, %v1675
        %v1740 = vadd.f32 %v1355, %v1676
        %v1741 = vadd.f32 %v1356, %v1677
        %v1742 = vadd.f32 %v1357, %v1678
        %v1743 = vadd.f32 %v1358, %v1679
        %v1744 = vadd.f32 %v1359, %v1680
        %v1745 = vadd.f32 %v1360, %v1681
        %v1746 = vadd.f32 %v1361, %v1682
        %v1747 = vadd.f32 %v1362, %v1683
        %v1748 = vadd.f32 %v1363, %v1684
        %v1749 = vadd.f32 %v1364, %v1685
        %v1750 = vadd.f32 %v1365, %v1686
        %v1751 = vadd.f32 %v1366, %v1687
        %v1752 = vadd.f32 %v1367, %v1688
        %v1753 = vadd.f32 %v1368, %v1689
        %v1754 = vadd.f32 %v1369, %v1690
        %v1755 = vadd.f32 %v1370, %v1691
        %v1756 = vld [vmem:[%s3] sm:$0x1]
        %v1758 = vperm.slane %v1756, 0
        %v1760 = vmul.f32 %v1692, %v1758
        %v1761 = vmul.f32 %v1693, %v1758
        %v1762 = vmul.f32 %v1694, %v1758
        %v1763 = vmul.f32 %v1695, %v1758
        %v1764 = vmul.f32 %v1696, %v1758
        %v1765 = vmul.f32 %v1697, %v1758
        %v1766 = vmul.f32 %v1698, %v1758
        %v1767 = vmul.f32 %v1699, %v1758
        %v1768 = vmul.f32 %v1700, %v1758
        %v1769 = vmul.f32 %v1701, %v1758
        %v1770 = vmul.f32 %v1702, %v1758
        %v1771 = vmul.f32 %v1703, %v1758
        %v1772 = vmul.f32 %v1704, %v1758
        %v1773 = vmul.f32 %v1705, %v1758
        %v1774 = vmul.f32 %v1706, %v1758
        %v1775 = vmul.f32 %v1707, %v1758
        %v1776 = vmul.f32 %v1708, %v1758
        %v1777 = vmul.f32 %v1709, %v1758
        %v1778 = vmul.f32 %v1710, %v1758
        %v1779 = vmul.f32 %v1711, %v1758
        %v1780 = vmul.f32 %v1712, %v1758
        %v1781 = vmul.f32 %v1713, %v1758
        %v1782 = vmul.f32 %v1714, %v1758
        %v1783 = vmul.f32 %v1715, %v1758
        %v1784 = vmul.f32 %v1716, %v1758
        %v1785 = vmul.f32 %v1717, %v1758
        %v1786 = vmul.f32 %v1718, %v1758
        %v1787 = vmul.f32 %v1719, %v1758
        %v1788 = vmul.f32 %v1720, %v1758
        %v1789 = vmul.f32 %v1721, %v1758
        %v1790 = vmul.f32 %v1722, %v1758
        %v1791 = vmul.f32 %v1723, %v1758
        %v1792 = vmul.f32 %v1724, %v1758
        %v1793 = vmul.f32 %v1725, %v1758
        %v1794 = vmul.f32 %v1726, %v1758
        %v1795 = vmul.f32 %v1727, %v1758
        %v1796 = vmul.f32 %v1728, %v1758
        %v1797 = vmul.f32 %v1729, %v1758
        %v1798 = vmul.f32 %v1730, %v1758
        %v1799 = vmul.f32 %v1731, %v1758
        %v1800 = vmul.f32 %v1732, %v1758
        %v1801 = vmul.f32 %v1733, %v1758
        %v1802 = vmul.f32 %v1734, %v1758
        %v1803 = vmul.f32 %v1735, %v1758
        %v1804 = vmul.f32 %v1736, %v1758
        %v1805 = vmul.f32 %v1737, %v1758
        %v1806 = vmul.f32 %v1738, %v1758
        %v1807 = vmul.f32 %v1739, %v1758
        %v1808 = vmul.f32 %v1740, %v1758
        %v1809 = vmul.f32 %v1741, %v1758
        %v1810 = vmul.f32 %v1742, %v1758
        %v1811 = vmul.f32 %v1743, %v1758
        %v1812 = vmul.f32 %v1744, %v1758
        %v1813 = vmul.f32 %v1745, %v1758
        %v1814 = vmul.f32 %v1746, %v1758
        %v1815 = vmul.f32 %v1747, %v1758
        %v1816 = vmul.f32 %v1748, %v1758
        %v1817 = vmul.f32 %v1749, %v1758
        %v1818 = vmul.f32 %v1750, %v1758
        %v1819 = vmul.f32 %v1751, %v1758
        %v1820 = vmul.f32 %v1752, %v1758
        %v1821 = vmul.f32 %v1753, %v1758
        %v1822 = vmul.f32 %v1754, %v1758
        %v1823 = vmul.f32 %v1755, %v1758
        %v1824 = vld [vmem:[%s4] sm:$0x1]
        %v1826 = vperm.slane %v1824, 0
        %v1828 = vadd.f32 %v1760, %v1826
        %v1829 = vadd.f32 %v1761, %v1826
        %v1830 = vadd.f32 %v1762, %v1826
        %v1831 = vadd.f32 %v1763, %v1826
        %v1832 = vadd.f32 %v1764, %v1826
        %v1833 = vadd.f32 %v1765, %v1826
        %v1834 = vadd.f32 %v1766, %v1826
        %v1835 = vadd.f32 %v1767, %v1826
        %v1836 = vadd.f32 %v1768, %v1826
        %v1837 = vadd.f32 %v1769, %v1826
        %v1838 = vadd.f32 %v1770, %v1826
        %v1839 = vadd.f32 %v1771, %v1826
        %v1840 = vadd.f32 %v1772, %v1826
        %v1841 = vadd.f32 %v1773, %v1826
        %v1842 = vadd.f32 %v1774, %v1826
        %v1843 = vadd.f32 %v1775, %v1826
        %v1844 = vadd.f32 %v1776, %v1826
        %v1845 = vadd.f32 %v1777, %v1826
        %v1846 = vadd.f32 %v1778, %v1826
        %v1847 = vadd.f32 %v1779, %v1826
        %v1848 = vadd.f32 %v1780, %v1826
        %v1849 = vadd.f32 %v1781, %v1826
        %v1850 = vadd.f32 %v1782, %v1826
        %v1851 = vadd.f32 %v1783, %v1826
        %v1852 = vadd.f32 %v1784, %v1826
        %v1853 = vadd.f32 %v1785, %v1826
        %v1854 = vadd.f32 %v1786, %v1826
        %v1855 = vadd.f32 %v1787, %v1826
        %v1856 = vadd.f32 %v1788, %v1826
        %v1857 = vadd.f32 %v1789, %v1826
        %v1858 = vadd.f32 %v1790, %v1826
        %v1859 = vadd.f32 %v1791, %v1826
        %v1860 = vadd.f32 %v1792, %v1826
        %v1861 = vadd.f32 %v1793, %v1826
        %v1862 = vadd.f32 %v1794, %v1826
        %v1863 = vadd.f32 %v1795, %v1826
        %v1864 = vadd.f32 %v1796, %v1826
        %v1865 = vadd.f32 %v1797, %v1826
        %v1866 = vadd.f32 %v1798, %v1826
        %v1867 = vadd.f32 %v1799, %v1826
        %v1868 = vadd.f32 %v1800, %v1826
        %v1869 = vadd.f32 %v1801, %v1826
        %v1870 = vadd.f32 %v1802, %v1826
        %v1871 = vadd.f32 %v1803, %v1826
        %v1872 = vadd.f32 %v1804, %v1826
        %v1873 = vadd.f32 %v1805, %v1826
        %v1874 = vadd.f32 %v1806, %v1826
        %v1875 = vadd.f32 %v1807, %v1826
        %v1876 = vadd.f32 %v1808, %v1826
        %v1877 = vadd.f32 %v1809, %v1826
        %v1878 = vadd.f32 %v1810, %v1826
        %v1879 = vadd.f32 %v1811, %v1826
        %v1880 = vadd.f32 %v1812, %v1826
        %v1881 = vadd.f32 %v1813, %v1826
        %v1882 = vadd.f32 %v1814, %v1826
        %v1883 = vadd.f32 %v1815, %v1826
        %v1884 = vadd.f32 %v1816, %v1826
        %v1885 = vadd.f32 %v1817, %v1826
        %v1886 = vadd.f32 %v1818, %v1826
        %v1887 = vadd.f32 %v1819, %v1826
        %v1888 = vadd.f32 %v1820, %v1826
        %v1889 = vadd.f32 %v1821, %v1826
        %v1890 = vadd.f32 %v1822, %v1826
        %v1891 = vadd.f32 %v1823, %v1826
        %v1892 = vmax.f32 %v1828, 0.0
        %v1893 = vmax.f32 %v1829, 0.0
        %v1894 = vmax.f32 %v1830, 0.0
        %v1895 = vmax.f32 %v1831, 0.0
        %v1896 = vmax.f32 %v1832, 0.0
        %v1897 = vmax.f32 %v1833, 0.0
        %v1898 = vmax.f32 %v1834, 0.0
        %v1899 = vmax.f32 %v1835, 0.0
        %v1900 = vmax.f32 %v1836, 0.0
        %v1901 = vmax.f32 %v1837, 0.0
        %v1902 = vmax.f32 %v1838, 0.0
        %v1903 = vmax.f32 %v1839, 0.0
        %v1904 = vmax.f32 %v1840, 0.0
        %v1905 = vmax.f32 %v1841, 0.0
        %v1906 = vmax.f32 %v1842, 0.0
        %v1907 = vmax.f32 %v1843, 0.0
        %v1908 = vmax.f32 %v1844, 0.0
        %v1909 = vmax.f32 %v1845, 0.0
        %v1910 = vmax.f32 %v1846, 0.0
        %v1911 = vmax.f32 %v1847, 0.0
        %v1912 = vmax.f32 %v1848, 0.0
        %v1913 = vmax.f32 %v1849, 0.0
        %v1914 = vmax.f32 %v1850, 0.0
        %v1915 = vmax.f32 %v1851, 0.0
        %v1916 = vmax.f32 %v1852, 0.0
        %v1917 = vmax.f32 %v1853, 0.0
        %v1918 = vmax.f32 %v1854, 0.0
        %v1919 = vmax.f32 %v1855, 0.0
        %v1920 = vmax.f32 %v1856, 0.0
        %v1921 = vmax.f32 %v1857, 0.0
        %v1922 = vmax.f32 %v1858, 0.0
        %v1923 = vmax.f32 %v1859, 0.0
        %v1924 = vmax.f32 %v1860, 0.0
        %v1925 = vmax.f32 %v1861, 0.0
        %v1926 = vmax.f32 %v1862, 0.0
        %v1927 = vmax.f32 %v1863, 0.0
        %v1928 = vmax.f32 %v1864, 0.0
        %v1929 = vmax.f32 %v1865, 0.0
        %v1930 = vmax.f32 %v1866, 0.0
        %v1931 = vmax.f32 %v1867, 0.0
        %v1932 = vmax.f32 %v1868, 0.0
        %v1933 = vmax.f32 %v1869, 0.0
        %v1934 = vmax.f32 %v1870, 0.0
        %v1935 = vmax.f32 %v1871, 0.0
        %v1936 = vmax.f32 %v1872, 0.0
        %v1937 = vmax.f32 %v1873, 0.0
        %v1938 = vmax.f32 %v1874, 0.0
        %v1939 = vmax.f32 %v1875, 0.0
        %v1940 = vmax.f32 %v1876, 0.0
        %v1941 = vmax.f32 %v1877, 0.0
        %v1942 = vmax.f32 %v1878, 0.0
        %v1943 = vmax.f32 %v1879, 0.0
        %v1944 = vmax.f32 %v1880, 0.0
        %v1945 = vmax.f32 %v1881, 0.0
        %v1946 = vmax.f32 %v1882, 0.0
        %v1947 = vmax.f32 %v1883, 0.0
        %v1948 = vmax.f32 %v1884, 0.0
        %v1949 = vmax.f32 %v1885, 0.0
        %v1950 = vmax.f32 %v1886, 0.0
        %v1951 = vmax.f32 %v1887, 0.0
        %v1952 = vmax.f32 %v1888, 0.0
        %v1953 = vmax.f32 %v1889, 0.0
        %v1954 = vmax.f32 %v1890, 0.0
        %v1955 = vmax.f32 %v1891, 0.0
        %v1956 = vpack.c.bf16 %v1893, %v1892
        %v1957 = vpack.c.bf16 %v1895, %v1894
        %v1958 = vpack.c.bf16 %v1897, %v1896
        %v1959 = vpack.c.bf16 %v1899, %v1898
        %v1960 = vpack.c.bf16 %v1901, %v1900
        %v1961 = vpack.c.bf16 %v1903, %v1902
        %v1962 = vpack.c.bf16 %v1905, %v1904
        %v1963 = vpack.c.bf16 %v1907, %v1906
        %v1964 = vpack.c.bf16 %v1909, %v1908
        %v1965 = vpack.c.bf16 %v1911, %v1910
        %v1966 = vpack.c.bf16 %v1913, %v1912
        %v1967 = vpack.c.bf16 %v1915, %v1914
        %v1968 = vpack.c.bf16 %v1917, %v1916
        %v1969 = vpack.c.bf16 %v1919, %v1918
        %v1970 = vpack.c.bf16 %v1921, %v1920
        %v1971 = vpack.c.bf16 %v1923, %v1922
        %v1972 = vpack.c.bf16 %v1925, %v1924
        %v1973 = vpack.c.bf16 %v1927, %v1926
        %v1974 = vpack.c.bf16 %v1929, %v1928
        %v1975 = vpack.c.bf16 %v1931, %v1930
        %v1976 = vpack.c.bf16 %v1933, %v1932
        %v1977 = vpack.c.bf16 %v1935, %v1934
        %v1978 = vpack.c.bf16 %v1937, %v1936
        %v1979 = vpack.c.bf16 %v1939, %v1938
        %v1980 = vpack.c.bf16 %v1941, %v1940
        %v1981 = vpack.c.bf16 %v1943, %v1942
        %v1982 = vpack.c.bf16 %v1945, %v1944
        %v1983 = vpack.c.bf16 %v1947, %v1946
        %v1984 = vpack.c.bf16 %v1949, %v1948
        %v1985 = vpack.c.bf16 %v1951, %v1950
        %v1986 = vpack.c.bf16 %v1953, %v1952
        %v1987 = vpack.c.bf16 %v1955, %v1954
        %v1988 = vld [vmem:[%s5] sm:$0xf]
        %v1989 = vld [vmem:[%s5 + $0x4] sm:$0xf]
        %v1990 = vld [vmem:[%s5 + $0x8] sm:$0xf]
        %v1991 = vld [vmem:[%s5 + $0xc] sm:$0xf]
        %v1992 = vld [vmem:[%s5 + $0x10] sm:$0xf]
        %v1993 = vld [vmem:[%s5 + $0x14] sm:$0xf]
        %v1994 = vld [vmem:[%s6] sm:$0x1]
        %v1996 = vperm.slane %v1994, 0
        %v2004 = vunpack.c.l.b16 %v1988
        %v2005 = vunpack.c.l.b16 %v1989
        %v2006 = vunpack.c.l.b16 %v1990
        %v2007 = vunpack.c.l.b16 %v1991
        %v2008 = vunpack.c.l.b16 %v1992
        %v2009 = vunpack.c.l.b16 %v1993
        %v2010 = vpack.c.b16 %v2005, %v2004
        %v2011 = vpack.c.b16 %v2007, %v2006
        %v2012 = vpack.c.b16 %v2009, %v2008
        %vm2016 = vcmask 392192
        %v2018 = vsel %vm2016, %v1956, 0
        %v2021 = vsel %vm2016, %v1957, 0
        %v2024 = vsel %vm2016, %v1958, 0
        %v2027 = vsel %vm2016, %v1959, 0
        %v2030 = vsel %vm2016, %v1960, 0
        %v2033 = vsel %vm2016, %v1961, 0
        %v2036 = vsel %vm2016, %v1962, 0
        %v2039 = vsel %vm2016, %v1963, 0
        %v2042 = vsel %vm2016, %v1964, 0
        %v2045 = vsel %vm2016, %v1965, 0
        %v2048 = vsel %vm2016, %v1966, 0
        %v2051 = vsel %vm2016, %v1967, 0
        %v2054 = vsel %vm2016, %v1968, 0
        %v2057 = vsel %vm2016, %v1969, 0
        %v2060 = vsel %vm2016, %v1970, 0
        %v2063 = vsel %vm2016, %v1971, 0
        %v2066 = vsel %vm2016, %v1972, 0
        %v2069 = vsel %vm2016, %v1973, 0
        %v2072 = vsel %vm2016, %v1974, 0
        %v2075 = vsel %vm2016, %v1975, 0
        %v2078 = vsel %vm2016, %v1976, 0
        %v2081 = vsel %vm2016, %v1977, 0
        %v2084 = vsel %vm2016, %v1978, 0
        %v2087 = vsel %vm2016, %v1979, 0
        %v2090 = vsel %vm2016, %v1980, 0
        %v2093 = vsel %vm2016, %v1981, 0
        %v2096 = vsel %vm2016, %v1982, 0
        %v2099 = vsel %vm2016, %v1983, 0
        %v2102 = vsel %vm2016, %v1984, 0
        %v2105 = vsel %vm2016, %v1985, 0
        %v2108 = vsel %vm2016, %v1986, 0
        %v2111 = vsel %vm2016, %v1987, 0
        %2113 = vmatpush.bf16.msra.mxu0 0
        %2114 = vmatpush.bf16.msra.mxu0 0
        %2115 = vmatpush.bf16.msra.mxu0 0
        %2116 = vmatpush.bf16.msra.mxu0 0
        %2117 = vmatpush.bf16.msra.mxu0 0
        %2118 = vmatpush.bf16.msra.mxu0 %v2012
        %2119 = vmatpush.bf16.msra.mxu0 %v2011
        %2120 = vmatpush.bf16.msra.mxu0 %v2010
        %2121 = vmatmul.bf16.gmra.mxu0 %v2018
        %v2122 = vpop.f32.mrf.mxu0
        %v2123 = vadd.f32 %v1996, %v2122
        %v2124 = vpop.f32.mrf.mxu0
        %v2125 = vadd.f32 %v1996, %v2124
        %2126 = vmatmul.bf16.gmra.mxu0 %v2021
        %v2127 = vpop.f32.mrf.mxu0
        %v2128 = vadd.f32 %v1996, %v2127
        %v2129 = vpop.f32.mrf.mxu0
        %v2130 = vadd.f32 %v1996, %v2129
        %2131 = vmatmul.bf16.gmra.mxu0 %v2024
        %v2132 = vpop.f32.mrf.mxu0
        %v2133 = vadd.f32 %v1996, %v2132
        %v2134 = vpop.f32.mrf.mxu0
        %v2135 = vadd.f32 %v1996, %v2134
        %2136 = vmatmul.bf16.gmra.mxu0 %v2027
        %v2137 = vpop.f32.mrf.mxu0
        %v2138 = vadd.f32 %v1996, %v2137
        %v2139 = vpop.f32.mrf.mxu0
        %v2140 = vadd.f32 %v1996, %v2139
        %2141 = vmatmul.bf16.gmra.mxu0 %v2030
        %v2142 = vpop.f32.mrf.mxu0
        %v2143 = vadd.f32 %v1996, %v2142
        %v2144 = vpop.f32.mrf.mxu0
        %v2145 = vadd.f32 %v1996, %v2144
        %2146 = vmatmul.bf16.gmra.mxu0 %v2033
        %v2147 = vpop.f32.mrf.mxu0
        %v2148 = vadd.f32 %v1996, %v2147
        %v2149 = vpop.f32.mrf.mxu0
        %v2150 = vadd.f32 %v1996, %v2149
        %2151 = vmatmul.bf16.gmra.mxu0 %v2036
        %v2152 = vpop.f32.mrf.mxu0
        %v2153 = vadd.f32 %v1996, %v2152
        %v2154 = vpop.f32.mrf.mxu0
        %v2155 = vadd.f32 %v1996, %v2154
        %2156 = vmatmul.bf16.gmra.mxu0 %v2039
        %v2157 = vpop.f32.mrf.mxu0
        %v2158 = vadd.f32 %v1996, %v2157
        %v2159 = vpop.f32.mrf.mxu0
        %v2160 = vadd.f32 %v1996, %v2159
        %2161 = vmatmul.bf16.gmra.mxu0 %v2042
        %v2162 = vpop.f32.mrf.mxu0
        %v2163 = vadd.f32 %v1996, %v2162
        %v2164 = vpop.f32.mrf.mxu0
        %v2165 = vadd.f32 %v1996, %v2164
        %2166 = vmatmul.bf16.gmra.mxu0 %v2045
        %v2167 = vpop.f32.mrf.mxu0
        %v2168 = vadd.f32 %v1996, %v2167
        %v2169 = vpop.f32.mrf.mxu0
        %v2170 = vadd.f32 %v1996, %v2169
        %2171 = vmatmul.bf16.gmra.mxu0 %v2048
        %v2172 = vpop.f32.mrf.mxu0
        %v2173 = vadd.f32 %v1996, %v2172
        %v2174 = vpop.f32.mrf.mxu0
        %v2175 = vadd.f32 %v1996, %v2174
        %2176 = vmatmul.bf16.gmra.mxu0 %v2051
        %v2177 = vpop.f32.mrf.mxu0
        %v2178 = vadd.f32 %v1996, %v2177
        %v2179 = vpop.f32.mrf.mxu0
        %v2180 = vadd.f32 %v1996, %v2179
        %2181 = vmatmul.bf16.gmra.mxu0 %v2054
        %v2182 = vpop.f32.mrf.mxu0
        %v2183 = vadd.f32 %v1996, %v2182
        %v2184 = vpop.f32.mrf.mxu0
        %v2185 = vadd.f32 %v1996, %v2184
        %2186 = vmatmul.bf16.gmra.mxu0 %v2057
        %v2187 = vpop.f32.mrf.mxu0
        %v2188 = vadd.f32 %v1996, %v2187
        %v2189 = vpop.f32.mrf.mxu0
        %v2190 = vadd.f32 %v1996, %v2189
        %2191 = vmatmul.bf16.gmra.mxu0 %v2060
        %v2192 = vpop.f32.mrf.mxu0
        %v2193 = vadd.f32 %v1996, %v2192
        %v2194 = vpop.f32.mrf.mxu0
        %v2195 = vadd.f32 %v1996, %v2194
        %2196 = vmatmul.bf16.gmra.mxu0 %v2063
        %v2197 = vpop.f32.mrf.mxu0
        %v2198 = vadd.f32 %v1996, %v2197
        %v2199 = vpop.f32.mrf.mxu0
        %v2200 = vadd.f32 %v1996, %v2199
        %2201 = vmatmul.bf16.gmra.mxu0 %v2066
        %v2202 = vpop.f32.mrf.mxu0
        %v2203 = vadd.f32 %v1996, %v2202
        %v2204 = vpop.f32.mrf.mxu0
        %v2205 = vadd.f32 %v1996, %v2204
        %2206 = vmatmul.bf16.gmra.mxu0 %v2069
        %v2207 = vpop.f32.mrf.mxu0
        %v2208 = vadd.f32 %v1996, %v2207
        %v2209 = vpop.f32.mrf.mxu0
        %v2210 = vadd.f32 %v1996, %v2209
        %2211 = vmatmul.bf16.gmra.mxu0 %v2072
        %v2212 = vpop.f32.mrf.mxu0
        %v2213 = vadd.f32 %v1996, %v2212
        %v2214 = vpop.f32.mrf.mxu0
        %v2215 = vadd.f32 %v1996, %v2214
        %2216 = vmatmul.bf16.gmra.mxu0 %v2075
        %v2217 = vpop.f32.mrf.mxu0
        %v2218 = vadd.f32 %v1996, %v2217
        %v2219 = vpop.f32.mrf.mxu0
        %v2220 = vadd.f32 %v1996, %v2219
        %2221 = vmatmul.bf16.gmra.mxu0 %v2078
        %v2222 = vpop.f32.mrf.mxu0
        %v2223 = vadd.f32 %v1996, %v2222
        %v2224 = vpop.f32.mrf.mxu0
        %v2225 = vadd.f32 %v1996, %v2224
        %2226 = vmatmul.bf16.gmra.mxu0 %v2081
        %v2227 = vpop.f32.mrf.mxu0
        %v2228 = vadd.f32 %v1996, %v2227
        %v2229 = vpop.f32.mrf.mxu0
        %v2230 = vadd.f32 %v1996, %v2229
        %2231 = vmatmul.bf16.gmra.mxu0 %v2084
        %v2232 = vpop.f32.mrf.mxu0
        %v2233 = vadd.f32 %v1996, %v2232
        %v2234 = vpop.f32.mrf.mxu0
        %v2235 = vadd.f32 %v1996, %v2234
        %2236 = vmatmul.bf16.gmra.mxu0 %v2087
        %v2237 = vpop.f32.mrf.mxu0
        %v2238 = vadd.f32 %v1996, %v2237
        %v2239 = vpop.f32.mrf.mxu0
        %v2240 = vadd.f32 %v1996, %v2239
        %2241 = vmatmul.bf16.gmra.mxu0 %v2090
        %v2242 = vpop.f32.mrf.mxu0
        %v2243 = vadd.f32 %v1996, %v2242
        %v2244 = vpop.f32.mrf.mxu0
        %v2245 = vadd.f32 %v1996, %v2244
        %2246 = vmatmul.bf16.gmra.mxu0 %v2093
        %v2247 = vpop.f32.mrf.mxu0
        %v2248 = vadd.f32 %v1996, %v2247
        %v2249 = vpop.f32.mrf.mxu0
        %v2250 = vadd.f32 %v1996, %v2249
        %2251 = vmatmul.bf16.gmra.mxu0 %v2096
        %v2252 = vpop.f32.mrf.mxu0
        %v2253 = vadd.f32 %v1996, %v2252
        %v2254 = vpop.f32.mrf.mxu0
        %v2255 = vadd.f32 %v1996, %v2254
        %2256 = vmatmul.bf16.gmra.mxu0 %v2099
        %v2257 = vpop.f32.mrf.mxu0
        %v2258 = vadd.f32 %v1996, %v2257
        %v2259 = vpop.f32.mrf.mxu0
        %v2260 = vadd.f32 %v1996, %v2259
        %2261 = vmatmul.bf16.gmra.mxu0 %v2102
        %v2262 = vpop.f32.mrf.mxu0
        %v2263 = vadd.f32 %v1996, %v2262
        %v2264 = vpop.f32.mrf.mxu0
        %v2265 = vadd.f32 %v1996, %v2264
        %2266 = vmatmul.bf16.gmra.mxu0 %v2105
        %v2267 = vpop.f32.mrf.mxu0
        %v2268 = vadd.f32 %v1996, %v2267
        %v2269 = vpop.f32.mrf.mxu0
        %v2270 = vadd.f32 %v1996, %v2269
        %2271 = vmatmul.bf16.gmra.mxu0 %v2108
        %v2272 = vpop.f32.mrf.mxu0
        %v2273 = vadd.f32 %v1996, %v2272
        %v2274 = vpop.f32.mrf.mxu0
        %v2275 = vadd.f32 %v1996, %v2274
        %2276 = vmatmul.bf16.gmra.mxu0 %v2111
        %v2277 = vpop.f32.mrf.mxu0
        %v2278 = vadd.f32 %v1996, %v2277
        %v2279 = vpop.f32.mrf.mxu0
        %v2280 = vadd.f32 %v1996, %v2279
        %2281 = vdwg.mxu0
        %v2282 = vsel %vm2016, %v2123, -inf
        %v2283 = vsel %vm2016, %v2125, -inf
        %v2284 = vmax.f32 %v2282, %v2283
        %v2285 = vrot.slane %v2284, 4
        %v2286 = vmax.f32 %v2284, %v2285
        %v2287 = vrot.slane %v2286, 2
        %v2288 = vmax.f32 %v2286, %v2287
        %v2289 = vrot.slane %v2288, 1
        %v2290 = vmax.f32 %v2288, %v2289
        %v2291 = vsel %vm2016, %v2128, -inf
        %v2292 = vsel %vm2016, %v2130, -inf
        %v2293 = vmax.f32 %v2291, %v2292
        %v2294 = vrot.slane %v2293, 4
        %v2295 = vmax.f32 %v2293, %v2294
        %v2296 = vrot.slane %v2295, 2
        %v2297 = vmax.f32 %v2295, %v2296
        %v2298 = vrot.slane %v2297, 1
        %v2299 = vmax.f32 %v2297, %v2298
        %v2300 = vsel %vm2016, %v2133, -inf
        %v2301 = vsel %vm2016, %v2135, -inf
        %v2302 = vmax.f32 %v2300, %v2301
        %v2303 = vrot.slane %v2302, 4
        %v2304 = vmax.f32 %v2302, %v2303
        %v2305 = vrot.slane %v2304, 2
        %v2306 = vmax.f32 %v2304, %v2305
        %v2307 = vrot.slane %v2306, 1
        %v2308 = vmax.f32 %v2306, %v2307
        %v2309 = vsel %vm2016, %v2138, -inf
        %v2310 = vsel %vm2016, %v2140, -inf
        %v2311 = vmax.f32 %v2309, %v2310
        %v2312 = vrot.slane %v2311, 4
        %v2313 = vmax.f32 %v2311, %v2312
        %v2314 = vrot.slane %v2313, 2
        %v2315 = vmax.f32 %v2313, %v2314
        %v2316 = vrot.slane %v2315, 1
        %v2317 = vmax.f32 %v2315, %v2316
        %v2318 = vsel %vm2016, %v2143, -inf
        %v2319 = vsel %vm2016, %v2145, -inf
        %v2320 = vmax.f32 %v2318, %v2319
        %v2321 = vrot.slane %v2320, 4
        %v2322 = vmax.f32 %v2320, %v2321
        %v2323 = vrot.slane %v2322, 2
        %v2324 = vmax.f32 %v2322, %v2323
        %v2325 = vrot.slane %v2324, 1
        %v2326 = vmax.f32 %v2324, %v2325
        %v2327 = vsel %vm2016, %v2148, -inf
        %v2328 = vsel %vm2016, %v2150, -inf
        %v2329 = vmax.f32 %v2327, %v2328
        %v2330 = vrot.slane %v2329, 4
        %v2331 = vmax.f32 %v2329, %v2330
        %v2332 = vrot.slane %v2331, 2
        %v2333 = vmax.f32 %v2331, %v2332
        %v2334 = vrot.slane %v2333, 1
        %v2335 = vmax.f32 %v2333, %v2334
        %v2336 = vsel %vm2016, %v2153, -inf
        %v2337 = vsel %vm2016, %v2155, -inf
        %v2338 = vmax.f32 %v2336, %v2337
        %v2339 = vrot.slane %v2338, 4
        %v2340 = vmax.f32 %v2338, %v2339
        %v2341 = vrot.slane %v2340, 2
        %v2342 = vmax.f32 %v2340, %v2341
        %v2343 = vrot.slane %v2342, 1
        %v2344 = vmax.f32 %v2342, %v2343
        %v2345 = vsel %vm2016, %v2158, -inf
        %v2346 = vsel %vm2016, %v2160, -inf
        %v2347 = vmax.f32 %v2345, %v2346
        %v2348 = vrot.slane %v2347, 4
        %v2349 = vmax.f32 %v2347, %v2348
        %v2350 = vrot.slane %v2349, 2
        %v2351 = vmax.f32 %v2349, %v2350
        %v2352 = vrot.slane %v2351, 1
        %v2353 = vmax.f32 %v2351, %v2352
        %v2354 = vsel %vm2016, %v2163, -inf
        %v2355 = vsel %vm2016, %v2165, -inf
        %v2356 = vmax.f32 %v2354, %v2355
        %v2357 = vrot.slane %v2356, 4
        %v2358 = vmax.f32 %v2356, %v2357
        %v2359 = vrot.slane %v2358, 2
        %v2360 = vmax.f32 %v2358, %v2359
        %v2361 = vrot.slane %v2360, 1
        %v2362 = vmax.f32 %v2360, %v2361
        %v2363 = vsel %vm2016, %v2168, -inf
        %v2364 = vsel %vm2016, %v2170, -inf
        %v2365 = vmax.f32 %v2363, %v2364
        %v2366 = vrot.slane %v2365, 4
        %v2367 = vmax.f32 %v2365, %v2366
        %v2368 = vrot.slane %v2367, 2
        %v2369 = vmax.f32 %v2367, %v2368
        %v2370 = vrot.slane %v2369, 1
        %v2371 = vmax.f32 %v2369, %v2370
        %v2372 = vsel %vm2016, %v2173, -inf
        %v2373 = vsel %vm2016, %v2175, -inf
        %v2374 = vmax.f32 %v2372, %v2373
        %v2375 = vrot.slane %v2374, 4
        %v2376 = vmax.f32 %v2374, %v2375
        %v2377 = vrot.slane %v2376, 2
        %v2378 = vmax.f32 %v2376, %v2377
        %v2379 = vrot.slane %v2378, 1
        %v2380 = vmax.f32 %v2378, %v2379
        %v2381 = vsel %vm2016, %v2178, -inf
        %v2382 = vsel %vm2016, %v2180, -inf
        %v2383 = vmax.f32 %v2381, %v2382
        %v2384 = vrot.slane %v2383, 4
        %v2385 = vmax.f32 %v2383, %v2384
        %v2386 = vrot.slane %v2385, 2
        %v2387 = vmax.f32 %v2385, %v2386
        %v2388 = vrot.slane %v2387, 1
        %v2389 = vmax.f32 %v2387, %v2388
        %v2390 = vsel %vm2016, %v2183, -inf
        %v2391 = vsel %vm2016, %v2185, -inf
        %v2392 = vmax.f32 %v2390, %v2391
        %v2393 = vrot.slane %v2392, 4
        %v2394 = vmax.f32 %v2392, %v2393
        %v2395 = vrot.slane %v2394, 2
        %v2396 = vmax.f32 %v2394, %v2395
        %v2397 = vrot.slane %v2396, 1
        %v2398 = vmax.f32 %v2396, %v2397
        %v2399 = vsel %vm2016, %v2188, -inf
        %v2400 = vsel %vm2016, %v2190, -inf
        %v2401 = vmax.f32 %v2399, %v2400
        %v2402 = vrot.slane %v2401, 4
        %v2403 = vmax.f32 %v2401, %v2402
        %v2404 = vrot.slane %v2403, 2
        %v2405 = vmax.f32 %v2403, %v2404
        %v2406 = vrot.slane %v2405, 1
        %v2407 = vmax.f32 %v2405, %v2406
        %v2408 = vsel %vm2016, %v2193, -inf
        %v2409 = vsel %vm2016, %v2195, -inf
        %v2410 = vmax.f32 %v2408, %v2409
        %v2411 = vrot.slane %v2410, 4
        %v2412 = vmax.f32 %v2410, %v2411
        %v2413 = vrot.slane %v2412, 2
        %v2414 = vmax.f32 %v2412, %v2413
        %v2415 = vrot.slane %v2414, 1
        %v2416 = vmax.f32 %v2414, %v2415
        %v2417 = vsel %vm2016, %v2198, -inf
        %v2418 = vsel %vm2016, %v2200, -inf
        %v2419 = vmax.f32 %v2417, %v2418
        %v2420 = vrot.slane %v2419, 4
        %v2421 = vmax.f32 %v2419, %v2420
        %v2422 = vrot.slane %v2421, 2
        %v2423 = vmax.f32 %v2421, %v2422
        %v2424 = vrot.slane %v2423, 1
        %v2425 = vmax.f32 %v2423, %v2424
        %v2426 = vsel %vm2016, %v2203, -inf
        %v2427 = vsel %vm2016, %v2205, -inf
        %v2428 = vmax.f32 %v2426, %v2427
        %v2429 = vrot.slane %v2428, 4
        %v2430 = vmax.f32 %v2428, %v2429
        %v2431 = vrot.slane %v2430, 2
        %v2432 = vmax.f32 %v2430, %v2431
        %v2433 = vrot.slane %v2432, 1
        %v2434 = vmax.f32 %v2432, %v2433
        %v2435 = vsel %vm2016, %v2208, -inf
        %v2436 = vsel %vm2016, %v2210, -inf
        %v2437 = vmax.f32 %v2435, %v2436
        %v2438 = vrot.slane %v2437, 4
        %v2439 = vmax.f32 %v2437, %v2438
        %v2440 = vrot.slane %v2439, 2
        %v2441 = vmax.f32 %v2439, %v2440
        %v2442 = vrot.slane %v2441, 1
        %v2443 = vmax.f32 %v2441, %v2442
        %v2444 = vsel %vm2016, %v2213, -inf
        %v2445 = vsel %vm2016, %v2215, -inf
        %v2446 = vmax.f32 %v2444, %v2445
        %v2447 = vrot.slane %v2446, 4
        %v2448 = vmax.f32 %v2446, %v2447
        %v2449 = vrot.slane %v2448, 2
        %v2450 = vmax.f32 %v2448, %v2449
        %v2451 = vrot.slane %v2450, 1
        %v2452 = vmax.f32 %v2450, %v2451
        %v2453 = vsel %vm2016, %v2218, -inf
        %v2454 = vsel %vm2016, %v2220, -inf
        %v2455 = vmax.f32 %v2453, %v2454
        %v2456 = vrot.slane %v2455, 4
        %v2457 = vmax.f32 %v2455, %v2456
        %v2458 = vrot.slane %v2457, 2
        %v2459 = vmax.f32 %v2457, %v2458
        %v2460 = vrot.slane %v2459, 1
        %v2461 = vmax.f32 %v2459, %v2460
        %v2462 = vsel %vm2016, %v2223, -inf
        %v2463 = vsel %vm2016, %v2225, -inf
        %v2464 = vmax.f32 %v2462, %v2463
        %v2465 = vrot.slane %v2464, 4
        %v2466 = vmax.f32 %v2464, %v2465
        %v2467 = vrot.slane %v2466, 2
        %v2468 = vmax.f32 %v2466, %v2467
        %v2469 = vrot.slane %v2468, 1
        %v2470 = vmax.f32 %v2468, %v2469
        %v2471 = vsel %vm2016, %v2228, -inf
        %v2472 = vsel %vm2016, %v2230, -inf
        %v2473 = vmax.f32 %v2471, %v2472
        %v2474 = vrot.slane %v2473, 4
        %v2475 = vmax.f32 %v2473, %v2474
        %v2476 = vrot.slane %v2475, 2
        %v2477 = vmax.f32 %v2475, %v2476
        %v2478 = vrot.slane %v2477, 1
        %v2479 = vmax.f32 %v2477, %v2478
        %v2480 = vsel %vm2016, %v2233, -inf
        %v2481 = vsel %vm2016, %v2235, -inf
        %v2482 = vmax.f32 %v2480, %v2481
        %v2483 = vrot.slane %v2482, 4
        %v2484 = vmax.f32 %v2482, %v2483
        %v2485 = vrot.slane %v2484, 2
        %v2486 = vmax.f32 %v2484, %v2485
        %v2487 = vrot.slane %v2486, 1
        %v2488 = vmax.f32 %v2486, %v2487
        %v2489 = vsel %vm2016, %v2238, -inf
        %v2490 = vsel %vm2016, %v2240, -inf
        %v2491 = vmax.f32 %v2489, %v2490
        %v2492 = vrot.slane %v2491, 4
        %v2493 = vmax.f32 %v2491, %v2492
        %v2494 = vrot.slane %v2493, 2
        %v2495 = vmax.f32 %v2493, %v2494
        %v2496 = vrot.slane %v2495, 1
        %v2497 = vmax.f32 %v2495, %v2496
        %v2498 = vsel %vm2016, %v2243, -inf
        %v2499 = vsel %vm2016, %v2245, -inf
        %v2500 = vmax.f32 %v2498, %v2499
        %v2501 = vrot.slane %v2500, 4
        %v2502 = vmax.f32 %v2500, %v2501
        %v2503 = vrot.slane %v2502, 2
        %v2504 = vmax.f32 %v2502, %v2503
        %v2505 = vrot.slane %v2504, 1
        %v2506 = vmax.f32 %v2504, %v2505
        %v2507 = vsel %vm2016, %v2248, -inf
        %v2508 = vsel %vm2016, %v2250, -inf
        %v2509 = vmax.f32 %v2507, %v2508
        %v2510 = vrot.slane %v2509, 4
        %v2511 = vmax.f32 %v2509, %v2510
        %v2512 = vrot.slane %v2511, 2
        %v2513 = vmax.f32 %v2511, %v2512
        %v2514 = vrot.slane %v2513, 1
        %v2515 = vmax.f32 %v2513, %v2514
        %v2516 = vsel %vm2016, %v2253, -inf
        %v2517 = vsel %vm2016, %v2255, -inf
        %v2518 = vmax.f32 %v2516, %v2517
        %v2519 = vrot.slane %v2518, 4
        %v2520 = vmax.f32 %v2518, %v2519
        %v2521 = vrot.slane %v2520, 2
        %v2522 = vmax.f32 %v2520, %v2521
        %v2523 = vrot.slane %v2522, 1
        %v2524 = vmax.f32 %v2522, %v2523
        %v2525 = vsel %vm2016, %v2258, -inf
        %v2526 = vsel %vm2016, %v2260, -inf
        %v2527 = vmax.f32 %v2525, %v2526
        %v2528 = vrot.slane %v2527, 4
        %v2529 = vmax.f32 %v2527, %v2528
        %v2530 = vrot.slane %v2529, 2
        %v2531 = vmax.f32 %v2529, %v2530
        %v2532 = vrot.slane %v2531, 1
        %v2533 = vmax.f32 %v2531, %v2532
        %v2534 = vsel %vm2016, %v2263, -inf
        %v2535 = vsel %vm2016, %v2265, -inf
        %v2536 = vmax.f32 %v2534, %v2535
        %v2537 = vrot.slane %v2536, 4
        %v2538 = vmax.f32 %v2536, %v2537
        %v2539 = vrot.slane %v2538, 2
        %v2540 = vmax.f32 %v2538, %v2539
        %v2541 = vrot.slane %v2540, 1
        %v2542 = vmax.f32 %v2540, %v2541
        %v2543 = vsel %vm2016, %v2268, -inf
        %v2544 = vsel %vm2016, %v2270, -inf
        %v2545 = vmax.f32 %v2543, %v2544
        %v2546 = vrot.slane %v2545, 4
        %v2547 = vmax.f32 %v2545, %v2546
        %v2548 = vrot.slane %v2547, 2
        %v2549 = vmax.f32 %v2547, %v2548
        %v2550 = vrot.slane %v2549, 1
        %v2551 = vmax.f32 %v2549, %v2550
        %v2552 = vsel %vm2016, %v2273, -inf
        %v2553 = vsel %vm2016, %v2275, -inf
        %v2554 = vmax.f32 %v2552, %v2553
        %v2555 = vrot.slane %v2554, 4
        %v2556 = vmax.f32 %v2554, %v2555
        %v2557 = vrot.slane %v2556, 2
        %v2558 = vmax.f32 %v2556, %v2557
        %v2559 = vrot.slane %v2558, 1
        %v2560 = vmax.f32 %v2558, %v2559
        %v2561 = vsel %vm2016, %v2278, -inf
        %v2562 = vsel %vm2016, %v2280, -inf
        %v2563 = vmax.f32 %v2561, %v2562
        %v2564 = vrot.slane %v2563, 4
        %v2565 = vmax.f32 %v2563, %v2564
        %v2566 = vrot.slane %v2565, 2
        %v2567 = vmax.f32 %v2565, %v2566
        %v2568 = vrot.slane %v2567, 1
        %v2569 = vmax.f32 %v2567, %v2568
        %v2570 = vpack.c.bf16 %v2290, %v2290
        %v2571 = vpack.c.bf16 %v2299, %v2299
        %v2572 = vpack.c.bf16 %v2308, %v2308
        %v2573 = vpack.c.bf16 %v2317, %v2317
        %v2574 = vpack.c.bf16 %v2326, %v2326
        %v2575 = vpack.c.bf16 %v2335, %v2335
        %v2576 = vpack.c.bf16 %v2344, %v2344
        %v2577 = vpack.c.bf16 %v2353, %v2353
        %v2578 = vpack.c.bf16 %v2362, %v2362
        %v2579 = vpack.c.bf16 %v2371, %v2371
        %v2580 = vpack.c.bf16 %v2380, %v2380
        %v2581 = vpack.c.bf16 %v2389, %v2389
        %v2582 = vpack.c.bf16 %v2398, %v2398
        %v2583 = vpack.c.bf16 %v2407, %v2407
        %v2584 = vpack.c.bf16 %v2416, %v2416
        %v2585 = vpack.c.bf16 %v2425, %v2425
        %v2586 = vpack.c.bf16 %v2434, %v2434
        %v2587 = vpack.c.bf16 %v2443, %v2443
        %v2588 = vpack.c.bf16 %v2452, %v2452
        %v2589 = vpack.c.bf16 %v2461, %v2461
        %v2590 = vpack.c.bf16 %v2470, %v2470
        %v2591 = vpack.c.bf16 %v2479, %v2479
        %v2592 = vpack.c.bf16 %v2488, %v2488
        %v2593 = vpack.c.bf16 %v2497, %v2497
        %v2594 = vpack.c.bf16 %v2506, %v2506
        %v2595 = vpack.c.bf16 %v2515, %v2515
        %v2596 = vpack.c.bf16 %v2524, %v2524
        %v2597 = vpack.c.bf16 %v2533, %v2533
        %v2598 = vpack.c.bf16 %v2542, %v2542
        %v2599 = vpack.c.bf16 %v2551, %v2551
        %v2600 = vpack.c.bf16 %v2560, %v2560
        %v2601 = vpack.c.bf16 %v2569, %v2569
        %v2602 = vld [vmem:[%s7] sm:$0xf]
        %v2603 = vld [vmem:[%s7 + $0x4] sm:$0xf]
        %v2604 = vld [vmem:[%s7 + $0x8] sm:$0xf]
        %v2605 = vld [vmem:[%s7 + $0xc] sm:$0xf]
        %v2606 = vld [vmem:[%s7 + $0x10] sm:$0xf]
        %v2607 = vld [vmem:[%s7 + $0x14] sm:$0xf]
        %v2640 = vunpack.c.l.b16 %v2570
        %v2641 = vunpack.c.l.b16 %v2571
        %v2642 = vunpack.c.l.b16 %v2572
        %v2643 = vunpack.c.l.b16 %v2573
        %v2644 = vunpack.c.l.b16 %v2574
        %v2645 = vunpack.c.l.b16 %v2575
        %v2646 = vunpack.c.l.b16 %v2576
        %v2647 = vunpack.c.l.b16 %v2577
        %v2648 = vunpack.c.l.b16 %v2578
        %v2649 = vunpack.c.l.b16 %v2579
        %v2650 = vunpack.c.l.b16 %v2580
        %v2651 = vunpack.c.l.b16 %v2581
        %v2652 = vunpack.c.l.b16 %v2582
        %v2653 = vunpack.c.l.b16 %v2583
        %v2654 = vunpack.c.l.b16 %v2584
        %v2655 = vunpack.c.l.b16 %v2585
        %v2656 = vunpack.c.l.b16 %v2586
        %v2657 = vunpack.c.l.b16 %v2587
        %v2658 = vunpack.c.l.b16 %v2588
        %v2659 = vunpack.c.l.b16 %v2589
        %v2660 = vunpack.c.l.b16 %v2590
        %v2661 = vunpack.c.l.b16 %v2591
        %v2662 = vunpack.c.l.b16 %v2592
        %v2663 = vunpack.c.l.b16 %v2593
        %v2664 = vunpack.c.l.b16 %v2594
        %v2665 = vunpack.c.l.b16 %v2595
        %v2666 = vunpack.c.l.b16 %v2596
        %v2667 = vunpack.c.l.b16 %v2597
        %v2668 = vunpack.c.l.b16 %v2598
        %v2669 = vunpack.c.l.b16 %v2599
        %v2670 = vunpack.c.l.b16 %v2600
        %v2671 = vunpack.c.l.b16 %v2601
        %vm2672 = vcmask 1041409
        %v2673 = vsel %vm2672, %v2641, %v2640
        %vm2674 = vcmask 1042434
        %v2675 = vsel %vm2674, %v2642, %v2673
        %vm2676 = vcmask 1043459
        %v2677 = vsel %vm2676, %v2643, %v2675
        %vm2678 = vcmask 1044484
        %v2679 = vsel %vm2678, %v2644, %v2677
        %vm2680 = vcmask 1045509
        %v2681 = vsel %vm2680, %v2645, %v2679
        %vm2682 = vcmask 1046534
        %v2683 = vsel %vm2682, %v2646, %v2681
        %vm2684 = vcmask 1047559
        %v2685 = vsel %vm2684, %v2647, %v2683
        %v2686 = vsel %vm2672, %v2649, %v2648
        %v2687 = vsel %vm2674, %v2650, %v2686
        %v2688 = vsel %vm2676, %v2651, %v2687
        %v2689 = vsel %vm2678, %v2652, %v2688
        %v2690 = vsel %vm2680, %v2653, %v2689
        %v2691 = vsel %vm2682, %v2654, %v2690
        %v2692 = vsel %vm2684, %v2655, %v2691
        %v2693 = vsel %vm2672, %v2657, %v2656
        %v2694 = vsel %vm2674, %v2658, %v2693
        %v2695 = vsel %vm2676, %v2659, %v2694
        %v2696 = vsel %vm2678, %v2660, %v2695
        %v2697 = vsel %vm2680, %v2661, %v2696
        %v2698 = vsel %vm2682, %v2662, %v2697
        %v2699 = vsel %vm2684, %v2663, %v2698
        %v2700 = vsel %vm2672, %v2665, %v2664
        %v2701 = vsel %vm2674, %v2666, %v2700
        %v2702 = vsel %vm2676, %v2667, %v2701
        %v2703 = vsel %vm2678, %v2668, %v2702
        %v2704 = vsel %vm2680, %v2669, %v2703
        %v2705 = vsel %vm2682, %v2670, %v2704
        %v2706 = vsel %vm2684, %v2671, %v2705
        %v2707 = vpack.c.b16 %v2692, %v2685
        %v2708 = vpack.c.b16 %v2706, %v2699
        %v2715 = vunpack.c.l.b16 %v2602
        %v2716 = vunpack.c.l.b16 %v2603
        %v2717 = vunpack.c.l.b16 %v2604
        %v2718 = vunpack.c.l.b16 %v2605
        %v2719 = vunpack.c.l.b16 %v2606
        %v2720 = vunpack.c.l.b16 %v2607
        %v2721 = vpack.c.b16 %v2716, %v2715
        %v2722 = vpack.c.b16 %v2718, %v2717
        %v2723 = vpack.c.b16 %v2720, %v2719
        %v2728 = vsel %vm2016, %v2707, 0
        %v2731 = vsel %vm2016, %v2708, 0
        %2733 = vmatpush.bf16.msra.mxu0 0
        %2734 = vmatpush.bf16.msra.mxu0 0
        %2735 = vmatpush.bf16.msra.mxu0 0
        %2736 = vmatpush.bf16.msra.mxu0 0
        %2737 = vmatpush.bf16.msra.mxu0 0
        %2738 = vmatpush.bf16.msra.mxu0 %v2723
        %2739 = vmatpush.bf16.msra.mxu0 %v2722
        %2740 = vmatpush.bf16.msra.mxu0 %v2721
        %2741 = vmatmul.bf16.gmra.mxu0 %v2728
        %v2742 = vpop.f32.mrf.mxu0
        %v2743 = vadd.f32 0.0, %v2742
        %v2744 = vpop.f32.mrf.mxu0
        %v2745 = vadd.f32 0.0, %v2744
        %2746 = vmatmul.bf16.gmra.mxu0 %v2731
        %v2747 = vpop.f32.mrf.mxu0
        %v2748 = vadd.f32 0.0, %v2747
        %v2749 = vpop.f32.mrf.mxu0
        %v2750 = vadd.f32 0.0, %v2749
        %2751 = vdwg.mxu0
        %v2752 = vpack.c.bf16 %v2125, %v2123
        %v2753 = vpack.c.bf16 %v2130, %v2128
        %v2754 = vpack.c.bf16 %v2135, %v2133
        %v2755 = vpack.c.bf16 %v2140, %v2138
        %v2756 = vpack.c.bf16 %v2145, %v2143
        %v2757 = vpack.c.bf16 %v2150, %v2148
        %v2758 = vpack.c.bf16 %v2155, %v2153
        %v2759 = vpack.c.bf16 %v2160, %v2158
        %v2760 = vpack.c.bf16 %v2165, %v2163
        %v2761 = vpack.c.bf16 %v2170, %v2168
        %v2762 = vpack.c.bf16 %v2175, %v2173
        %v2763 = vpack.c.bf16 %v2180, %v2178
        %v2764 = vpack.c.bf16 %v2185, %v2183
        %v2765 = vpack.c.bf16 %v2190, %v2188
        %v2766 = vpack.c.bf16 %v2195, %v2193
        %v2767 = vpack.c.bf16 %v2200, %v2198
        %v2768 = vpack.c.bf16 %v2205, %v2203
        %v2769 = vpack.c.bf16 %v2210, %v2208
        %v2770 = vpack.c.bf16 %v2215, %v2213
        %v2771 = vpack.c.bf16 %v2220, %v2218
        %v2772 = vpack.c.bf16 %v2225, %v2223
        %v2773 = vpack.c.bf16 %v2230, %v2228
        %v2774 = vpack.c.bf16 %v2235, %v2233
        %v2775 = vpack.c.bf16 %v2240, %v2238
        %v2776 = vpack.c.bf16 %v2245, %v2243
        %v2777 = vpack.c.bf16 %v2250, %v2248
        %v2778 = vpack.c.bf16 %v2255, %v2253
        %v2779 = vpack.c.bf16 %v2260, %v2258
        %v2780 = vpack.c.bf16 %v2265, %v2263
        %v2781 = vpack.c.bf16 %v2270, %v2268
        %v2782 = vpack.c.bf16 %v2275, %v2273
        %v2783 = vpack.c.bf16 %v2280, %v2278
        %v2784 = vld [vmem:[%s8] sm:$0xf]
        %v2785 = vld [vmem:[%s8 + $0x4] sm:$0xf]
        %v2786 = vld [vmem:[%s8 + $0x8] sm:$0xf]
        %v2787 = vld [vmem:[%s8 + $0xc] sm:$0xf]
        %v2788 = vld [vmem:[%s8 + $0x10] sm:$0xf]
        %v2789 = vld [vmem:[%s8 + $0x14] sm:$0xf]
        %v2796 = vunpack.c.l.b16 %v2784
        %v2797 = vunpack.c.l.b16 %v2785
        %v2798 = vunpack.c.l.b16 %v2786
        %v2799 = vunpack.c.l.b16 %v2787
        %v2800 = vunpack.c.l.b16 %v2788
        %v2801 = vunpack.c.l.b16 %v2789
        %v2802 = vpack.c.b16 %v2797, %v2796
        %v2803 = vpack.c.b16 %v2799, %v2798
        %v2804 = vpack.c.b16 %v2801, %v2800
        %v2809 = vsel %vm2016, %v2752, 0
        %v2812 = vsel %vm2016, %v2753, 0
        %v2815 = vsel %vm2016, %v2754, 0
        %v2818 = vsel %vm2016, %v2755, 0
        %v2821 = vsel %vm2016, %v2756, 0
        %v2824 = vsel %vm2016, %v2757, 0
        %v2827 = vsel %vm2016, %v2758, 0
        %v2830 = vsel %vm2016, %v2759, 0
        %v2833 = vsel %vm2016, %v2760, 0
        %v2836 = vsel %vm2016, %v2761, 0
        %v2839 = vsel %vm2016, %v2762, 0
        %v2842 = vsel %vm2016, %v2763, 0
        %v2845 = vsel %vm2016, %v2764, 0
        %v2848 = vsel %vm2016, %v2765, 0
        %v2851 = vsel %vm2016, %v2766, 0
        %v2854 = vsel %vm2016, %v2767, 0
        %v2857 = vsel %vm2016, %v2768, 0
        %v2860 = vsel %vm2016, %v2769, 0
        %v2863 = vsel %vm2016, %v2770, 0
        %v2866 = vsel %vm2016, %v2771, 0
        %v2869 = vsel %vm2016, %v2772, 0
        %v2872 = vsel %vm2016, %v2773, 0
        %v2875 = vsel %vm2016, %v2774, 0
        %v2878 = vsel %vm2016, %v2775, 0
        %v2881 = vsel %vm2016, %v2776, 0
        %v2884 = vsel %vm2016, %v2777, 0
        %v2887 = vsel %vm2016, %v2778, 0
        %v2890 = vsel %vm2016, %v2779, 0
        %v2893 = vsel %vm2016, %v2780, 0
        %v2896 = vsel %vm2016, %v2781, 0
        %v2899 = vsel %vm2016, %v2782, 0
        %v2902 = vsel %vm2016, %v2783, 0
        %2904 = vmatpush.bf16.msra.mxu0 0
        %2905 = vmatpush.bf16.msra.mxu0 0
        %2906 = vmatpush.bf16.msra.mxu0 0
        %2907 = vmatpush.bf16.msra.mxu0 0
        %2908 = vmatpush.bf16.msra.mxu0 0
        %2909 = vmatpush.bf16.msra.mxu0 %v2804
        %2910 = vmatpush.bf16.msra.mxu0 %v2803
        %2911 = vmatpush.bf16.msra.mxu0 %v2802
        %2912 = vmatmul.bf16.gmra.mxu0 %v2809
        %v2913 = vpop.f32.mrf.mxu0
        %v2914 = vadd.f32 0.0, %v2913
        %v2915 = vpop.f32.mrf.mxu0
        %v2916 = vadd.f32 0.0, %v2915
        %2917 = vmatmul.bf16.gmra.mxu0 %v2812
        %v2918 = vpop.f32.mrf.mxu0
        %v2919 = vadd.f32 0.0, %v2918
        %v2920 = vpop.f32.mrf.mxu0
        %v2921 = vadd.f32 0.0, %v2920
        %2922 = vmatmul.bf16.gmra.mxu0 %v2815
        %v2923 = vpop.f32.mrf.mxu0
        %v2924 = vadd.f32 0.0, %v2923
        %v2925 = vpop.f32.mrf.mxu0
        %v2926 = vadd.f32 0.0, %v2925
        %2927 = vmatmul.bf16.gmra.mxu0 %v2818
        %v2928 = vpop.f32.mrf.mxu0
        %v2929 = vadd.f32 0.0, %v2928
        %v2930 = vpop.f32.mrf.mxu0
        %v2931 = vadd.f32 0.0, %v2930
        %2932 = vmatmul.bf16.gmra.mxu0 %v2821
        %v2933 = vpop.f32.mrf.mxu0
        %v2934 = vadd.f32 0.0, %v2933
        %v2935 = vpop.f32.mrf.mxu0
        %v2936 = vadd.f32 0.0, %v2935
        %2937 = vmatmul.bf16.gmra.mxu0 %v2824
        %v2938 = vpop.f32.mrf.mxu0
        %v2939 = vadd.f32 0.0, %v2938
        %v2940 = vpop.f32.mrf.mxu0
        %v2941 = vadd.f32 0.0, %v2940
        %2942 = vmatmul.bf16.gmra.mxu0 %v2827
        %v2943 = vpop.f32.mrf.mxu0
        %v2944 = vadd.f32 0.0, %v2943
        %v2945 = vpop.f32.mrf.mxu0
        %v2946 = vadd.f32 0.0, %v2945
        %2947 = vmatmul.bf16.gmra.mxu0 %v2830
        %v2948 = vpop.f32.mrf.mxu0
        %v2949 = vadd.f32 0.0, %v2948
        %v2950 = vpop.f32.mrf.mxu0
        %v2951 = vadd.f32 0.0, %v2950
        %2952 = vmatmul.bf16.gmra.mxu0 %v2833
        %v2953 = vpop.f32.mrf.mxu0
        %v2954 = vadd.f32 0.0, %v2953
        %v2955 = vpop.f32.mrf.mxu0
        %v2956 = vadd.f32 0.0, %v2955
        %2957 = vmatmul.bf16.gmra.mxu0 %v2836
        %v2958 = vpop.f32.mrf.mxu0
        %v2959 = vadd.f32 0.0, %v2958
        %v2960 = vpop.f32.mrf.mxu0
        %v2961 = vadd.f32 0.0, %v2960
        %2962 = vmatmul.bf16.gmra.mxu0 %v2839
        %v2963 = vpop.f32.mrf.mxu0
        %v2964 = vadd.f32 0.0, %v2963
        %v2965 = vpop.f32.mrf.mxu0
        %v2966 = vadd.f32 0.0, %v2965
        %2967 = vmatmul.bf16.gmra.mxu0 %v2842
        %v2968 = vpop.f32.mrf.mxu0
        %v2969 = vadd.f32 0.0, %v2968
        %v2970 = vpop.f32.mrf.mxu0
        %v2971 = vadd.f32 0.0, %v2970
        %2972 = vmatmul.bf16.gmra.mxu0 %v2845
        %v2973 = vpop.f32.mrf.mxu0
        %v2974 = vadd.f32 0.0, %v2973
        %v2975 = vpop.f32.mrf.mxu0
        %v2976 = vadd.f32 0.0, %v2975
        %2977 = vmatmul.bf16.gmra.mxu0 %v2848
        %v2978 = vpop.f32.mrf.mxu0
        %v2979 = vadd.f32 0.0, %v2978
        %v2980 = vpop.f32.mrf.mxu0
        %v2981 = vadd.f32 0.0, %v2980
        %2982 = vmatmul.bf16.gmra.mxu0 %v2851
        %v2983 = vpop.f32.mrf.mxu0
        %v2984 = vadd.f32 0.0, %v2983
        %v2985 = vpop.f32.mrf.mxu0
        %v2986 = vadd.f32 0.0, %v2985
        %2987 = vmatmul.bf16.gmra.mxu0 %v2854
        %v2988 = vpop.f32.mrf.mxu0
        %v2989 = vadd.f32 0.0, %v2988
        %v2990 = vpop.f32.mrf.mxu0
        %v2991 = vadd.f32 0.0, %v2990
        %2992 = vmatmul.bf16.gmra.mxu0 %v2857
        %v2993 = vpop.f32.mrf.mxu0
        %v2994 = vadd.f32 0.0, %v2993
        %v2995 = vpop.f32.mrf.mxu0
        %v2996 = vadd.f32 0.0, %v2995
        %2997 = vmatmul.bf16.gmra.mxu0 %v2860
        %v2998 = vpop.f32.mrf.mxu0
        %v2999 = vadd.f32 0.0, %v2998
        %v3000 = vpop.f32.mrf.mxu0
        %v3001 = vadd.f32 0.0, %v3000
        %3002 = vmatmul.bf16.gmra.mxu0 %v2863
        %v3003 = vpop.f32.mrf.mxu0
        %v3004 = vadd.f32 0.0, %v3003
        %v3005 = vpop.f32.mrf.mxu0
        %v3006 = vadd.f32 0.0, %v3005
        %3007 = vmatmul.bf16.gmra.mxu0 %v2866
        %v3008 = vpop.f32.mrf.mxu0
        %v3009 = vadd.f32 0.0, %v3008
        %v3010 = vpop.f32.mrf.mxu0
        %v3011 = vadd.f32 0.0, %v3010
        %3012 = vmatmul.bf16.gmra.mxu0 %v2869
        %v3013 = vpop.f32.mrf.mxu0
        %v3014 = vadd.f32 0.0, %v3013
        %v3015 = vpop.f32.mrf.mxu0
        %v3016 = vadd.f32 0.0, %v3015
        %3017 = vmatmul.bf16.gmra.mxu0 %v2872
        %v3018 = vpop.f32.mrf.mxu0
        %v3019 = vadd.f32 0.0, %v3018
        %v3020 = vpop.f32.mrf.mxu0
        %v3021 = vadd.f32 0.0, %v3020
        %3022 = vmatmul.bf16.gmra.mxu0 %v2875
        %v3023 = vpop.f32.mrf.mxu0
        %v3024 = vadd.f32 0.0, %v3023
        %v3025 = vpop.f32.mrf.mxu0
        %v3026 = vadd.f32 0.0, %v3025
        %3027 = vmatmul.bf16.gmra.mxu0 %v2878
        %v3028 = vpop.f32.mrf.mxu0
        %v3029 = vadd.f32 0.0, %v3028
        %v3030 = vpop.f32.mrf.mxu0
        %v3031 = vadd.f32 0.0, %v3030
        %3032 = vmatmul.bf16.gmra.mxu0 %v2881
        %v3033 = vpop.f32.mrf.mxu0
        %v3034 = vadd.f32 0.0, %v3033
        %v3035 = vpop.f32.mrf.mxu0
        %v3036 = vadd.f32 0.0, %v3035
        %3037 = vmatmul.bf16.gmra.mxu0 %v2884
        %v3038 = vpop.f32.mrf.mxu0
        %v3039 = vadd.f32 0.0, %v3038
        %v3040 = vpop.f32.mrf.mxu0
        %v3041 = vadd.f32 0.0, %v3040
        %3042 = vmatmul.bf16.gmra.mxu0 %v2887
        %v3043 = vpop.f32.mrf.mxu0
        %v3044 = vadd.f32 0.0, %v3043
        %v3045 = vpop.f32.mrf.mxu0
        %v3046 = vadd.f32 0.0, %v3045
        %3047 = vmatmul.bf16.gmra.mxu0 %v2890
        %v3048 = vpop.f32.mrf.mxu0
        %v3049 = vadd.f32 0.0, %v3048
        %v3050 = vpop.f32.mrf.mxu0
        %v3051 = vadd.f32 0.0, %v3050
        %3052 = vmatmul.bf16.gmra.mxu0 %v2893
        %v3053 = vpop.f32.mrf.mxu0
        %v3054 = vadd.f32 0.0, %v3053
        %v3055 = vpop.f32.mrf.mxu0
        %v3056 = vadd.f32 0.0, %v3055
        %3057 = vmatmul.bf16.gmra.mxu0 %v2896
        %v3058 = vpop.f32.mrf.mxu0
        %v3059 = vadd.f32 0.0, %v3058
        %v3060 = vpop.f32.mrf.mxu0
        %v3061 = vadd.f32 0.0, %v3060
        %3062 = vmatmul.bf16.gmra.mxu0 %v2899
        %v3063 = vpop.f32.mrf.mxu0
        %v3064 = vadd.f32 0.0, %v3063
        %v3065 = vpop.f32.mrf.mxu0
        %v3066 = vadd.f32 0.0, %v3065
        %3067 = vmatmul.bf16.gmra.mxu0 %v2902
        %v3068 = vpop.f32.mrf.mxu0
        %v3069 = vadd.f32 0.0, %v3068
        %v3070 = vpop.f32.mrf.mxu0
        %v3071 = vadd.f32 0.0, %v3070
        %3072 = vdwg.mxu0
        %v3077 = vrot.slane %v2743, 1
        %v3078 = vrot.slane %v2743, 2
        %v3079 = vrot.slane %v2743, 3
        %v3080 = vrot.slane %v2743, 4
        %v3081 = vrot.slane %v2743, 5
        %v3082 = vrot.slane %v2743, 6
        %v3083 = vrot.slane %v2743, 7
        %v3084 = vrot.slane %v2745, 1
        %v3085 = vrot.slane %v2745, 2
        %v3086 = vrot.slane %v2745, 3
        %v3087 = vrot.slane %v2745, 4
        %v3088 = vrot.slane %v2745, 5
        %v3089 = vrot.slane %v2745, 6
        %v3090 = vrot.slane %v2745, 7
        %v3091 = vrot.slane %v2748, 1
        %v3092 = vrot.slane %v2748, 2
        %v3093 = vrot.slane %v2748, 3
        %v3094 = vrot.slane %v2748, 4
        %v3095 = vrot.slane %v2748, 5
        %v3096 = vrot.slane %v2748, 6
        %v3097 = vrot.slane %v2748, 7
        %v3098 = vrot.slane %v2750, 1
        %v3099 = vrot.slane %v2750, 2
        %v3100 = vrot.slane %v2750, 3
        %v3101 = vrot.slane %v2750, 4
        %v3102 = vrot.slane %v2750, 5
        %v3103 = vrot.slane %v2750, 6
        %v3104 = vrot.slane %v2750, 7
        %v3105 = vperm.slane %v2743, 0
        %v3106 = vperm.slane %v3077, 0
        %v3107 = vperm.slane %v3078, 0
        %v3108 = vperm.slane %v3079, 0
        %v3109 = vperm.slane %v3080, 0
        %v3110 = vperm.slane %v3081, 0
        %v3111 = vperm.slane %v3082, 0
        %v3112 = vperm.slane %v3083, 0
        %v3113 = vperm.slane %v2745, 0
        %v3114 = vperm.slane %v3084, 0
        %v3115 = vperm.slane %v3085, 0
        %v3116 = vperm.slane %v3086, 0
        %v3117 = vperm.slane %v3087, 0
        %v3118 = vperm.slane %v3088, 0
        %v3119 = vperm.slane %v3089, 0
        %v3120 = vperm.slane %v3090, 0
        %v3121 = vperm.slane %v2748, 0
        %v3122 = vperm.slane %v3091, 0
        %v3123 = vperm.slane %v3092, 0
        %v3124 = vperm.slane %v3093, 0
        %v3125 = vperm.slane %v3094, 0
        %v3126 = vperm.slane %v3095, 0
        %v3127 = vperm.slane %v3096, 0
        %v3128 = vperm.slane %v3097, 0
        %v3129 = vperm.slane %v2750, 0
        %v3130 = vperm.slane %v3098, 0
        %v3131 = vperm.slane %v3099, 0
        %v3132 = vperm.slane %v3100, 0
        %v3133 = vperm.slane %v3101, 0
        %v3134 = vperm.slane %v3102, 0
        %v3135 = vperm.slane %v3103, 0
        %v3136 = vperm.slane %v3104, 0
        %v3169 = vadd.f32 %v2914, %v3105
        %v3170 = vadd.f32 %v2916, %v3105
        %v3171 = vadd.f32 %v2919, %v3106
        %v3172 = vadd.f32 %v2921, %v3106
        %v3173 = vadd.f32 %v2924, %v3107
        %v3174 = vadd.f32 %v2926, %v3107
        %v3175 = vadd.f32 %v2929, %v3108
        %v3176 = vadd.f32 %v2931, %v3108
        %v3177 = vadd.f32 %v2934, %v3109
        %v3178 = vadd.f32 %v2936, %v3109
        %v3179 = vadd.f32 %v2939, %v3110
        %v3180 = vadd.f32 %v2941, %v3110
        %v3181 = vadd.f32 %v2944, %v3111
        %v3182 = vadd.f32 %v2946, %v3111
        %v3183 = vadd.f32 %v2949, %v3112
        %v3184 = vadd.f32 %v2951, %v3112
        %v3185 = vadd.f32 %v2954, %v3113
        %v3186 = vadd.f32 %v2956, %v3113
        %v3187 = vadd.f32 %v2959, %v3114
        %v3188 = vadd.f32 %v2961, %v3114
        %v3189 = vadd.f32 %v2964, %v3115
        %v3190 = vadd.f32 %v2966, %v3115
        %v3191 = vadd.f32 %v2969, %v3116
        %v3192 = vadd.f32 %v2971, %v3116
        %v3193 = vadd.f32 %v2974, %v3117
        %v3194 = vadd.f32 %v2976, %v3117
        %v3195 = vadd.f32 %v2979, %v3118
        %v3196 = vadd.f32 %v2981, %v3118
        %v3197 = vadd.f32 %v2984, %v3119
        %v3198 = vadd.f32 %v2986, %v3119
        %v3199 = vadd.f32 %v2989, %v3120
        %v3200 = vadd.f32 %v2991, %v3120
        %v3201 = vadd.f32 %v2994, %v3121
        %v3202 = vadd.f32 %v2996, %v3121
        %v3203 = vadd.f32 %v2999, %v3122
        %v3204 = vadd.f32 %v3001, %v3122
        %v3205 = vadd.f32 %v3004, %v3123
        %v3206 = vadd.f32 %v3006, %v3123
        %v3207 = vadd.f32 %v3009, %v3124
        %v3208 = vadd.f32 %v3011, %v3124
        %v3209 = vadd.f32 %v3014, %v3125
        %v3210 = vadd.f32 %v3016, %v3125
        %v3211 = vadd.f32 %v3019, %v3126
        %v3212 = vadd.f32 %v3021, %v3126
        %v3213 = vadd.f32 %v3024, %v3127
        %v3214 = vadd.f32 %v3026, %v3127
        %v3215 = vadd.f32 %v3029, %v3128
        %v3216 = vadd.f32 %v3031, %v3128
        %v3217 = vadd.f32 %v3034, %v3129
        %v3218 = vadd.f32 %v3036, %v3129
        %v3219 = vadd.f32 %v3039, %v3130
        %v3220 = vadd.f32 %v3041, %v3130
        %v3221 = vadd.f32 %v3044, %v3131
        %v3222 = vadd.f32 %v3046, %v3131
        %v3223 = vadd.f32 %v3049, %v3132
        %v3224 = vadd.f32 %v3051, %v3132
        %v3225 = vadd.f32 %v3054, %v3133
        %v3226 = vadd.f32 %v3056, %v3133
        %v3227 = vadd.f32 %v3059, %v3134
        %v3228 = vadd.f32 %v3061, %v3134
        %v3229 = vadd.f32 %v3064, %v3135
        %v3230 = vadd.f32 %v3066, %v3135
        %v3231 = vadd.f32 %v3069, %v3136
        %v3232 = vadd.f32 %v3071, %v3136
        %v3233 = vld [vmem:[%s9] sm:$0x1]
        %v3235 = vperm.slane %v3233, 0
        %v3237 = vadd.f32 %v3169, %v3235
        %v3238 = vadd.f32 %v3170, %v3235
        %v3239 = vadd.f32 %v3171, %v3235
        %v3240 = vadd.f32 %v3172, %v3235
        %v3241 = vadd.f32 %v3173, %v3235
        %v3242 = vadd.f32 %v3174, %v3235
        %v3243 = vadd.f32 %v3175, %v3235
        %v3244 = vadd.f32 %v3176, %v3235
        %v3245 = vadd.f32 %v3177, %v3235
        %v3246 = vadd.f32 %v3178, %v3235
        %v3247 = vadd.f32 %v3179, %v3235
        %v3248 = vadd.f32 %v3180, %v3235
        %v3249 = vadd.f32 %v3181, %v3235
        %v3250 = vadd.f32 %v3182, %v3235
        %v3251 = vadd.f32 %v3183, %v3235
        %v3252 = vadd.f32 %v3184, %v3235
        %v3253 = vadd.f32 %v3185, %v3235
        %v3254 = vadd.f32 %v3186, %v3235
        %v3255 = vadd.f32 %v3187, %v3235
        %v3256 = vadd.f32 %v3188, %v3235
        %v3257 = vadd.f32 %v3189, %v3235
        %v3258 = vadd.f32 %v3190, %v3235
        %v3259 = vadd.f32 %v3191, %v3235
        %v3260 = vadd.f32 %v3192, %v3235
        %v3261 = vadd.f32 %v3193, %v3235
        %v3262 = vadd.f32 %v3194, %v3235
        %v3263 = vadd.f32 %v3195, %v3235
        %v3264 = vadd.f32 %v3196, %v3235
        %v3265 = vadd.f32 %v3197, %v3235
        %v3266 = vadd.f32 %v3198, %v3235
        %v3267 = vadd.f32 %v3199, %v3235
        %v3268 = vadd.f32 %v3200, %v3235
        %v3269 = vadd.f32 %v3201, %v3235
        %v3270 = vadd.f32 %v3202, %v3235
        %v3271 = vadd.f32 %v3203, %v3235
        %v3272 = vadd.f32 %v3204, %v3235
        %v3273 = vadd.f32 %v3205, %v3235
        %v3274 = vadd.f32 %v3206, %v3235
        %v3275 = vadd.f32 %v3207, %v3235
        %v3276 = vadd.f32 %v3208, %v3235
        %v3277 = vadd.f32 %v3209, %v3235
        %v3278 = vadd.f32 %v3210, %v3235
        %v3279 = vadd.f32 %v3211, %v3235
        %v3280 = vadd.f32 %v3212, %v3235
        %v3281 = vadd.f32 %v3213, %v3235
        %v3282 = vadd.f32 %v3214, %v3235
        %v3283 = vadd.f32 %v3215, %v3235
        %v3284 = vadd.f32 %v3216, %v3235
        %v3285 = vadd.f32 %v3217, %v3235
        %v3286 = vadd.f32 %v3218, %v3235
        %v3287 = vadd.f32 %v3219, %v3235
        %v3288 = vadd.f32 %v3220, %v3235
        %v3289 = vadd.f32 %v3221, %v3235
        %v3290 = vadd.f32 %v3222, %v3235
        %v3291 = vadd.f32 %v3223, %v3235
        %v3292 = vadd.f32 %v3224, %v3235
        %v3293 = vadd.f32 %v3225, %v3235
        %v3294 = vadd.f32 %v3226, %v3235
        %v3295 = vadd.f32 %v3227, %v3235
        %v3296 = vadd.f32 %v3228, %v3235
        %v3297 = vadd.f32 %v3229, %v3235
        %v3298 = vadd.f32 %v3230, %v3235
        %v3299 = vadd.f32 %v3231, %v3235
        %v3300 = vadd.f32 %v3232, %v3235
        %v3301 = vld [vmem:[%s10] sm:$0x1]
        %v3303 = vperm.slane %v3301, 0
        %v3305 = vmul.f32 %v3237, %v3303
        %v3306 = vmul.f32 %v3238, %v3303
        %v3307 = vmul.f32 %v3239, %v3303
        %v3308 = vmul.f32 %v3240, %v3303
        %v3309 = vmul.f32 %v3241, %v3303
        %v3310 = vmul.f32 %v3242, %v3303
        %v3311 = vmul.f32 %v3243, %v3303
        %v3312 = vmul.f32 %v3244, %v3303
        %v3313 = vmul.f32 %v3245, %v3303
        %v3314 = vmul.f32 %v3246, %v3303
        %v3315 = vmul.f32 %v3247, %v3303
        %v3316 = vmul.f32 %v3248, %v3303
        %v3317 = vmul.f32 %v3249, %v3303
        %v3318 = vmul.f32 %v3250, %v3303
        %v3319 = vmul.f32 %v3251, %v3303
        %v3320 = vmul.f32 %v3252, %v3303
        %v3321 = vmul.f32 %v3253, %v3303
        %v3322 = vmul.f32 %v3254, %v3303
        %v3323 = vmul.f32 %v3255, %v3303
        %v3324 = vmul.f32 %v3256, %v3303
        %v3325 = vmul.f32 %v3257, %v3303
        %v3326 = vmul.f32 %v3258, %v3303
        %v3327 = vmul.f32 %v3259, %v3303
        %v3328 = vmul.f32 %v3260, %v3303
        %v3329 = vmul.f32 %v3261, %v3303
        %v3330 = vmul.f32 %v3262, %v3303
        %v3331 = vmul.f32 %v3263, %v3303
        %v3332 = vmul.f32 %v3264, %v3303
        %v3333 = vmul.f32 %v3265, %v3303
        %v3334 = vmul.f32 %v3266, %v3303
        %v3335 = vmul.f32 %v3267, %v3303
        %v3336 = vmul.f32 %v3268, %v3303
        %v3337 = vmul.f32 %v3269, %v3303
        %v3338 = vmul.f32 %v3270, %v3303
        %v3339 = vmul.f32 %v3271, %v3303
        %v3340 = vmul.f32 %v3272, %v3303
        %v3341 = vmul.f32 %v3273, %v3303
        %v3342 = vmul.f32 %v3274, %v3303
        %v3343 = vmul.f32 %v3275, %v3303
        %v3344 = vmul.f32 %v3276, %v3303
        %v3345 = vmul.f32 %v3277, %v3303
        %v3346 = vmul.f32 %v3278, %v3303
        %v3347 = vmul.f32 %v3279, %v3303
        %v3348 = vmul.f32 %v3280, %v3303
        %v3349 = vmul.f32 %v3281, %v3303
        %v3350 = vmul.f32 %v3282, %v3303
        %v3351 = vmul.f32 %v3283, %v3303
        %v3352 = vmul.f32 %v3284, %v3303
        %v3353 = vmul.f32 %v3285, %v3303
        %v3354 = vmul.f32 %v3286, %v3303
        %v3355 = vmul.f32 %v3287, %v3303
        %v3356 = vmul.f32 %v3288, %v3303
        %v3357 = vmul.f32 %v3289, %v3303
        %v3358 = vmul.f32 %v3290, %v3303
        %v3359 = vmul.f32 %v3291, %v3303
        %v3360 = vmul.f32 %v3292, %v3303
        %v3361 = vmul.f32 %v3293, %v3303
        %v3362 = vmul.f32 %v3294, %v3303
        %v3363 = vmul.f32 %v3295, %v3303
        %v3364 = vmul.f32 %v3296, %v3303
        %v3365 = vmul.f32 %v3297, %v3303
        %v3366 = vmul.f32 %v3298, %v3303
        %v3367 = vmul.f32 %v3299, %v3303
        %v3368 = vmul.f32 %v3300, %v3303
        %v3369 = vld [vmem:[%s11] sm:$0x1]
        %v3371 = vperm.slane %v3369, 0
        %v3373 = vadd.f32 %v3305, %v3371
        %v3374 = vadd.f32 %v3306, %v3371
        %v3375 = vadd.f32 %v3307, %v3371
        %v3376 = vadd.f32 %v3308, %v3371
        %v3377 = vadd.f32 %v3309, %v3371
        %v3378 = vadd.f32 %v3310, %v3371
        %v3379 = vadd.f32 %v3311, %v3371
        %v3380 = vadd.f32 %v3312, %v3371
        %v3381 = vadd.f32 %v3313, %v3371
        %v3382 = vadd.f32 %v3314, %v3371
        %v3383 = vadd.f32 %v3315, %v3371
        %v3384 = vadd.f32 %v3316, %v3371
        %v3385 = vadd.f32 %v3317, %v3371
        %v3386 = vadd.f32 %v3318, %v3371
        %v3387 = vadd.f32 %v3319, %v3371
        %v3388 = vadd.f32 %v3320, %v3371
        %v3389 = vadd.f32 %v3321, %v3371
        %v3390 = vadd.f32 %v3322, %v3371
        %v3391 = vadd.f32 %v3323, %v3371
        %v3392 = vadd.f32 %v3324, %v3371
        %v3393 = vadd.f32 %v3325, %v3371
        %v3394 = vadd.f32 %v3326, %v3371
        %v3395 = vadd.f32 %v3327, %v3371
        %v3396 = vadd.f32 %v3328, %v3371
        %v3397 = vadd.f32 %v3329, %v3371
        %v3398 = vadd.f32 %v3330, %v3371
        %v3399 = vadd.f32 %v3331, %v3371
        %v3400 = vadd.f32 %v3332, %v3371
        %v3401 = vadd.f32 %v3333, %v3371
        %v3402 = vadd.f32 %v3334, %v3371
        %v3403 = vadd.f32 %v3335, %v3371
        %v3404 = vadd.f32 %v3336, %v3371
        %v3405 = vadd.f32 %v3337, %v3371
        %v3406 = vadd.f32 %v3338, %v3371
        %v3407 = vadd.f32 %v3339, %v3371
        %v3408 = vadd.f32 %v3340, %v3371
        %v3409 = vadd.f32 %v3341, %v3371
        %v3410 = vadd.f32 %v3342, %v3371
        %v3411 = vadd.f32 %v3343, %v3371
        %v3412 = vadd.f32 %v3344, %v3371
        %v3413 = vadd.f32 %v3345, %v3371
        %v3414 = vadd.f32 %v3346, %v3371
        %v3415 = vadd.f32 %v3347, %v3371
        %v3416 = vadd.f32 %v3348, %v3371
        %v3417 = vadd.f32 %v3349, %v3371
        %v3418 = vadd.f32 %v3350, %v3371
        %v3419 = vadd.f32 %v3351, %v3371
        %v3420 = vadd.f32 %v3352, %v3371
        %v3421 = vadd.f32 %v3353, %v3371
        %v3422 = vadd.f32 %v3354, %v3371
        %v3423 = vadd.f32 %v3355, %v3371
        %v3424 = vadd.f32 %v3356, %v3371
        %v3425 = vadd.f32 %v3357, %v3371
        %v3426 = vadd.f32 %v3358, %v3371
        %v3427 = vadd.f32 %v3359, %v3371
        %v3428 = vadd.f32 %v3360, %v3371
        %v3429 = vadd.f32 %v3361, %v3371
        %v3430 = vadd.f32 %v3362, %v3371
        %v3431 = vadd.f32 %v3363, %v3371
        %v3432 = vadd.f32 %v3364, %v3371
        %v3433 = vadd.f32 %v3365, %v3371
        %v3434 = vadd.f32 %v3366, %v3371
        %v3435 = vadd.f32 %v3367, %v3371
        %v3436 = vadd.f32 %v3368, %v3371
        %v3437 = vmax.f32 %v3373, 0.0
        %v3438 = vmax.f32 %v3374, 0.0
        %v3439 = vmax.f32 %v3375, 0.0
        %v3440 = vmax.f32 %v3376, 0.0
        %v3441 = vmax.f32 %v3377, 0.0
        %v3442 = vmax.f32 %v3378, 0.0
        %v3443 = vmax.f32 %v3379, 0.0
        %v3444 = vmax.f32 %v3380, 0.0
        %v3445 = vmax.f32 %v3381, 0.0
        %v3446 = vmax.f32 %v3382, 0.0
        %v3447 = vmax.f32 %v3383, 0.0
        %v3448 = vmax.f32 %v3384, 0.0
        %v3449 = vmax.f32 %v3385, 0.0
        %v3450 = vmax.f32 %v3386, 0.0
        %v3451 = vmax.f32 %v3387, 0.0
        %v3452 = vmax.f32 %v3388, 0.0
        %v3453 = vmax.f32 %v3389, 0.0
        %v3454 = vmax.f32 %v3390, 0.0
        %v3455 = vmax.f32 %v3391, 0.0
        %v3456 = vmax.f32 %v3392, 0.0
        %v3457 = vmax.f32 %v3393, 0.0
        %v3458 = vmax.f32 %v3394, 0.0
        %v3459 = vmax.f32 %v3395, 0.0
        %v3460 = vmax.f32 %v3396, 0.0
        %v3461 = vmax.f32 %v3397, 0.0
        %v3462 = vmax.f32 %v3398, 0.0
        %v3463 = vmax.f32 %v3399, 0.0
        %v3464 = vmax.f32 %v3400, 0.0
        %v3465 = vmax.f32 %v3401, 0.0
        %v3466 = vmax.f32 %v3402, 0.0
        %v3467 = vmax.f32 %v3403, 0.0
        %v3468 = vmax.f32 %v3404, 0.0
        %v3469 = vmax.f32 %v3405, 0.0
        %v3470 = vmax.f32 %v3406, 0.0
        %v3471 = vmax.f32 %v3407, 0.0
        %v3472 = vmax.f32 %v3408, 0.0
        %v3473 = vmax.f32 %v3409, 0.0
        %v3474 = vmax.f32 %v3410, 0.0
        %v3475 = vmax.f32 %v3411, 0.0
        %v3476 = vmax.f32 %v3412, 0.0
        %v3477 = vmax.f32 %v3413, 0.0
        %v3478 = vmax.f32 %v3414, 0.0
        %v3479 = vmax.f32 %v3415, 0.0
        %v3480 = vmax.f32 %v3416, 0.0
        %v3481 = vmax.f32 %v3417, 0.0
        %v3482 = vmax.f32 %v3418, 0.0
        %v3483 = vmax.f32 %v3419, 0.0
        %v3484 = vmax.f32 %v3420, 0.0
        %v3485 = vmax.f32 %v3421, 0.0
        %v3486 = vmax.f32 %v3422, 0.0
        %v3487 = vmax.f32 %v3423, 0.0
        %v3488 = vmax.f32 %v3424, 0.0
        %v3489 = vmax.f32 %v3425, 0.0
        %v3490 = vmax.f32 %v3426, 0.0
        %v3491 = vmax.f32 %v3427, 0.0
        %v3492 = vmax.f32 %v3428, 0.0
        %v3493 = vmax.f32 %v3429, 0.0
        %v3494 = vmax.f32 %v3430, 0.0
        %v3495 = vmax.f32 %v3431, 0.0
        %v3496 = vmax.f32 %v3432, 0.0
        %v3497 = vmax.f32 %v3433, 0.0
        %v3498 = vmax.f32 %v3434, 0.0
        %v3499 = vmax.f32 %v3435, 0.0
        %v3500 = vmax.f32 %v3436, 0.0
        %v3501 = vpack.c.bf16 %v3438, %v3437
        %v3502 = vpack.c.bf16 %v3440, %v3439
        %v3503 = vpack.c.bf16 %v3442, %v3441
        %v3504 = vpack.c.bf16 %v3444, %v3443
        %v3505 = vpack.c.bf16 %v3446, %v3445
        %v3506 = vpack.c.bf16 %v3448, %v3447
        %v3507 = vpack.c.bf16 %v3450, %v3449
        %v3508 = vpack.c.bf16 %v3452, %v3451
        %v3509 = vpack.c.bf16 %v3454, %v3453
        %v3510 = vpack.c.bf16 %v3456, %v3455
        %v3511 = vpack.c.bf16 %v3458, %v3457
        %v3512 = vpack.c.bf16 %v3460, %v3459
        %v3513 = vpack.c.bf16 %v3462, %v3461
        %v3514 = vpack.c.bf16 %v3464, %v3463
        %v3515 = vpack.c.bf16 %v3466, %v3465
        %v3516 = vpack.c.bf16 %v3468, %v3467
        %v3517 = vpack.c.bf16 %v3470, %v3469
        %v3518 = vpack.c.bf16 %v3472, %v3471
        %v3519 = vpack.c.bf16 %v3474, %v3473
        %v3520 = vpack.c.bf16 %v3476, %v3475
        %v3521 = vpack.c.bf16 %v3478, %v3477
        %v3522 = vpack.c.bf16 %v3480, %v3479
        %v3523 = vpack.c.bf16 %v3482, %v3481
        %v3524 = vpack.c.bf16 %v3484, %v3483
        %v3525 = vpack.c.bf16 %v3486, %v3485
        %v3526 = vpack.c.bf16 %v3488, %v3487
        %v3527 = vpack.c.bf16 %v3490, %v3489
        %v3528 = vpack.c.bf16 %v3492, %v3491
        %v3529 = vpack.c.bf16 %v3494, %v3493
        %v3530 = vpack.c.bf16 %v3496, %v3495
        %v3531 = vpack.c.bf16 %v3498, %v3497
        %v3532 = vpack.c.bf16 %v3500, %v3499
        %v3533 = vld [vmem:[%s12] sm:$0xf]
        %v3534 = vld [vmem:[%s12 + $0x4] sm:$0xf]
        %v3535 = vld [vmem:[%s12 + $0x8] sm:$0xf]
        %v3536 = vld [vmem:[%s12 + $0xc] sm:$0xf]
        %v3537 = vld [vmem:[%s12 + $0x10] sm:$0xf]
        %v3538 = vld [vmem:[%s12 + $0x14] sm:$0xf]
        %v3539 = vld [vmem:[%s12 + $0x18] sm:$0xf]
        %v3540 = vld [vmem:[%s12 + $0x1c] sm:$0xf]
        %v3541 = vld [vmem:[%s12 + $0x20] sm:$0xf]
        %v3542 = vld [vmem:[%s12 + $0x24] sm:$0xf]
        %v3543 = vld [vmem:[%s12 + $0x28] sm:$0xf]
        %v3544 = vld [vmem:[%s12 + $0x2c] sm:$0xf]
        %v3545 = vld [vmem:[%s13] sm:$0x1]
        %v3547 = vperm.slane %v3545, 0
        %v3561 = vunpack.c.l.b16 %v3533
        %v3562 = vunpack.c.l.b16 %v3534
        %v3563 = vunpack.c.l.b16 %v3535
        %v3564 = vunpack.c.l.b16 %v3536
        %v3565 = vunpack.c.l.b16 %v3537
        %v3566 = vunpack.c.l.b16 %v3538
        %v3567 = vunpack.c.l.b16 %v3539
        %v3568 = vunpack.c.l.b16 %v3540
        %v3569 = vunpack.c.l.b16 %v3541
        %v3570 = vunpack.c.l.b16 %v3542
        %v3571 = vunpack.c.l.b16 %v3543
        %v3572 = vunpack.c.l.b16 %v3544
        %v3573 = vpack.c.b16 %v3562, %v3561
        %v3574 = vpack.c.b16 %v3564, %v3563
        %v3575 = vpack.c.b16 %v3566, %v3565
        %v3576 = vpack.c.b16 %v3568, %v3567
        %v3577 = vpack.c.b16 %v3570, %v3569
        %v3578 = vpack.c.b16 %v3572, %v3571
        %vm3585 = vcmask 785408
        %v3587 = vsel %vm3585, %v3501, 0
        %v3590 = vsel %vm3585, %v3502, 0
        %v3593 = vsel %vm3585, %v3503, 0
        %v3596 = vsel %vm3585, %v3504, 0
        %v3599 = vsel %vm3585, %v3505, 0
        %v3602 = vsel %vm3585, %v3506, 0
        %v3605 = vsel %vm3585, %v3507, 0
        %v3608 = vsel %vm3585, %v3508, 0
        %v3611 = vsel %vm3585, %v3509, 0
        %v3614 = vsel %vm3585, %v3510, 0
        %v3617 = vsel %vm3585, %v3511, 0
        %v3620 = vsel %vm3585, %v3512, 0
        %v3623 = vsel %vm3585, %v3513, 0
        %v3626 = vsel %vm3585, %v3514, 0
        %v3629 = vsel %vm3585, %v3515, 0
        %v3632 = vsel %vm3585, %v3516, 0
        %v3635 = vsel %vm3585, %v3517, 0
        %v3638 = vsel %vm3585, %v3518, 0
        %v3641 = vsel %vm3585, %v3519, 0
        %v3644 = vsel %vm3585, %v3520, 0
        %v3647 = vsel %vm3585, %v3521, 0
        %v3650 = vsel %vm3585, %v3522, 0
        %v3653 = vsel %vm3585, %v3523, 0
        %v3656 = vsel %vm3585, %v3524, 0
        %v3659 = vsel %vm3585, %v3525, 0
        %v3662 = vsel %vm3585, %v3526, 0
        %v3665 = vsel %vm3585, %v3527, 0
        %v3668 = vsel %vm3585, %v3528, 0
        %v3671 = vsel %vm3585, %v3529, 0
        %v3674 = vsel %vm3585, %v3530, 0
        %v3677 = vsel %vm3585, %v3531, 0
        %v3680 = vsel %vm3585, %v3532, 0
        %3682 = vmatpush.bf16.msra.mxu0 0
        %3683 = vmatpush.bf16.msra.mxu0 0
        %3684 = vmatpush.bf16.msra.mxu0 %v3578
        %3685 = vmatpush.bf16.msra.mxu0 %v3577
        %3686 = vmatpush.bf16.msra.mxu0 %v3576
        %3687 = vmatpush.bf16.msra.mxu0 %v3575
        %3688 = vmatpush.bf16.msra.mxu0 %v3574
        %3689 = vmatpush.bf16.msra.mxu0 %v3573
        %3690 = vmatmul.bf16.gmra.mxu0 %v3587
        %v3691 = vpop.f32.mrf.mxu0
        %v3692 = vadd.f32 %v3547, %v3691
        %v3693 = vpop.f32.mrf.mxu0
        %v3694 = vadd.f32 %v3547, %v3693
        %3695 = vmatmul.bf16.gmra.mxu0 %v3590
        %v3696 = vpop.f32.mrf.mxu0
        %v3697 = vadd.f32 %v3547, %v3696
        %v3698 = vpop.f32.mrf.mxu0
        %v3699 = vadd.f32 %v3547, %v3698
        %3700 = vmatmul.bf16.gmra.mxu0 %v3593
        %v3701 = vpop.f32.mrf.mxu0
        %v3702 = vadd.f32 %v3547, %v3701
        %v3703 = vpop.f32.mrf.mxu0
        %v3704 = vadd.f32 %v3547, %v3703
        %3705 = vmatmul.bf16.gmra.mxu0 %v3596
        %v3706 = vpop.f32.mrf.mxu0
        %v3707 = vadd.f32 %v3547, %v3706
        %v3708 = vpop.f32.mrf.mxu0
        %v3709 = vadd.f32 %v3547, %v3708
        %3710 = vmatmul.bf16.gmra.mxu0 %v3599
        %v3711 = vpop.f32.mrf.mxu0
        %v3712 = vadd.f32 %v3547, %v3711
        %v3713 = vpop.f32.mrf.mxu0
        %v3714 = vadd.f32 %v3547, %v3713
        %3715 = vmatmul.bf16.gmra.mxu0 %v3602
        %v3716 = vpop.f32.mrf.mxu0
        %v3717 = vadd.f32 %v3547, %v3716
        %v3718 = vpop.f32.mrf.mxu0
        %v3719 = vadd.f32 %v3547, %v3718
        %3720 = vmatmul.bf16.gmra.mxu0 %v3605
        %v3721 = vpop.f32.mrf.mxu0
        %v3722 = vadd.f32 %v3547, %v3721
        %v3723 = vpop.f32.mrf.mxu0
        %v3724 = vadd.f32 %v3547, %v3723
        %3725 = vmatmul.bf16.gmra.mxu0 %v3608
        %v3726 = vpop.f32.mrf.mxu0
        %v3727 = vadd.f32 %v3547, %v3726
        %v3728 = vpop.f32.mrf.mxu0
        %v3729 = vadd.f32 %v3547, %v3728
        %3730 = vmatmul.bf16.gmra.mxu0 %v3611
        %v3731 = vpop.f32.mrf.mxu0
        %v3732 = vadd.f32 %v3547, %v3731
        %v3733 = vpop.f32.mrf.mxu0
        %v3734 = vadd.f32 %v3547, %v3733
        %3735 = vmatmul.bf16.gmra.mxu0 %v3614
        %v3736 = vpop.f32.mrf.mxu0
        %v3737 = vadd.f32 %v3547, %v3736
        %v3738 = vpop.f32.mrf.mxu0
        %v3739 = vadd.f32 %v3547, %v3738
        %3740 = vmatmul.bf16.gmra.mxu0 %v3617
        %v3741 = vpop.f32.mrf.mxu0
        %v3742 = vadd.f32 %v3547, %v3741
        %v3743 = vpop.f32.mrf.mxu0
        %v3744 = vadd.f32 %v3547, %v3743
        %3745 = vmatmul.bf16.gmra.mxu0 %v3620
        %v3746 = vpop.f32.mrf.mxu0
        %v3747 = vadd.f32 %v3547, %v3746
        %v3748 = vpop.f32.mrf.mxu0
        %v3749 = vadd.f32 %v3547, %v3748
        %3750 = vmatmul.bf16.gmra.mxu0 %v3623
        %v3751 = vpop.f32.mrf.mxu0
        %v3752 = vadd.f32 %v3547, %v3751
        %v3753 = vpop.f32.mrf.mxu0
        %v3754 = vadd.f32 %v3547, %v3753
        %3755 = vmatmul.bf16.gmra.mxu0 %v3626
        %v3756 = vpop.f32.mrf.mxu0
        %v3757 = vadd.f32 %v3547, %v3756
        %v3758 = vpop.f32.mrf.mxu0
        %v3759 = vadd.f32 %v3547, %v3758
        %3760 = vmatmul.bf16.gmra.mxu0 %v3629
        %v3761 = vpop.f32.mrf.mxu0
        %v3762 = vadd.f32 %v3547, %v3761
        %v3763 = vpop.f32.mrf.mxu0
        %v3764 = vadd.f32 %v3547, %v3763
        %3765 = vmatmul.bf16.gmra.mxu0 %v3632
        %v3766 = vpop.f32.mrf.mxu0
        %v3767 = vadd.f32 %v3547, %v3766
        %v3768 = vpop.f32.mrf.mxu0
        %v3769 = vadd.f32 %v3547, %v3768
        %3770 = vmatmul.bf16.gmra.mxu0 %v3635
        %v3771 = vpop.f32.mrf.mxu0
        %v3772 = vadd.f32 %v3547, %v3771
        %v3773 = vpop.f32.mrf.mxu0
        %v3774 = vadd.f32 %v3547, %v3773
        %3775 = vmatmul.bf16.gmra.mxu0 %v3638
        %v3776 = vpop.f32.mrf.mxu0
        %v3777 = vadd.f32 %v3547, %v3776
        %v3778 = vpop.f32.mrf.mxu0
        %v3779 = vadd.f32 %v3547, %v3778
        %3780 = vmatmul.bf16.gmra.mxu0 %v3641
        %v3781 = vpop.f32.mrf.mxu0
        %v3782 = vadd.f32 %v3547, %v3781
        %v3783 = vpop.f32.mrf.mxu0
        %v3784 = vadd.f32 %v3547, %v3783
        %3785 = vmatmul.bf16.gmra.mxu0 %v3644
        %v3786 = vpop.f32.mrf.mxu0
        %v3787 = vadd.f32 %v3547, %v3786
        %v3788 = vpop.f32.mrf.mxu0
        %v3789 = vadd.f32 %v3547, %v3788
        %3790 = vmatmul.bf16.gmra.mxu0 %v3647
        %v3791 = vpop.f32.mrf.mxu0
        %v3792 = vadd.f32 %v3547, %v3791
        %v3793 = vpop.f32.mrf.mxu0
        %v3794 = vadd.f32 %v3547, %v3793
        %3795 = vmatmul.bf16.gmra.mxu0 %v3650
        %v3796 = vpop.f32.mrf.mxu0
        %v3797 = vadd.f32 %v3547, %v3796
        %v3798 = vpop.f32.mrf.mxu0
        %v3799 = vadd.f32 %v3547, %v3798
        %3800 = vmatmul.bf16.gmra.mxu0 %v3653
        %v3801 = vpop.f32.mrf.mxu0
        %v3802 = vadd.f32 %v3547, %v3801
        %v3803 = vpop.f32.mrf.mxu0
        %v3804 = vadd.f32 %v3547, %v3803
        %3805 = vmatmul.bf16.gmra.mxu0 %v3656
        %v3806 = vpop.f32.mrf.mxu0
        %v3807 = vadd.f32 %v3547, %v3806
        %v3808 = vpop.f32.mrf.mxu0
        %v3809 = vadd.f32 %v3547, %v3808
        %3810 = vmatmul.bf16.gmra.mxu0 %v3659
        %v3811 = vpop.f32.mrf.mxu0
        %v3812 = vadd.f32 %v3547, %v3811
        %v3813 = vpop.f32.mrf.mxu0
        %v3814 = vadd.f32 %v3547, %v3813
        %3815 = vmatmul.bf16.gmra.mxu0 %v3662
        %v3816 = vpop.f32.mrf.mxu0
        %v3817 = vadd.f32 %v3547, %v3816
        %v3818 = vpop.f32.mrf.mxu0
        %v3819 = vadd.f32 %v3547, %v3818
        %3820 = vmatmul.bf16.gmra.mxu0 %v3665
        %v3821 = vpop.f32.mrf.mxu0
        %v3822 = vadd.f32 %v3547, %v3821
        %v3823 = vpop.f32.mrf.mxu0
        %v3824 = vadd.f32 %v3547, %v3823
        %3825 = vmatmul.bf16.gmra.mxu0 %v3668
        %v3826 = vpop.f32.mrf.mxu0
        %v3827 = vadd.f32 %v3547, %v3826
        %v3828 = vpop.f32.mrf.mxu0
        %v3829 = vadd.f32 %v3547, %v3828
        %3830 = vmatmul.bf16.gmra.mxu0 %v3671
        %v3831 = vpop.f32.mrf.mxu0
        %v3832 = vadd.f32 %v3547, %v3831
        %v3833 = vpop.f32.mrf.mxu0
        %v3834 = vadd.f32 %v3547, %v3833
        %3835 = vmatmul.bf16.gmra.mxu0 %v3674
        %v3836 = vpop.f32.mrf.mxu0
        %v3837 = vadd.f32 %v3547, %v3836
        %v3838 = vpop.f32.mrf.mxu0
        %v3839 = vadd.f32 %v3547, %v3838
        %3840 = vmatmul.bf16.gmra.mxu0 %v3677
        %v3841 = vpop.f32.mrf.mxu0
        %v3842 = vadd.f32 %v3547, %v3841
        %v3843 = vpop.f32.mrf.mxu0
        %v3844 = vadd.f32 %v3547, %v3843
        %3845 = vmatmul.bf16.gmra.mxu0 %v3680
        %v3846 = vpop.f32.mrf.mxu0
        %v3847 = vadd.f32 %v3547, %v3846
        %v3848 = vpop.f32.mrf.mxu0
        %v3849 = vadd.f32 %v3547, %v3848
        %3850 = vdwg.mxu0
        %v3851 = vsel %vm3585, %v3692, -inf
        %v3852 = vsel %vm3585, %v3694, -inf
        %v3853 = vmax.f32 %v3851, %v3852
        %v3854 = vrot.slane %v3853, 4
        %v3855 = vmax.f32 %v3853, %v3854
        %v3856 = vrot.slane %v3855, 2
        %v3857 = vmax.f32 %v3855, %v3856
        %v3858 = vrot.slane %v3857, 1
        %v3859 = vmax.f32 %v3857, %v3858
        %v3860 = vsel %vm3585, %v3697, -inf
        %v3861 = vsel %vm3585, %v3699, -inf
        %v3862 = vmax.f32 %v3860, %v3861
        %v3863 = vrot.slane %v3862, 4
        %v3864 = vmax.f32 %v3862, %v3863
        %v3865 = vrot.slane %v3864, 2
        %v3866 = vmax.f32 %v3864, %v3865
        %v3867 = vrot.slane %v3866, 1
        %v3868 = vmax.f32 %v3866, %v3867
        %v3869 = vsel %vm3585, %v3702, -inf
        %v3870 = vsel %vm3585, %v3704, -inf
        %v3871 = vmax.f32 %v3869, %v3870
        %v3872 = vrot.slane %v3871, 4
        %v3873 = vmax.f32 %v3871, %v3872
        %v3874 = vrot.slane %v3873, 2
        %v3875 = vmax.f32 %v3873, %v3874
        %v3876 = vrot.slane %v3875, 1
        %v3877 = vmax.f32 %v3875, %v3876
        %v3878 = vsel %vm3585, %v3707, -inf
        %v3879 = vsel %vm3585, %v3709, -inf
        %v3880 = vmax.f32 %v3878, %v3879
        %v3881 = vrot.slane %v3880, 4
        %v3882 = vmax.f32 %v3880, %v3881
        %v3883 = vrot.slane %v3882, 2
        %v3884 = vmax.f32 %v3882, %v3883
        %v3885 = vrot.slane %v3884, 1
        %v3886 = vmax.f32 %v3884, %v3885
        %v3887 = vsel %vm3585, %v3712, -inf
        %v3888 = vsel %vm3585, %v3714, -inf
        %v3889 = vmax.f32 %v3887, %v3888
        %v3890 = vrot.slane %v3889, 4
        %v3891 = vmax.f32 %v3889, %v3890
        %v3892 = vrot.slane %v3891, 2
        %v3893 = vmax.f32 %v3891, %v3892
        %v3894 = vrot.slane %v3893, 1
        %v3895 = vmax.f32 %v3893, %v3894
        %v3896 = vsel %vm3585, %v3717, -inf
        %v3897 = vsel %vm3585, %v3719, -inf
        %v3898 = vmax.f32 %v3896, %v3897
        %v3899 = vrot.slane %v3898, 4
        %v3900 = vmax.f32 %v3898, %v3899
        %v3901 = vrot.slane %v3900, 2
        %v3902 = vmax.f32 %v3900, %v3901
        %v3903 = vrot.slane %v3902, 1
        %v3904 = vmax.f32 %v3902, %v3903
        %v3905 = vsel %vm3585, %v3722, -inf
        %v3906 = vsel %vm3585, %v3724, -inf
        %v3907 = vmax.f32 %v3905, %v3906
        %v3908 = vrot.slane %v3907, 4
        %v3909 = vmax.f32 %v3907, %v3908
        %v3910 = vrot.slane %v3909, 2
        %v3911 = vmax.f32 %v3909, %v3910
        %v3912 = vrot.slane %v3911, 1
        %v3913 = vmax.f32 %v3911, %v3912
        %v3914 = vsel %vm3585, %v3727, -inf
        %v3915 = vsel %vm3585, %v3729, -inf
        %v3916 = vmax.f32 %v3914, %v3915
        %v3917 = vrot.slane %v3916, 4
        %v3918 = vmax.f32 %v3916, %v3917
        %v3919 = vrot.slane %v3918, 2
        %v3920 = vmax.f32 %v3918, %v3919
        %v3921 = vrot.slane %v3920, 1
        %v3922 = vmax.f32 %v3920, %v3921
        %v3923 = vsel %vm3585, %v3732, -inf
        %v3924 = vsel %vm3585, %v3734, -inf
        %v3925 = vmax.f32 %v3923, %v3924
        %v3926 = vrot.slane %v3925, 4
        %v3927 = vmax.f32 %v3925, %v3926
        %v3928 = vrot.slane %v3927, 2
        %v3929 = vmax.f32 %v3927, %v3928
        %v3930 = vrot.slane %v3929, 1
        %v3931 = vmax.f32 %v3929, %v3930
        %v3932 = vsel %vm3585, %v3737, -inf
        %v3933 = vsel %vm3585, %v3739, -inf
        %v3934 = vmax.f32 %v3932, %v3933
        %v3935 = vrot.slane %v3934, 4
        %v3936 = vmax.f32 %v3934, %v3935
        %v3937 = vrot.slane %v3936, 2
        %v3938 = vmax.f32 %v3936, %v3937
        %v3939 = vrot.slane %v3938, 1
        %v3940 = vmax.f32 %v3938, %v3939
        %v3941 = vsel %vm3585, %v3742, -inf
        %v3942 = vsel %vm3585, %v3744, -inf
        %v3943 = vmax.f32 %v3941, %v3942
        %v3944 = vrot.slane %v3943, 4
        %v3945 = vmax.f32 %v3943, %v3944
        %v3946 = vrot.slane %v3945, 2
        %v3947 = vmax.f32 %v3945, %v3946
        %v3948 = vrot.slane %v3947, 1
        %v3949 = vmax.f32 %v3947, %v3948
        %v3950 = vsel %vm3585, %v3747, -inf
        %v3951 = vsel %vm3585, %v3749, -inf
        %v3952 = vmax.f32 %v3950, %v3951
        %v3953 = vrot.slane %v3952, 4
        %v3954 = vmax.f32 %v3952, %v3953
        %v3955 = vrot.slane %v3954, 2
        %v3956 = vmax.f32 %v3954, %v3955
        %v3957 = vrot.slane %v3956, 1
        %v3958 = vmax.f32 %v3956, %v3957
        %v3959 = vsel %vm3585, %v3752, -inf
        %v3960 = vsel %vm3585, %v3754, -inf
        %v3961 = vmax.f32 %v3959, %v3960
        %v3962 = vrot.slane %v3961, 4
        %v3963 = vmax.f32 %v3961, %v3962
        %v3964 = vrot.slane %v3963, 2
        %v3965 = vmax.f32 %v3963, %v3964
        %v3966 = vrot.slane %v3965, 1
        %v3967 = vmax.f32 %v3965, %v3966
        %v3968 = vsel %vm3585, %v3757, -inf
        %v3969 = vsel %vm3585, %v3759, -inf
        %v3970 = vmax.f32 %v3968, %v3969
        %v3971 = vrot.slane %v3970, 4
        %v3972 = vmax.f32 %v3970, %v3971
        %v3973 = vrot.slane %v3972, 2
        %v3974 = vmax.f32 %v3972, %v3973
        %v3975 = vrot.slane %v3974, 1
        %v3976 = vmax.f32 %v3974, %v3975
        %v3977 = vsel %vm3585, %v3762, -inf
        %v3978 = vsel %vm3585, %v3764, -inf
        %v3979 = vmax.f32 %v3977, %v3978
        %v3980 = vrot.slane %v3979, 4
        %v3981 = vmax.f32 %v3979, %v3980
        %v3982 = vrot.slane %v3981, 2
        %v3983 = vmax.f32 %v3981, %v3982
        %v3984 = vrot.slane %v3983, 1
        %v3985 = vmax.f32 %v3983, %v3984
        %v3986 = vsel %vm3585, %v3767, -inf
        %v3987 = vsel %vm3585, %v3769, -inf
        %v3988 = vmax.f32 %v3986, %v3987
        %v3989 = vrot.slane %v3988, 4
        %v3990 = vmax.f32 %v3988, %v3989
        %v3991 = vrot.slane %v3990, 2
        %v3992 = vmax.f32 %v3990, %v3991
        %v3993 = vrot.slane %v3992, 1
        %v3994 = vmax.f32 %v3992, %v3993
        %v3995 = vsel %vm3585, %v3772, -inf
        %v3996 = vsel %vm3585, %v3774, -inf
        %v3997 = vmax.f32 %v3995, %v3996
        %v3998 = vrot.slane %v3997, 4
        %v3999 = vmax.f32 %v3997, %v3998
        %v4000 = vrot.slane %v3999, 2
        %v4001 = vmax.f32 %v3999, %v4000
        %v4002 = vrot.slane %v4001, 1
        %v4003 = vmax.f32 %v4001, %v4002
        %v4004 = vsel %vm3585, %v3777, -inf
        %v4005 = vsel %vm3585, %v3779, -inf
        %v4006 = vmax.f32 %v4004, %v4005
        %v4007 = vrot.slane %v4006, 4
        %v4008 = vmax.f32 %v4006, %v4007
        %v4009 = vrot.slane %v4008, 2
        %v4010 = vmax.f32 %v4008, %v4009
        %v4011 = vrot.slane %v4010, 1
        %v4012 = vmax.f32 %v4010, %v4011
        %v4013 = vsel %vm3585, %v3782, -inf
        %v4014 = vsel %vm3585, %v3784, -inf
        %v4015 = vmax.f32 %v4013, %v4014
        %v4016 = vrot.slane %v4015, 4
        %v4017 = vmax.f32 %v4015, %v4016
        %v4018 = vrot.slane %v4017, 2
        %v4019 = vmax.f32 %v4017, %v4018
        %v4020 = vrot.slane %v4019, 1
        %v4021 = vmax.f32 %v4019, %v4020
        %v4022 = vsel %vm3585, %v3787, -inf
        %v4023 = vsel %vm3585, %v3789, -inf
        %v4024 = vmax.f32 %v4022, %v4023
        %v4025 = vrot.slane %v4024, 4
        %v4026 = vmax.f32 %v4024, %v4025
        %v4027 = vrot.slane %v4026, 2
        %v4028 = vmax.f32 %v4026, %v4027
        %v4029 = vrot.slane %v4028, 1
        %v4030 = vmax.f32 %v4028, %v4029
        %v4031 = vsel %vm3585, %v3792, -inf
        %v4032 = vsel %vm3585, %v3794, -inf
        %v4033 = vmax.f32 %v4031, %v4032
        %v4034 = vrot.slane %v4033, 4
        %v4035 = vmax.f32 %v4033, %v4034
        %v4036 = vrot.slane %v4035, 2
        %v4037 = vmax.f32 %v4035, %v4036
        %v4038 = vrot.slane %v4037, 1
        %v4039 = vmax.f32 %v4037, %v4038
        %v4040 = vsel %vm3585, %v3797, -inf
        %v4041 = vsel %vm3585, %v3799, -inf
        %v4042 = vmax.f32 %v4040, %v4041
        %v4043 = vrot.slane %v4042, 4
        %v4044 = vmax.f32 %v4042, %v4043
        %v4045 = vrot.slane %v4044, 2
        %v4046 = vmax.f32 %v4044, %v4045
        %v4047 = vrot.slane %v4046, 1
        %v4048 = vmax.f32 %v4046, %v4047
        %v4049 = vsel %vm3585, %v3802, -inf
        %v4050 = vsel %vm3585, %v3804, -inf
        %v4051 = vmax.f32 %v4049, %v4050
        %v4052 = vrot.slane %v4051, 4
        %v4053 = vmax.f32 %v4051, %v4052
        %v4054 = vrot.slane %v4053, 2
        %v4055 = vmax.f32 %v4053, %v4054
        %v4056 = vrot.slane %v4055, 1
        %v4057 = vmax.f32 %v4055, %v4056
        %v4058 = vsel %vm3585, %v3807, -inf
        %v4059 = vsel %vm3585, %v3809, -inf
        %v4060 = vmax.f32 %v4058, %v4059
        %v4061 = vrot.slane %v4060, 4
        %v4062 = vmax.f32 %v4060, %v4061
        %v4063 = vrot.slane %v4062, 2
        %v4064 = vmax.f32 %v4062, %v4063
        %v4065 = vrot.slane %v4064, 1
        %v4066 = vmax.f32 %v4064, %v4065
        %v4067 = vsel %vm3585, %v3812, -inf
        %v4068 = vsel %vm3585, %v3814, -inf
        %v4069 = vmax.f32 %v4067, %v4068
        %v4070 = vrot.slane %v4069, 4
        %v4071 = vmax.f32 %v4069, %v4070
        %v4072 = vrot.slane %v4071, 2
        %v4073 = vmax.f32 %v4071, %v4072
        %v4074 = vrot.slane %v4073, 1
        %v4075 = vmax.f32 %v4073, %v4074
        %v4076 = vsel %vm3585, %v3817, -inf
        %v4077 = vsel %vm3585, %v3819, -inf
        %v4078 = vmax.f32 %v4076, %v4077
        %v4079 = vrot.slane %v4078, 4
        %v4080 = vmax.f32 %v4078, %v4079
        %v4081 = vrot.slane %v4080, 2
        %v4082 = vmax.f32 %v4080, %v4081
        %v4083 = vrot.slane %v4082, 1
        %v4084 = vmax.f32 %v4082, %v4083
        %v4085 = vsel %vm3585, %v3822, -inf
        %v4086 = vsel %vm3585, %v3824, -inf
        %v4087 = vmax.f32 %v4085, %v4086
        %v4088 = vrot.slane %v4087, 4
        %v4089 = vmax.f32 %v4087, %v4088
        %v4090 = vrot.slane %v4089, 2
        %v4091 = vmax.f32 %v4089, %v4090
        %v4092 = vrot.slane %v4091, 1
        %v4093 = vmax.f32 %v4091, %v4092
        %v4094 = vsel %vm3585, %v3827, -inf
        %v4095 = vsel %vm3585, %v3829, -inf
        %v4096 = vmax.f32 %v4094, %v4095
        %v4097 = vrot.slane %v4096, 4
        %v4098 = vmax.f32 %v4096, %v4097
        %v4099 = vrot.slane %v4098, 2
        %v4100 = vmax.f32 %v4098, %v4099
        %v4101 = vrot.slane %v4100, 1
        %v4102 = vmax.f32 %v4100, %v4101
        %v4103 = vsel %vm3585, %v3832, -inf
        %v4104 = vsel %vm3585, %v3834, -inf
        %v4105 = vmax.f32 %v4103, %v4104
        %v4106 = vrot.slane %v4105, 4
        %v4107 = vmax.f32 %v4105, %v4106
        %v4108 = vrot.slane %v4107, 2
        %v4109 = vmax.f32 %v4107, %v4108
        %v4110 = vrot.slane %v4109, 1
        %v4111 = vmax.f32 %v4109, %v4110
        %v4112 = vsel %vm3585, %v3837, -inf
        %v4113 = vsel %vm3585, %v3839, -inf
        %v4114 = vmax.f32 %v4112, %v4113
        %v4115 = vrot.slane %v4114, 4
        %v4116 = vmax.f32 %v4114, %v4115
        %v4117 = vrot.slane %v4116, 2
        %v4118 = vmax.f32 %v4116, %v4117
        %v4119 = vrot.slane %v4118, 1
        %v4120 = vmax.f32 %v4118, %v4119
        %v4121 = vsel %vm3585, %v3842, -inf
        %v4122 = vsel %vm3585, %v3844, -inf
        %v4123 = vmax.f32 %v4121, %v4122
        %v4124 = vrot.slane %v4123, 4
        %v4125 = vmax.f32 %v4123, %v4124
        %v4126 = vrot.slane %v4125, 2
        %v4127 = vmax.f32 %v4125, %v4126
        %v4128 = vrot.slane %v4127, 1
        %v4129 = vmax.f32 %v4127, %v4128
        %v4130 = vsel %vm3585, %v3847, -inf
        %v4131 = vsel %vm3585, %v3849, -inf
        %v4132 = vmax.f32 %v4130, %v4131
        %v4133 = vrot.slane %v4132, 4
        %v4134 = vmax.f32 %v4132, %v4133
        %v4135 = vrot.slane %v4134, 2
        %v4136 = vmax.f32 %v4134, %v4135
        %v4137 = vrot.slane %v4136, 1
        %v4138 = vmax.f32 %v4136, %v4137
        %v4171 = vsel %vm2672, %v3868, %v3859
        %v4172 = vsel %vm2674, %v3877, %v4171
        %v4173 = vsel %vm2676, %v3886, %v4172
        %v4174 = vsel %vm2678, %v3895, %v4173
        %v4175 = vsel %vm2680, %v3904, %v4174
        %v4176 = vsel %vm2682, %v3913, %v4175
        %v4177 = vsel %vm2684, %v3922, %v4176
        %v4178 = vsel %vm2672, %v3940, %v3931
        %v4179 = vsel %vm2674, %v3949, %v4178
        %v4180 = vsel %vm2676, %v3958, %v4179
        %v4181 = vsel %vm2678, %v3967, %v4180
        %v4182 = vsel %vm2680, %v3976, %v4181
        %v4183 = vsel %vm2682, %v3985, %v4182
        %v4184 = vsel %vm2684, %v3994, %v4183
        %v4185 = vsel %vm2672, %v4012, %v4003
        %v4186 = vsel %vm2674, %v4021, %v4185
        %v4187 = vsel %vm2676, %v4030, %v4186
        %v4188 = vsel %vm2678, %v4039, %v4187
        %v4189 = vsel %vm2680, %v4048, %v4188
        %v4190 = vsel %vm2682, %v4057, %v4189
        %v4191 = vsel %vm2684, %v4066, %v4190
        %v4192 = vsel %vm2672, %v4084, %v4075
        %v4193 = vsel %vm2674, %v4093, %v4192
        %v4194 = vsel %vm2676, %v4102, %v4193
        %v4195 = vsel %vm2678, %v4111, %v4194
        %v4196 = vsel %vm2680, %v4120, %v4195
        %v4197 = vsel %vm2682, %v4129, %v4196
        %v4198 = vsel %vm2684, %v4138, %v4197
        %4203 = vst.msk [vmem:[%s460] sm:$0xff] %vm3585, %v4177
        %4204 = vst.msk [vmem:[%s460 + $0x8] sm:$0xff] %vm3585, %v4184
        %4205 = vst.msk [vmem:[%s460 + $0x10] sm:$0xff] %vm3585, %v4191
        %4206 = vst.msk [vmem:[%s460 + $0x18] sm:$0xff] %vm3585, %v4198
        %s4207 = sand.u32 %s335, 1
        %s4208 = scalar_lea.sflag [#allocation3], %s4207
        %s4209 = sand.u32 %s335, 1
        %s4210 = smul.addr %s4209, 32
        %s4211 = scalar_lea.vmem [#allocation2], %s4210
        // Predicated region
        $region77: #{token_embed.1} parent=75 // pred_check
          %p4212 = pneg %p345
        $region78: #{token_embed.1} parent=75 // pred_check_branch
          %4214 = sbr.rel (%p4212) target = $region80
        $region79: #{token_embed.1} parent=75 // pred_region
          %4216 = vsyncadd %s4208, 0
          %s4217 = smul.addr %s28, 4
          %s4218 = smul.addr %s4217, 8
          %s4219 = scalar_lea.hbm %s14, %s4218
          %s4220 = sshll.u32 %s4211, 4
          %s4221 = int_to_ptr.vmem [resolvable:$true] %s4220
          %s4222 = sshll.u32 %s4219, 4
          %s4223 = int_to_ptr.hbm [resolvable:$true] %s4222
          %4228 = dma.vmem_to_hbm [thread:$0]  %s4221, 512, %s4223, %s4208, 128, 128, 8
        $region80: #{token_embed.1} parent=75 // pred_fallthru
          _
      $region76: #{token_embed.1} parent=5 // pred_fallthru
        _
      %p4229 = scmp.le.s32.totalorder 2, %s23
      // Predicated region
      $region81: #{token_embed.1} parent=5 // pred_check
        %p4230 = pneg %p4229
      $region82: #{token_embed.1} parent=5 // pred_check_branch
        %4232 = sbr.rel (%p4230) target = $region84
      $region83: #{token_embed.1} parent=5 // pred_region
        %s4233 = ssub.s32 %s23, 2
        // Predicated region
        $region85: #{token_embed.1} parent=83 // pred_check
          %p4234 = pneg %p351
        $region86: #{token_embed.1} parent=83 // pred_check_branch
          %4236 = sbr.rel (%p4234) target = $region88
        $region87: #{token_embed.1} parent=83 // pred_region
          %s4237 = sand.u32 %s336, 1
          %s4238 = scalar_lea.sflag [#allocation3], %s4237
          %s4239 = sand.u32 %s336, 1
          %s4240 = smul.addr %s4239, 32
          %s4241 = scalar_lea.vmem [#allocation2], %s4240
          %4243 = dma.done %s4238, 512
        $region88: #{token_embed.1} parent=83 // pred_fallthru
          _
      $region84: #{token_embed.1} parent=5 // pred_fallthru
        _
    $region6: #{token_embed.1} parent=1 // loop_footer
      %s27 = sadd.s32 1, %s23
    $region7: #{token_embed.1} parent=1 // loop_footer_branch
      %22 = sbr.rel target = $region3
    $region8: #{token_embed.1} parent=1 // loop_exit
      _
    %4244 = vsyncpa [#allocation3], 1
    %s4245 = scalar_lea.sflag [#allocation3], 1
    %4246 = vsyncpa %s4245, 1

</llo_original>
